<compile_context>
chip_gen: v7x
topology: tpu7x:2x2x1
jax: 0.10.0
libtpu: 0.0.40
codegen_flags: <defaults>
</compile_context>

<pallas_src>
import functools

import jax
import jax.numpy as jnp
from jax.experimental import pallas as pl
from jax.experimental.pallas import tpu as pltpu

K_FOR_MAXPOOL = 5


def pdrmm_kernel(q_ref, d_ref, oh_ref, cw_ref, cb_ref, head_ref, tgt_ref,
                 out_ref, convq_scr, convd_scr, topk_scr):
    bt, lq, e = q_ref.shape
    ld = d_ref.shape[1]
    rq = bt * lq
    rd = bt * ld

    cw = cw_ref[...]                        # (3E, E) bf16  (fused conv taps)
    cb = cb_ref[...]                        # (1, E)  f32

    qf = q_ref[...].reshape(rq, e)          # (Bt*Lq, E) f32
    df = d_ref[...].reshape(rd, e)          # (Bt*Ld, E) f32

    def conv_residual(xf, seq_len, scr):
        # PyTorch: Conv1d(E, E, 3, padding=3) -> sigmoid -> keep last L positions
        # -> + residual.  Retained output j uses inputs j+1, j+2, j+3 of the SAME
        # example (zero past the end).  The roll runs over the flattened Bt*L
        # token axis; the per-example local-row iota mask zeroes both the
        # end-of-sequence taps and the wrap into the next example.
        rows = xf.shape[0]
        nb = rows // seq_len
        local = jax.lax.broadcasted_iota(jnp.int32, (nb, seq_len, e), 1)
        local = local.reshape(rows, e)
        for s in range(3):
            xs = pltpu.roll(xf, shift=rows - (s + 1), axis=0)   # xs[r] = xf[(r+s+1) % rows]
            xs = jnp.where(local < seq_len - (s + 1), xs, 0.0)
            scr[:, s * e:(s + 1) * e] = xs.astype(jnp.bfloat16)
        conv = jnp.dot(scr[...], cw, preferred_element_type=jnp.float32) + cb
        return jax.nn.sigmoid(conv) + xf

    qcf = conv_residual(qf, lq, convq_scr)  # (Bt*Lq, E)
    dcf = conv_residual(df, ld, convd_scr)  # (Bt*Ld, E)

    def nrm_bf16(x):
        # cosine == dot of L2-normalized rows.  (No epsilon: matches the reference
        # num/den division, which also NaNs on an all-zero row.)
        inv = jax.lax.rsqrt(jnp.sum(x * x, axis=-1, keepdims=True))
        return (x * inv).astype(jnp.bfloat16)

    qn = nrm_bf16(qf).reshape(bt, lq, e)
    dn = nrm_bf16(df).reshape(bt, ld, e)
    qcn = nrm_bf16(qcf).reshape(bt, lq, e)
    dcn = nrm_bf16(dcf).reshape(bt, ld, e)

    sim_ins = jnp.einsum('bqe,bke->bqk', qn, dn,
                         preferred_element_type=jnp.float32)      # (Bt, Lq, Ld)
    sim_sen = jnp.einsum('bqe,bke->bqk', qcn, dcn,
                         preferred_element_type=jnp.float32)      # (Bt, Lq, Ld)

    # ---- stacked, in-place, tie-safe top-k over the two cosine channels ------
    topk_scr[0:rq, :] = sim_ins.reshape(rq, ld)
    topk_scr[rq:2 * rq, :] = sim_sen.reshape(rq, ld)

    col = jax.lax.broadcasted_iota(jnp.int32, (2 * rq, ld), 1)
    total = jnp.zeros((2 * rq, 1), jnp.float32)
    mx = None
    for i in range(K_FOR_MAXPOOL):
        w = topk_scr[...]
        cur = jnp.max(w, axis=-1, keepdims=True)                  # (2*Rq, 1)
        if i == 0:
            mx = cur
        total = total + cur
        if i < K_FOR_MAXPOOL - 1:
            # remove exactly one occurrence of the current max per row (tie safe)
            cand = jnp.where(w == cur, col, ld)
            first = jnp.min(cand, axis=-1, keepdims=True)
            topk_scr[...] = jnp.where(col == first, -jnp.inf, w)
    av = total * (1.0 / float(K_FOR_MAXPOOL))

    # ---- analytic one-hot channel --------------------------------------------
    # TODO(synk): assumes doc1_sim is strictly binary (exact-match one-hot), as in
    # the reference; then top-1 = min(rowsum, 1) and mean-of-top-5 = min(rowsum, 5)/5.
    ohf = jnp.swapaxes(oh_ref[...], 1, 2).reshape(rq, ld)         # (Bt*Lq, Ld)
    oh_sum = jnp.sum(ohf, axis=-1, keepdims=True)                 # (Bt*Lq, 1)
    oh_mx = jnp.minimum(oh_sum, 1.0)
    oh_av = jnp.minimum(oh_sum, float(K_FOR_MAXPOOL)) * (1.0 / float(K_FOR_MAXPOOL))

    # temp = cat([oh(max,avg), insensitive(max,avg), sensitive(max,avg)]) per row
    feats = (oh_mx, oh_av,
             mx[0:rq], av[0:rq],
             mx[rq:2 * rq], av[rq:2 * rq])

    # ---- per-query MLP head ----------------------------------------------------
    head = head_ref[...]                  # (9, 8): rows 0-5 = W1^T, row 6 = b1,
    w1 = head[0:6, :]                     #          row 7 = W2, row 8 = [b2, prelu_a, 0..]
    lo = head[6:7, :]                                              # b1 (1, 8)
    for idx, f in enumerate(feats):                                # rank-1 updates,
        lo = lo + f * w1[idx:idx + 1, :]                           # (Bt*Lq, 8)

    pa = head[8:9, 1:2]                                            # PReLU slope (1, 1)
    lo = jnp.where(lo > 0, lo, pa * lo)
    # TODO(synk): nn.Dropout(p=0.2) treated as identity (deterministic / eval mode)

    w2 = head[7:8, :]                                              # (1, 8)
    b2 = head[8:9, 0:1]                                            # (1, 1)
    lo = jnp.sum(lo * w2, axis=-1, keepdims=True) + b2             # (Bt*Lq, 1)
    lo = jax.nn.sigmoid(lo)

    emit = jnp.sum(lo.reshape(bt, lq, 1), axis=1) * (1.0 / float(lq))   # (Bt, 1)

    # binary_cross_entropy_with_logits(emit, target); the post-sigmoid mean is fed
    # as the "logit", exactly as in the PyTorch reference.
    t = tgt_ref[...]                                               # (Bt, 1)
    loss = (jnp.maximum(emit, 0.0) - emit * t
            + jnp.log(1.0 + jnp.exp(-jnp.abs(emit))))              # (Bt, 1)

    out_ref[...] = jnp.concatenate([loss, emit], axis=-1)          # (Bt, 2)


def make_params(key, vocab_size, emb_dim):
    ks = jax.random.split(key, 7)
    return {
        "embeds": jax.random.normal(ks[0], (vocab_size, emb_dim), jnp.float32) * 0.1,
        "conv_w": jax.random.normal(ks[1], (emb_dim, emb_dim, 3), jnp.float32) * 0.05,
        "conv_b": jax.random.normal(ks[2], (emb_dim,), jnp.float32) * 0.05,
        "w1": jax.random.normal(ks[3], (8, 6), jnp.float32) * 0.3,   # nn.Linear(6, 8)
        "b1": jax.random.normal(ks[4], (8,), jnp.float32) * 0.1,
        "w2": jax.random.normal(ks[5], (1, 8), jnp.float32) * 0.3,   # nn.Linear(8, 1)
        "b2": jax.random.normal(ks[6], (1,), jnp.float32) * 0.1,
        "prelu_a": jnp.array(0.25, jnp.float32),                     # PReLU default
    }


def prepare_params(params):
    """One-time packing of parameters into kernel-friendly tensors."""
    E = params["embeds"].shape[1]
    # cw[s*E:(s+1)*E, o] = conv_w[o, :, s] so shift_{s+1}(x) @ chunk == Conv1d tap s;
    # the three taps are fused into one (3E, E) bf16 weight.
    cw = jnp.transpose(params["conv_w"], (2, 1, 0)).reshape(3 * E, E)
    extra = jnp.concatenate([params["b2"].reshape(1).astype(jnp.float32),
                             params["prelu_a"].reshape(1).astype(jnp.float32),
                             jnp.zeros((6,), jnp.float32)]).reshape(1, 8)
    head = jnp.concatenate([params["w1"].T.astype(jnp.float32),      # rows 0-5
                            params["b1"].reshape(1, 8).astype(jnp.float32),
                            params["w2"].reshape(1, 8).astype(jnp.float32),
                            extra], axis=0)                          # (9, 8)
    return {
        "embeds": params["embeds"].astype(jnp.float32),
        "cw": cw.astype(jnp.bfloat16),
        "cb": params["conv_b"].reshape(1, E).astype(jnp.float32),
        "head": head,
    }


def _pick_block_b(batch, lq):
    """Largest divisor of `batch` that keeps >= 2 grid steps (so both v7x
    TensorCores get work); stop growing once Bt*Lq reaches ~256 stacked rows."""
    best = 1
    for cand in range(1, batch + 1):
        if batch % cand == 0 and (batch // cand >= 2 or batch == 1):
            best = cand
            if cand * lq >= 256:
                break
    return best


@functools.partial(jax.jit, static_argnames=("block_b",))
def sent_posit_drmm_forward_batch(prep, doc_batch, question_batch, doc_sim_batch,
                                  target_batch, block_b=None):
    """Batched forward: docs (B, Ld) ids, questions (B, Lq) ids, doc_sims
    (B, Ld, Lq) binary exact-match matrices (UNtransposed, as the reference's
    doc1_sim input), targets (B,)  ->  (losses (B,), emissions (B,))."""
    emb = prep["embeds"]
    q_emb = jnp.take(emb, question_batch, axis=0)                 # (B, Lq, E)
    d_emb = jnp.take(emb, doc_batch, axis=0)                      # (B, Ld, E)
    oh = jnp.asarray(doc_sim_batch, jnp.float32)                  # (B, Ld, Lq)

    B, Lq, E = q_emb.shape
    Ld = d_emb.shape[1]

    bt = int(block_b) if block_b is not None else _pick_block_b(B, Lq)
    if B % bt != 0:
        raise ValueError(f"batch size {B} must be divisible by block_b={bt}")
    g = B // bt

    tgt = jnp.asarray(target_batch, jnp.float32).reshape(g, bt, 1)

    flops = int(2 * B * (Lq + Ld) * 3 * E * E          # fused conv matmuls
                + 2 * 2 * B * Lq * Ld * E              # two cosine-sim einsums
                + 2 * B * Lq * (6 * 8 + 8))            # tiny MLP head
    transcendentals = int(B * ((Lq + Ld) * E           # conv sigmoids
                               + 2 * (Lq + Ld)         # rsqrt (raw + conv rows)
                               + Lq + 1))              # head sigmoid + loss exp
    bytes_accessed = int(4 * B * ((Lq + Ld) * E + Lq * Ld + 1 + 2)
                         + 2 * 3 * E * E + 4 * E + 4 * 9 * 8)

    out = pl.pallas_call(
        pdrmm_kernel,
        out_shape=jax.ShapeDtypeStruct((g, bt, 2), jnp.float32),
        grid=(g,),
        in_specs=[
            pl.BlockSpec((bt, Lq, E), lambda i: (i, 0, 0)),       # questions
            pl.BlockSpec((bt, Ld, E), lambda i: (i, 0, 0)),       # documents
            pl.BlockSpec((bt, Ld, Lq), lambda i: (i, 0, 0)),      # one-hot sims
            pl.BlockSpec((3 * E, E), lambda i: (0, 0)),           # fused conv W (resident)
            pl.BlockSpec((1, E), lambda i: (0, 0)),               # conv bias    (resident)
            pl.BlockSpec((9, 8), lambda i: (0, 0)),               # packed head  (resident)
            pl.BlockSpec((None, bt, 1), lambda i: (i, 0, 0)),     # targets
        ],
        out_specs=pl.BlockSpec((None, bt, 2), lambda i: (i, 0, 0)),
        scratch_shapes=[
            pltpu.VMEM((bt * Lq, 3 * E), jnp.bfloat16),           # q conv taps
            pltpu.VMEM((bt * Ld, 3 * E), jnp.bfloat16),           # d conv taps
            pltpu.VMEM((2 * bt * Lq, Ld), jnp.float32),           # stacked top-k workspace
        ],
        compiler_params=pltpu.CompilerParams(
            dimension_semantics=("parallel",),
            vmem_limit_bytes=32 * 1024 * 1024),
        cost_estimate=pl.CostEstimate(flops=flops,
                                      transcendentals=transcendentals,
                                      bytes_accessed=bytes_accessed),
    )(q_emb, d_emb, oh, prep["cw"], prep["cb"], prep["head"], tgt)

    out = out.reshape(B, 2)
    return out[:, 0], out[:, 1]


def sent_posit_drmm_forward(prep, doc1, question, doc1_sim, target):
    """Single-example convenience wrapper (matches the PyTorch forward signature;
    doc1_sim is the untransposed (Ld, Lq) matrix, as passed to the reference)."""
    loss, emit = sent_posit_drmm_forward_batch(
        prep, jnp.asarray(doc1)[None, :], jnp.asarray(question)[None, :],
        jnp.asarray(doc1_sim, jnp.float32)[None, :, :],
        jnp.asarray(target, jnp.float32).reshape(1), block_b=1)
    return loss[0], emit[0]


if __name__ == "__main__":
    key = jax.random.PRNGKey(0)
    vocab_size, emb_dim = 50, 32
    B, Lq, Ld = 8, 8, 16

    k_param, k_tok = jax.random.split(key)
    params = make_params(k_param, vocab_size, emb_dim)
    prep = prepare_params(params)

    kq, kd, ks = jax.random.split(k_tok, 3)
    question = jax.random.randint(kq, (B, Lq), 0, vocab_size)
    doc = jax.random.randint(kd, (B, Ld), 0, vocab_size)
    # binary exact-match one-hot similarity matrices, shape (B, Ld, Lq) exactly as
    # the reference's doc1_sim (it is transposed inside the model, here in-kernel).
    doc_sim = (jax.random.uniform(ks, (B, Ld, Lq)) > 0.8).astype(jnp.float32)
    target = jnp.ones((B,), jnp.float32)

    # block_b=4 -> grid of 2 "parallel" steps (keeps both v7x TensorCores busy).
    loss, doc_emit = sent_posit_drmm_forward_batch(prep, doc, question, doc_sim,
                                                   target, block_b=4)
    jax.block_until_ready((loss, doc_emit))
    print("KERNEL_OK")
</pallas_src>

<mosaic_0001>
module attributes {stable_mosaic.version = 11 : i64} {
  func.func @pdrmm_kernel(%arg0: i32, %arg1: memref<4x8x32xf32, #tpu.memory_space<vmem>>, %arg2: memref<4x16x32xf32, #tpu.memory_space<vmem>>, %arg3: memref<4x16x8xf32, #tpu.memory_space<vmem>>, %arg4: memref<96x32xbf16, #tpu.memory_space<vmem>>, %arg5: memref<1x32xf32, #tpu.memory_space<vmem>>, %arg6: memref<9x8xf32, #tpu.memory_space<vmem>>, %arg7: memref<1x4x1xf32, #tpu.memory_space<vmem>>, %arg8: memref<1x4x2xf32, #tpu.memory_space<vmem>>, %arg9: memref<32x96xbf16, #tpu.memory_space<vmem>>, %arg10: memref<64x96xbf16, #tpu.memory_space<vmem>>, %arg11: memref<64x16xf32, #tpu.memory_space<vmem>>) attributes {dimension_semantics = [#tpu.dimension_semantics<parallel>], iteration_bounds = array<i64: 2>, scalar_prefetch = 0 : i64, scratch_operands = 3 : i64, tpu.core_type = #tpu.core_type<tc>, window_params = [{transform_indices = @transform_0, window_bounds = array<i64: 4, 8, 32>}, {transform_indices = @transform_1, window_bounds = array<i64: 4, 16, 32>}, {transform_indices = @transform_2, window_bounds = array<i64: 4, 16, 8>}, {pipeline_mode = #tpu.pipeline_mode<synchronous>, transform_indices = @transform_3, window_bounds = array<i64: 96, 32>}, {pipeline_mode = #tpu.pipeline_mode<synchronous>, transform_indices = @transform_4, window_bounds = array<i64: 1, 32>}, {pipeline_mode = #tpu.pipeline_mode<synchronous>, transform_indices = @transform_5, window_bounds = array<i64: 9, 8>}, {transform_indices = @transform_6, window_bounds = array<i64: 1, 4, 1>}, {transform_indices = @transform_7, window_bounds = array<i64: 1, 4, 2>}]} {
    %c0 = arith.constant 0 : index
    %c0_0 = arith.constant 0 : index
    %0 = vector.load %arg4[%c0, %c0_0] : memref<96x32xbf16, #tpu.memory_space<vmem>>, vector<96x32xbf16>
    %c0_1 = arith.constant 0 : index
    %c0_2 = arith.constant 0 : index
    %1 = vector.load %arg5[%c0_1, %c0_2] : memref<1x32xf32, #tpu.memory_space<vmem>>, vector<1x32xf32>
    %c0_3 = arith.constant 0 : index
    %c0_4 = arith.constant 0 : index
    %c0_5 = arith.constant 0 : index
    %2 = vector.load %arg1[%c0_3, %c0_4, %c0_5] : memref<4x8x32xf32, #tpu.memory_space<vmem>>, vector<4x8x32xf32>
    %3 = vector.shape_cast %2 : vector<4x8x32xf32> to vector<32x32xf32>
    %c0_6 = arith.constant 0 : index
    %c0_7 = arith.constant 0 : index
    %c0_8 = arith.constant 0 : index
    %4 = vector.load %arg2[%c0_6, %c0_7, %c0_8] : memref<4x16x32xf32, #tpu.memory_space<vmem>>, vector<4x16x32xf32>
    %5 = vector.shape_cast %4 : vector<4x16x32xf32> to vector<64x32xf32>
    %6 = tpu.iota {dimensions = array<i32: 1>} : vector<4x8x32xi32>
    %7 = vector.shape_cast %6 : vector<4x8x32xi32> to vector<32x32xi32>
    %c31_i32 = arith.constant 31 : i32
    %8 = tpu.dynamic_rotate %3 by %c31_i32 dim 0 : vector<32x32xf32>, i32 -> vector<32x32xf32>
    %c7_i32 = arith.constant 7 : i32
    %9 = vector.broadcast %c7_i32 : i32 to vector<32x32xi32>
    %10 = arith.cmpi slt, %7, %9 : vector<32x32xi32>
    %cst = arith.constant 0.000000e+00 : f32
    %11 = vector.broadcast %cst : f32 to vector<32x32xf32>
    %12 = arith.select %10, %8, %11 : vector<32x32xi1>, vector<32x32xf32>
    %13 = arith.truncf %12 : vector<32x32xf32> to vector<32x32xbf16>
    %c0_9 = arith.constant 0 : index
    %c0_10 = arith.constant 0 : index
    %14 = vector.load %arg9[%c0_9, %c0_10] : memref<32x96xbf16, #tpu.memory_space<vmem>>, vector<32x32xbf16>
    tpu.vector_store %arg9[%c0_9, %c0_10], %13 {strides = array<i32>} : memref<32x96xbf16, #tpu.memory_space<vmem>>, vector<32x32xbf16>,
    %c30_i32 = arith.constant 30 : i32
    %15 = tpu.dynamic_rotate %3 by %c30_i32 dim 0 : vector<32x32xf32>, i32 -> vector<32x32xf32>
    %c6_i32 = arith.constant 6 : i32
    %16 = vector.broadcast %c6_i32 : i32 to vector<32x32xi32>
    %17 = arith.cmpi slt, %7, %16 : vector<32x32xi32>
    %cst_11 = arith.constant 0.000000e+00 : f32
    %18 = vector.broadcast %cst_11 : f32 to vector<32x32xf32>
    %19 = arith.select %17, %15, %18 : vector<32x32xi1>, vector<32x32xf32>
    %20 = arith.truncf %19 : vector<32x32xf32> to vector<32x32xbf16>
    %c0_12 = arith.constant 0 : index
    %c32 = arith.constant 32 : index
    %21 = vector.load %arg9[%c0_12, %c32] : memref<32x96xbf16, #tpu.memory_space<vmem>>, vector<32x32xbf16>
    tpu.vector_store %arg9[%c0_12, %c32], %20 {strides = array<i32>} : memref<32x96xbf16, #tpu.memory_space<vmem>>, vector<32x32xbf16>,
    %c29_i32 = arith.constant 29 : i32
    %22 = tpu.dynamic_rotate %3 by %c29_i32 dim 0 : vector<32x32xf32>, i32 -> vector<32x32xf32>
    %c5_i32 = arith.constant 5 : i32
    %23 = vector.broadcast %c5_i32 : i32 to vector<32x32xi32>
    %24 = arith.cmpi slt, %7, %23 : vector<32x32xi32>
    %cst_13 = arith.constant 0.000000e+00 : f32
    %25 = vector.broadcast %cst_13 : f32 to vector<32x32xf32>
    %26 = arith.select %24, %22, %25 : vector<32x32xi1>, vector<32x32xf32>
    %27 = arith.truncf %26 : vector<32x32xf32> to vector<32x32xbf16>
    %c0_14 = arith.constant 0 : index
    %c64 = arith.constant 64 : index
    %28 = vector.load %arg9[%c0_14, %c64] : memref<32x96xbf16, #tpu.memory_space<vmem>>, vector<32x32xbf16>
    tpu.vector_store %arg9[%c0_14, %c64], %27 {strides = array<i32>} : memref<32x96xbf16, #tpu.memory_space<vmem>>, vector<32x32xbf16>,
    %c0_15 = arith.constant 0 : index
    %c0_16 = arith.constant 0 : index
    %29 = vector.load %arg9[%c0_15, %c0_16] : memref<32x96xbf16, #tpu.memory_space<vmem>>, vector<32x96xbf16>
    %cst_17 = arith.constant dense<0.000000e+00> : vector<32x32xf32>
    %30 = tpu.matmul %29, %0, %cst_17 {dimension_numbers = #tpu.dot_dimension_numbers<[1], [0], [0], [1], [0, 0, 1, 1], [], []>} : vector<32x96xbf16>, vector<96x32xbf16>, vector<32x32xf32> -> vector<32x32xf32>
    %31 = vector.broadcast %1 : vector<1x32xf32> to vector<32x32xf32>
    %32 = arith.addf %30, %31 : vector<32x32xf32>
    %33 = arith.negf %32 : vector<32x32xf32>
    %34 = math.exp %33 : vector<32x32xf32>
    %cst_18 = arith.constant 1.000000e+00 : f32
    %35 = vector.broadcast %cst_18 : f32 to vector<32x32xf32>
    %36 = arith.addf %35, %34 : vector<32x32xf32>
    %37 = arith.divf %35, %36 : vector<32x32xf32>
    %38 = arith.addf %37, %3 : vector<32x32xf32>
    %39 = tpu.iota {dimensions = array<i32: 1>} : vector<4x16x32xi32>
    %40 = vector.shape_cast %39 : vector<4x16x32xi32> to vector<64x32xi32>
    %c63_i32 = arith.constant 63 : i32
    %41 = tpu.dynamic_rotate %5 by %c63_i32 dim 0 : vector<64x32xf32>, i32 -> vector<64x32xf32>
    %c15_i32 = arith.constant 15 : i32
    %42 = vector.broadcast %c15_i32 : i32 to vector<64x32xi32>
    %43 = arith.cmpi slt, %40, %42 : vector<64x32xi32>
    %cst_19 = arith.constant 0.000000e+00 : f32
    %44 = vector.broadcast %cst_19 : f32 to vector<64x32xf32>
    %45 = arith.select %43, %41, %44 : vector<64x32xi1>, vector<64x32xf32>
    %46 = arith.truncf %45 : vector<64x32xf32> to vector<64x32xbf16>
    %c0_20 = arith.constant 0 : index
    %c0_21 = arith.constant 0 : index
    %47 = vector.load %arg10[%c0_20, %c0_21] : memref<64x96xbf16, #tpu.memory_space<vmem>>, vector<64x32xbf16>
    tpu.vector_store %arg10[%c0_20, %c0_21], %46 {strides = array<i32>} : memref<64x96xbf16, #tpu.memory_space<vmem>>, vector<64x32xbf16>,
    %c62_i32 = arith.constant 62 : i32
    %48 = tpu.dynamic_rotate %5 by %c62_i32 dim 0 : vector<64x32xf32>, i32 -> vector<64x32xf32>
    %c14_i32 = arith.constant 14 : i32
    %49 = vector.broadcast %c14_i32 : i32 to vector<64x32xi32>
    %50 = arith.cmpi slt, %40, %49 : vector<64x32xi32>
    %cst_22 = arith.constant 0.000000e+00 : f32
    %51 = vector.broadcast %cst_22 : f32 to vector<64x32xf32>
    %52 = arith.select %50, %48, %51 : vector<64x32xi1>, vector<64x32xf32>
    %53 = arith.truncf %52 : vector<64x32xf32> to vector<64x32xbf16>
    %c0_23 = arith.constant 0 : index
    %c32_24 = arith.constant 32 : index
    %54 = vector.load %arg10[%c0_23, %c32_24] : memref<64x96xbf16, #tpu.memory_space<vmem>>, vector<64x32xbf16>
    tpu.vector_store %arg10[%c0_23, %c32_24], %53 {strides = array<i32>} : memref<64x96xbf16, #tpu.memory_space<vmem>>, vector<64x32xbf16>,
    %c61_i32 = arith.constant 61 : i32
    %55 = tpu.dynamic_rotate %5 by %c61_i32 dim 0 : vector<64x32xf32>, i32 -> vector<64x32xf32>
    %c13_i32 = arith.constant 13 : i32
    %56 = vector.broadcast %c13_i32 : i32 to vector<64x32xi32>
    %57 = arith.cmpi slt, %40, %56 : vector<64x32xi32>
    %cst_25 = arith.constant 0.000000e+00 : f32
    %58 = vector.broadcast %cst_25 : f32 to vector<64x32xf32>
    %59 = arith.select %57, %55, %58 : vector<64x32xi1>, vector<64x32xf32>
    %60 = arith.truncf %59 : vector<64x32xf32> to vector<64x32xbf16>
    %c0_26 = arith.constant 0 : index
    %c64_27 = arith.constant 64 : index
    %61 = vector.load %arg10[%c0_26, %c64_27] : memref<64x96xbf16, #tpu.memory_space<vmem>>, vector<64x32xbf16>
    tpu.vector_store %arg10[%c0_26, %c64_27], %60 {strides = array<i32>} : memref<64x96xbf16, #tpu.memory_space<vmem>>, vector<64x32xbf16>,
    %c0_28 = arith.constant 0 : index
    %c0_29 = arith.constant 0 : index
    %62 = vector.load %arg10[%c0_28, %c0_29] : memref<64x96xbf16, #tpu.memory_space<vmem>>, vector<64x96xbf16>
    %cst_30 = arith.constant dense<0.000000e+00> : vector<64x32xf32>
    %63 = tpu.matmul %62, %0, %cst_30 {dimension_numbers = #tpu.dot_dimension_numbers<[1], [0], [0], [1], [0, 0, 1, 1], [], []>} : vector<64x96xbf16>, vector<96x32xbf16>, vector<64x32xf32> -> vector<64x32xf32>
    %64 = vector.broadcast %1 : vector<1x32xf32> to vector<64x32xf32>
    %65 = arith.addf %63, %64 : vector<64x32xf32>
    %66 = arith.negf %65 : vector<64x32xf32>
    %67 = math.exp %66 : vector<64x32xf32>
    %cst_31 = arith.constant 1.000000e+00 : f32
    %68 = vector.broadcast %cst_31 : f32 to vector<64x32xf32>
    %69 = arith.addf %68, %67 : vector<64x32xf32>
    %70 = arith.divf %68, %69 : vector<64x32xf32>
    %71 = arith.addf %70, %5 : vector<64x32xf32>
    %72 = arith.mulf %3, %3 : vector<32x32xf32>
    %cst_32 = arith.constant dense<0.000000e+00> : vector<32xf32>
    %73 = vector.multi_reduction <add>, %72, %cst_32 [1] : vector<32x32xf32> to vector<32xf32>
    %74 = vector.shape_cast %73 : vector<32xf32> to vector<32x1xf32>
    %75 = math.rsqrt %74 : vector<32x1xf32>
    %76 = vector.broadcast %75 : vector<32x1xf32> to vector<32x32xf32>
    %77 = arith.mulf %3, %76 : vector<32x32xf32>
    %78 = arith.truncf %77 : vector<32x32xf32> to vector<32x32xbf16>
    %79 = vector.shape_cast %78 : vector<32x32xbf16> to vector<4x8x32xbf16>
    %80 = arith.mulf %5, %5 : vector<64x32xf32>
    %cst_33 = arith.constant dense<0.000000e+00> : vector<64xf32>
    %81 = vector.multi_reduction <add>, %80, %cst_33 [1] : vector<64x32xf32> to vector<64xf32>
    %82 = vector.shape_cast %81 : vector<64xf32> to vector<64x1xf32>
    %83 = math.rsqrt %82 : vector<64x1xf32>
    %84 = vector.broadcast %83 : vector<64x1xf32> to vector<64x32xf32>
    %85 = arith.mulf %5, %84 : vector<64x32xf32>
    %86 = arith.truncf %85 : vector<64x32xf32> to vector<64x32xbf16>
    %87 = vector.shape_cast %86 : vector<64x32xbf16> to vector<4x16x32xbf16>
    %88 = arith.mulf %38, %38 : vector<32x32xf32>
    %cst_34 = arith.constant dense<0.000000e+00> : vector<32xf32>
    %89 = vector.multi_reduction <add>, %88, %cst_34 [1] : vector<32x32xf32> to vector<32xf32>
    %90 = vector.shape_cast %89 : vector<32xf32> to vector<32x1xf32>
    %91 = math.rsqrt %90 : vector<32x1xf32>
    %92 = vector.broadcast %91 : vector<32x1xf32> to vector<32x32xf32>
    %93 = arith.mulf %38, %92 : vector<32x32xf32>
    %94 = arith.truncf %93 : vector<32x32xf32> to vector<32x32xbf16>
    %95 = vector.shape_cast %94 : vector<32x32xbf16> to vector<4x8x32xbf16>
    %96 = arith.mulf %71, %71 : vector<64x32xf32>
    %cst_35 = arith.constant dense<0.000000e+00> : vector<64xf32>
    %97 = vector.multi_reduction <add>, %96, %cst_35 [1] : vector<64x32xf32> to vector<64xf32>
    %98 = vector.shape_cast %97 : vector<64xf32> to vector<64x1xf32>
    %99 = math.rsqrt %98 : vector<64x1xf32>
    %100 = vector.broadcast %99 : vector<64x1xf32> to vector<64x32xf32>
    %101 = arith.mulf %71, %100 : vector<64x32xf32>
    %102 = arith.truncf %101 : vector<64x32xf32> to vector<64x32xbf16>
    %103 = vector.shape_cast %102 : vector<64x32xbf16> to vector<4x16x32xbf16>
    "tpu.trace_start"() <{level = 10 : i32, message = "bqe,bke->bqk"}> : () -> ()
    %cst_36 = arith.constant dense<0.000000e+00> : vector<4x8x16xf32>
    %104 = tpu.matmul %79, %87, %cst_36 {dimension_numbers = #tpu.dot_dimension_numbers<[2], [2], [1], [1], [0, 0, 0, 1, 1, 1], [0], [0]>} : vector<4x8x32xbf16>, vector<4x16x32xbf16>, vector<4x8x16xf32> -> vector<4x8x16xf32>
    %cst_37 = arith.constant dense<0.000000e+00> : vector<4x8x16xf32>
    %105 = tpu.matmul %95, %103, %cst_37 {dimension_numbers = #tpu.dot_dimension_numbers<[2], [2], [1], [1], [0, 0, 0, 1, 1, 1], [0], [0]>} : vector<4x8x32xbf16>, vector<4x16x32xbf16>, vector<4x8x16xf32> -> vector<4x8x16xf32>
    "tpu.trace_stop"() : () -> ()
    %106 = vector.shape_cast %104 : vector<4x8x16xf32> to vector<32x16xf32>
    %c0_38 = arith.constant 0 : index
    %c0_39 = arith.constant 0 : index
    %107 = vector.load %arg11[%c0_38, %c0_39] : memref<64x16xf32, #tpu.memory_space<vmem>>, vector<32x16xf32>
    tpu.vector_store %arg11[%c0_38, %c0_39], %106 {strides = array<i32>} : memref<64x16xf32, #tpu.memory_space<vmem>>, vector<32x16xf32>,
    %108 = vector.shape_cast %105 : vector<4x8x16xf32> to vector<32x16xf32>
    %c32_40 = arith.constant 32 : index
    %c0_41 = arith.constant 0 : index
    %109 = vector.load %arg11[%c32_40, %c0_41] : memref<64x16xf32, #tpu.memory_space<vmem>>, vector<32x16xf32>
    tpu.vector_store %arg11[%c32_40, %c0_41], %108 {strides = array<i32>} : memref<64x16xf32, #tpu.memory_space<vmem>>, vector<32x16xf32>,
    %110 = tpu.iota {dimensions = array<i32: 1>} : vector<64x16xi32>
    %cst_42 = arith.constant 0.000000e+00 : f32
    %111 = vector.broadcast %cst_42 : f32 to vector<64x1xf32>
    %c0_43 = arith.constant 0 : index
    %c0_44 = arith.constant 0 : index
    %112 = vector.load %arg11[%c0_43, %c0_44] : memref<64x16xf32, #tpu.memory_space<vmem>>, vector<64x16xf32>
    %cst_45 = arith.constant dense<0xFF800000> : vector<64xf32>
    %113 = vector.multi_reduction <maximumf>, %112, %cst_45 [1] : vector<64x16xf32> to vector<64xf32>
    %114 = vector.shape_cast %113 : vector<64xf32> to vector<64x1xf32>
    %115 = arith.addf %111, %114 : vector<64x1xf32>
    %116 = vector.broadcast %114 : vector<64x1xf32> to vector<64x16xf32>
    %117 = arith.cmpf oeq, %112, %116 : vector<64x16xf32>
    %c16_i32 = arith.constant 16 : i32
    %118 = vector.broadcast %c16_i32 : i32 to vector<64x16xi32>
    %119 = arith.select %117, %110, %118 : vector<64x16xi1>, vector<64x16xi32>
    %cst_46 = arith.constant dense<2147483647> : vector<64xi32>
    %120 = vector.multi_reduction <minsi>, %119, %cst_46 [1] : vector<64x16xi32> to vector<64xi32>
    %121 = vector.shape_cast %120 : vector<64xi32> to vector<64x1xi32>
    %122 = vector.broadcast %121 : vector<64x1xi32> to vector<64x16xi32>
    %123 = arith.cmpi eq, %110, %122 : vector<64x16xi32>
    %cst_47 = arith.constant 0xFF800000 : f32
    %124 = vector.broadcast %cst_47 : f32 to vector<64x16xf32>
    %125 = arith.select %123, %124, %112 : vector<64x16xi1>, vector<64x16xf32>
    %c0_48 = arith.constant 0 : index
    %c0_49 = arith.constant 0 : index
    %126 = vector.load %arg11[%c0_48, %c0_49] : memref<64x16xf32, #tpu.memory_space<vmem>>, vector<64x16xf32>
    tpu.vector_store %arg11[%c0_48, %c0_49], %125 {strides = array<i32>} : memref<64x16xf32, #tpu.memory_space<vmem>>, vector<64x16xf32>,
    %c0_50 = arith.constant 0 : index
    %c0_51 = arith.constant 0 : index
    %127 = vector.load %arg11[%c0_50, %c0_51] : memref<64x16xf32, #tpu.memory_space<vmem>>, vector<64x16xf32>
    %cst_52 = arith.constant dense<0xFF800000> : vector<64xf32>
    %128 = vector.multi_reduction <maximumf>, %127, %cst_52 [1] : vector<64x16xf32> to vector<64xf32>
    %129 = vector.shape_cast %128 : vector<64xf32> to vector<64x1xf32>
    %130 = arith.addf %115, %129 : vector<64x1xf32>
    %131 = vector.broadcast %129 : vector<64x1xf32> to vector<64x16xf32>
    %132 = arith.cmpf oeq, %127, %131 : vector<64x16xf32>
    %c16_i32_53 = arith.constant 16 : i32
    %133 = vector.broadcast %c16_i32_53 : i32 to vector<64x16xi32>
    %134 = arith.select %132, %110, %133 : vector<64x16xi1>, vector<64x16xi32>
    %cst_54 = arith.constant dense<2147483647> : vector<64xi32>
    %135 = vector.multi_reduction <minsi>, %134, %cst_54 [1] : vector<64x16xi32> to vector<64xi32>
    %136 = vector.shape_cast %135 : vector<64xi32> to vector<64x1xi32>
    %137 = vector.broadcast %136 : vector<64x1xi32> to vector<64x16xi32>
    %138 = arith.cmpi eq, %110, %137 : vector<64x16xi32>
    %cst_55 = arith.constant 0xFF800000 : f32
    %139 = vector.broadcast %cst_55 : f32 to vector<64x16xf32>
    %140 = arith.select %138, %139, %127 : vector<64x16xi1>, vector<64x16xf32>
    %c0_56 = arith.constant 0 : index
    %c0_57 = arith.constant 0 : index
    %141 = vector.load %arg11[%c0_56, %c0_57] : memref<64x16xf32, #tpu.memory_space<vmem>>, vector<64x16xf32>
    tpu.vector_store %arg11[%c0_56, %c0_57], %140 {strides = array<i32>} : memref<64x16xf32, #tpu.memory_space<vmem>>, vector<64x16xf32>,
    %c0_58 = arith.constant 0 : index
    %c0_59 = arith.constant 0 : index
    %142 = vector.load %arg11[%c0_58, %c0_59] : memref<64x16xf32, #tpu.memory_space<vmem>>, vector<64x16xf32>
    %cst_60 = arith.constant dense<0xFF800000> : vector<64xf32>
    %143 = vector.multi_reduction <maximumf>, %142, %cst_60 [1] : vector<64x16xf32> to vector<64xf32>
    %144 = vector.shape_cast %143 : vector<64xf32> to vector<64x1xf32>
    %145 = arith.addf %130, %144 : vector<64x1xf32>
    %146 = vector.broadcast %144 : vector<64x1xf32> to vector<64x16xf32>
    %147 = arith.cmpf oeq, %142, %146 : vector<64x16xf32>
    %c16_i32_61 = arith.constant 16 : i32
    %148 = vector.broadcast %c16_i32_61 : i32 to vector<64x16xi32>
    %149 = arith.select %147, %110, %148 : vector<64x16xi1>, vector<64x16xi32>
    %cst_62 = arith.constant dense<2147483647> : vector<64xi32>
    %150 = vector.multi_reduction <minsi>, %149, %cst_62 [1] : vector<64x16xi32> to vector<64xi32>
    %151 = vector.shape_cast %150 : vector<64xi32> to vector<64x1xi32>
    %152 = vector.broadcast %151 : vector<64x1xi32> to vector<64x16xi32>
    %153 = arith.cmpi eq, %110, %152 : vector<64x16xi32>
    %cst_63 = arith.constant 0xFF800000 : f32
    %154 = vector.broadcast %cst_63 : f32 to vector<64x16xf32>
    %155 = arith.select %153, %154, %142 : vector<64x16xi1>, vector<64x16xf32>
    %c0_64 = arith.constant 0 : index
    %c0_65 = arith.constant 0 : index
    %156 = vector.load %arg11[%c0_64, %c0_65] : memref<64x16xf32, #tpu.memory_space<vmem>>, vector<64x16xf32>
    tpu.vector_store %arg11[%c0_64, %c0_65], %155 {strides = array<i32>} : memref<64x16xf32, #tpu.memory_space<vmem>>, vector<64x16xf32>,
    %c0_66 = arith.constant 0 : index
    %c0_67 = arith.constant 0 : index
    %157 = vector.load %arg11[%c0_66, %c0_67] : memref<64x16xf32, #tpu.memory_space<vmem>>, vector<64x16xf32>
    %cst_68 = arith.constant dense<0xFF800000> : vector<64xf32>
    %158 = vector.multi_reduction <maximumf>, %157, %cst_68 [1] : vector<64x16xf32> to vector<64xf32>
    %159 = vector.shape_cast %158 : vector<64xf32> to vector<64x1xf32>
    %160 = arith.addf %145, %159 : vector<64x1xf32>
    %161 = vector.broadcast %159 : vector<64x1xf32> to vector<64x16xf32>
    %162 = arith.cmpf oeq, %157, %161 : vector<64x16xf32>
    %c16_i32_69 = arith.constant 16 : i32
    %163 = vector.broadcast %c16_i32_69 : i32 to vector<64x16xi32>
    %164 = arith.select %162, %110, %163 : vector<64x16xi1>, vector<64x16xi32>
    %cst_70 = arith.constant dense<2147483647> : vector<64xi32>
    %165 = vector.multi_reduction <minsi>, %164, %cst_70 [1] : vector<64x16xi32> to vector<64xi32>
    %166 = vector.shape_cast %165 : vector<64xi32> to vector<64x1xi32>
    %167 = vector.broadcast %166 : vector<64x1xi32> to vector<64x16xi32>
    %168 = arith.cmpi eq, %110, %167 : vector<64x16xi32>
    %cst_71 = arith.constant 0xFF800000 : f32
    %169 = vector.broadcast %cst_71 : f32 to vector<64x16xf32>
    %170 = arith.select %168, %169, %157 : vector<64x16xi1>, vector<64x16xf32>
    %c0_72 = arith.constant 0 : index
    %c0_73 = arith.constant 0 : index
    %171 = vector.load %arg11[%c0_72, %c0_73] : memref<64x16xf32, #tpu.memory_space<vmem>>, vector<64x16xf32>
    tpu.vector_store %arg11[%c0_72, %c0_73], %170 {strides = array<i32>} : memref<64x16xf32, #tpu.memory_space<vmem>>, vector<64x16xf32>,
    %c0_74 = arith.constant 0 : index
    %c0_75 = arith.constant 0 : index
    %172 = vector.load %arg11[%c0_74, %c0_75] : memref<64x16xf32, #tpu.memory_space<vmem>>, vector<64x16xf32>
    %cst_76 = arith.constant dense<0xFF800000> : vector<64xf32>
    %173 = vector.multi_reduction <maximumf>, %172, %cst_76 [1] : vector<64x16xf32> to vector<64xf32>
    %174 = vector.shape_cast %173 : vector<64xf32> to vector<64x1xf32>
    %175 = arith.addf %160, %174 : vector<64x1xf32>
    %cst_77 = arith.constant 2.000000e-01 : f32
    %176 = vector.broadcast %cst_77 : f32 to vector<64x1xf32>
    %177 = arith.mulf %175, %176 : vector<64x1xf32>
    %c0_78 = arith.constant 0 : index
    %c0_79 = arith.constant 0 : index
    %c0_80 = arith.constant 0 : index
    %178 = vector.load %arg3[%c0_78, %c0_79, %c0_80] : memref<4x16x8xf32, #tpu.memory_space<vmem>>, vector<4x16x8xf32>
    %179 = tpu.transpose %178, [0, 2, 1] : vector<4x16x8xf32> -> vector<4x8x16xf32>
    %180 = vector.shape_cast %179 : vector<4x8x16xf32> to vector<32x16xf32>
    %cst_81 = arith.constant dense<0.000000e+00> : vector<32xf32>
    %181 = vector.multi_reduction <add>, %180, %cst_81 [1] : vector<32x16xf32> to vector<32xf32>
    %182 = vector.shape_cast %181 : vector<32xf32> to vector<32x1xf32>
    %cst_82 = arith.constant 1.000000e+00 : f32
    %183 = vector.broadcast %cst_82 : f32 to vector<32x1xf32>
    %184 = arith.minimumf %182, %183 : vector<32x1xf32>
    %cst_83 = arith.constant 5.000000e+00 : f32
    %185 = vector.broadcast %cst_83 : f32 to vector<32x1xf32>
    %186 = arith.minimumf %182, %185 : vector<32x1xf32>
    %cst_84 = arith.constant 2.000000e-01 : f32
    %187 = vector.broadcast %cst_84 : f32 to vector<32x1xf32>
    %188 = arith.mulf %186, %187 : vector<32x1xf32>
    %189 = vector.extract_strided_slice %114 {offsets = [0, 0], sizes = [32, 1], strides = [1, 1]} : vector<64x1xf32> to vector<32x1xf32>
    %190 = vector.extract_strided_slice %177 {offsets = [0, 0], sizes = [32, 1], strides = [1, 1]} : vector<64x1xf32> to vector<32x1xf32>
    %191 = vector.extract_strided_slice %114 {offsets = [32, 0], sizes = [32, 1], strides = [1, 1]} : vector<64x1xf32> to vector<32x1xf32>
    %192 = vector.extract_strided_slice %177 {offsets = [32, 0], sizes = [32, 1], strides = [1, 1]} : vector<64x1xf32> to vector<32x1xf32>
    %c0_85 = arith.constant 0 : index
    %c0_86 = arith.constant 0 : index
    %193 = vector.load %arg6[%c0_85, %c0_86] : memref<9x8xf32, #tpu.memory_space<vmem>>, vector<9x8xf32>
    %194 = vector.extract_strided_slice %193 {offsets = [0, 0], sizes = [6, 8], strides = [1, 1]} : vector<9x8xf32> to vector<6x8xf32>
    %195 = vector.extract_strided_slice %193 {offsets = [6, 0], sizes = [1, 8], strides = [1, 1]} : vector<9x8xf32> to vector<1x8xf32>
    %196 = vector.extract_strided_slice %194 {offsets = [0, 0], sizes = [1, 8], strides = [1, 1]} : vector<6x8xf32> to vector<1x8xf32>
    %197 = vector.broadcast %184 : vector<32x1xf32> to vector<32x8xf32>
    %198 = vector.broadcast %196 : vector<1x8xf32> to vector<32x8xf32>
    %199 = arith.mulf %197, %198 : vector<32x8xf32>
    %200 = vector.broadcast %195 : vector<1x8xf32> to vector<32x8xf32>
    %201 = arith.addf %200, %199 : vector<32x8xf32>
    %202 = vector.extract_strided_slice %194 {offsets = [1, 0], sizes = [1, 8], strides = [1, 1]} : vector<6x8xf32> to vector<1x8xf32>
    %203 = vector.broadcast %188 : vector<32x1xf32> to vector<32x8xf32>
    %204 = vector.broadcast %202 : vector<1x8xf32> to vector<32x8xf32>
    %205 = arith.mulf %203, %204 : vector<32x8xf32>
    %206 = arith.addf %201, %205 : vector<32x8xf32>
    %207 = vector.extract_strided_slice %194 {offsets = [2, 0], sizes = [1, 8], strides = [1, 1]} : vector<6x8xf32> to vector<1x8xf32>
    %208 = vector.broadcast %189 : vector<32x1xf32> to vector<32x8xf32>
    %209 = vector.broadcast %207 : vector<1x8xf32> to vector<32x8xf32>
    %210 = arith.mulf %208, %209 : vector<32x8xf32>
    %211 = arith.addf %206, %210 : vector<32x8xf32>
    %212 = vector.extract_strided_slice %194 {offsets = [3, 0], sizes = [1, 8], strides = [1, 1]} : vector<6x8xf32> to vector<1x8xf32>
    %213 = vector.broadcast %190 : vector<32x1xf32> to vector<32x8xf32>
    %214 = vector.broadcast %212 : vector<1x8xf32> to vector<32x8xf32>
    %215 = arith.mulf %213, %214 : vector<32x8xf32>
    %216 = arith.addf %211, %215 : vector<32x8xf32>
    %217 = vector.extract_strided_slice %194 {offsets = [4, 0], sizes = [1, 8], strides = [1, 1]} : vector<6x8xf32> to vector<1x8xf32>
    %218 = vector.broadcast %191 : vector<32x1xf32> to vector<32x8xf32>
    %219 = vector.broadcast %217 : vector<1x8xf32> to vector<32x8xf32>
    %220 = arith.mulf %218, %219 : vector<32x8xf32>
    %221 = arith.addf %216, %220 : vector<32x8xf32>
    %222 = vector.extract_strided_slice %194 {offsets = [5, 0], sizes = [1, 8], strides = [1, 1]} : vector<6x8xf32> to vector<1x8xf32>
    %223 = vector.broadcast %192 : vector<32x1xf32> to vector<32x8xf32>
    %224 = vector.broadcast %222 : vector<1x8xf32> to vector<32x8xf32>
    %225 = arith.mulf %223, %224 : vector<32x8xf32>
    %226 = arith.addf %221, %225 : vector<32x8xf32>
    %227 = vector.extract_strided_slice %193 {offsets = [8, 1], sizes = [1, 1], strides = [1, 1]} : vector<9x8xf32> to vector<1x1xf32>
    %cst_87 = arith.constant 0.000000e+00 : f32
    %228 = vector.broadcast %cst_87 : f32 to vector<32x8xf32>
    %229 = arith.cmpf ogt, %226, %228 : vector<32x8xf32>
    %230 = vector.broadcast %227 : vector<1x1xf32> to vector<32x8xf32>
    %231 = arith.mulf %230, %226 : vector<32x8xf32>
    %232 = arith.select %229, %226, %231 : vector<32x8xi1>, vector<32x8xf32>
    %233 = vector.extract_strided_slice %193 {offsets = [7, 0], sizes = [1, 8], strides = [1, 1]} : vector<9x8xf32> to vector<1x8xf32>
    %234 = vector.extract_strided_slice %193 {offsets = [8, 0], sizes = [1, 1], strides = [1, 1]} : vector<9x8xf32> to vector<1x1xf32>
    %235 = vector.broadcast %233 : vector<1x8xf32> to vector<32x8xf32>
    %236 = arith.mulf %232, %235 : vector<32x8xf32>
    %cst_88 = arith.constant dense<0.000000e+00> : vector<32xf32>
    %237 = vector.multi_reduction <add>, %236, %cst_88 [1] : vector<32x8xf32> to vector<32xf32>
    %238 = vector.shape_cast %237 : vector<32xf32> to vector<32x1xf32>
    %239 = vector.broadcast %234 : vector<1x1xf32> to vector<32x1xf32>
    %240 = arith.addf %238, %239 : vector<32x1xf32>
    %241 = arith.negf %240 : vector<32x1xf32>
    %242 = math.exp %241 : vector<32x1xf32>
    %cst_89 = arith.constant 1.000000e+00 : f32
    %243 = vector.broadcast %cst_89 : f32 to vector<32x1xf32>
    %244 = arith.addf %243, %242 : vector<32x1xf32>
    %245 = arith.divf %243, %244 : vector<32x1xf32>
    %246 = vector.shape_cast %245 : vector<32x1xf32> to vector<4x8x1xf32>
    %cst_90 = arith.constant dense<0.000000e+00> : vector<4x1xf32>
    %247 = vector.multi_reduction <add>, %246, %cst_90 [1] : vector<4x8x1xf32> to vector<4x1xf32>
    %cst_91 = arith.constant 1.250000e-01 : f32
    %248 = vector.broadcast %cst_91 : f32 to vector<4x1xf32>
    %249 = arith.mulf %247, %248 : vector<4x1xf32>
    %c0_92 = arith.constant 0 : index
    %c0_93 = arith.constant 0 : index
    %c0_94 = arith.constant 0 : index
    %250 = vector.load %arg7[%c0_92, %c0_93, %c0_94] : memref<1x4x1xf32, #tpu.memory_space<vmem>>, vector<1x4x1xf32>
    %251 = vector.shape_cast %250 : vector<1x4x1xf32> to vector<4x1xf32>
    %cst_95 = arith.constant 0.000000e+00 : f32
    %252 = vector.broadcast %cst_95 : f32 to vector<4x1xf32>
    %253 = arith.maximumf %249, %252 : vector<4x1xf32>
    %254 = arith.mulf %249, %251 : vector<4x1xf32>
    %255 = arith.subf %253, %254 : vector<4x1xf32>
    %256 = math.absf %249 : vector<4x1xf32>
    %cst_96 = arith.constant 0.000000e+00 : f32
    %257 = vector.broadcast %cst_96 : f32 to vector<4x1xf32>
    %258 = arith.subf %257, %256 : vector<4x1xf32>
    %259 = math.exp %258 : vector<4x1xf32>
    %cst_97 = arith.constant 1.000000e+00 : f32
    %260 = vector.broadcast %cst_97 : f32 to vector<4x1xf32>
    %261 = arith.addf %260, %259 : vector<4x1xf32>
    %262 = math.log %261 : vector<4x1xf32>
    %263 = arith.addf %255, %262 : vector<4x1xf32>
    %264 = tpu.concatenate %263, %249 in 1 : vector<4x1xf32>, vector<4x1xf32> -> vector<4x2xf32>
    %c0_98 = arith.constant 0 : index
    %c0_99 = arith.constant 0 : index
    %c0_100 = arith.constant 0 : index
    %265 = vector.load %arg8[%c0_98, %c0_99, %c0_100] : memref<1x4x2xf32, #tpu.memory_space<vmem>>, vector<1x4x2xf32>
    %266 = vector.shape_cast %265 : vector<1x4x2xf32> to vector<4x2xf32>
    %267 = vector.shape_cast %264 : vector<4x2xf32> to vector<1x4x2xf32>
    tpu.vector_store %arg8[%c0_98, %c0_99, %c0_100], %267 {strides = array<i32>} : memref<1x4x2xf32, #tpu.memory_space<vmem>>, vector<1x4x2xf32>,
    return
  }
  func.func @transform_0(%arg0: i32) -> (i32, i32, i32) {
    %c0_i32 = arith.constant 0 : i32
    %c0_i32_0 = arith.constant 0 : i32
    %c0_i32_1 = arith.constant 0 : i32
    return %arg0, %c0_i32, %c0_i32_0 : i32, i32, i32
  }
  func.func @transform_1(%arg0: i32) -> (i32, i32, i32) {
    %c0_i32 = arith.constant 0 : i32
    %c0_i32_0 = arith.constant 0 : i32
    %c0_i32_1 = arith.constant 0 : i32
    return %arg0, %c0_i32, %c0_i32_0 : i32, i32, i32
  }
  func.func @transform_2(%arg0: i32) -> (i32, i32, i32) {
    %c0_i32 = arith.constant 0 : i32
    %c0_i32_0 = arith.constant 0 : i32
    %c0_i32_1 = arith.constant 0 : i32
    return %arg0, %c0_i32, %c0_i32_0 : i32, i32, i32
  }
  func.func @transform_3(%arg0: i32) -> (i32, i32) {
    %c0_i32 = arith.constant 0 : i32
    %c0_i32_0 = arith.constant 0 : i32
    %c0_i32_1 = arith.constant 0 : i32
    return %c0_i32, %c0_i32_0 : i32, i32
  }
  func.func @transform_4(%arg0: i32) -> (i32, i32) {
    %c0_i32 = arith.constant 0 : i32
    %c0_i32_0 = arith.constant 0 : i32
    %c0_i32_1 = arith.constant 0 : i32
    return %c0_i32, %c0_i32_0 : i32, i32
  }
  func.func @transform_5(%arg0: i32) -> (i32, i32) {
    %c0_i32 = arith.constant 0 : i32
    %c0_i32_0 = arith.constant 0 : i32
    %c0_i32_1 = arith.constant 0 : i32
    return %c0_i32, %c0_i32_0 : i32, i32
  }
  func.func @transform_6(%arg0: i32) -> (i32, i32, i32) {
    %c0_i32 = arith.constant 0 : i32
    %c0_i32_0 = arith.constant 0 : i32
    %c0_i32_1 = arith.constant 0 : i32
    return %arg0, %c0_i32, %c0_i32_0 : i32, i32, i32
  }
  func.func @transform_7(%arg0: i32) -> (i32, i32, i32) {
    %c0_i32 = arith.constant 0 : i32
    %c0_i32_0 = arith.constant 0 : i32
    %c0_i32_1 = arith.constant 0 : i32
    return %arg0, %c0_i32, %c0_i32_0 : i32, i32, i32
  }
}

</mosaic_0001>

<llo_original>
// kernel: sent_posit_drmm_forward_batch.1
$region0: #{sent_posit_drmm_forward_batch.1}
  #allocation0 [shape = 'u32[]', space=smem, size = 0x4, offset = 0x4, fixed_abs, tag = 'smem constant byte address 0x4 - core index']
  #allocation1 [shape = 'u32[144,128]{1,0:T(1,128)}', space=vmem, size = 0x12000, scoped, tag = 'internal scratch']
  #allocation2 [shape = 'bf16[32,96]{1,0:T(16,128)(2,1)}', space=vmem, size = 0x2000, scoped, tag = 'scratch operand']
  #allocation3 [shape = 'bf16[64,96]{1,0:T(16,128)(2,1)}', space=vmem, size = 0x4000, scoped, tag = 'scratch operand']
  #allocation4 [shape = 'f32[64,16]{1,0:T(8,128)}', space=vmem, size = 0x8000, scoped, tag = 'scratch operand']
  %s0 = inlined_call_operand.vmem [shape: f32[8,8,32], index: 0, kind: input, shape index: {}]
  %s1 = inlined_call_operand.vmem [shape: f32[8,16,32], index: 1, kind: input, shape index: {}]
  %s2 = inlined_call_operand.vmem [shape: f32[8,16,8], index: 2, kind: input, shape index: {}]
  %s3 = inlined_call_operand.vmem [shape: bf16[96,32], index: 3, kind: input, shape index: {}]
  %s4 = inlined_call_operand.vmem [shape: f32[1,32], index: 4, kind: input, shape index: {}]
  %s5 = inlined_call_operand.vmem [shape: f32[9,8], index: 5, kind: input, shape index: {}]
  %s6 = inlined_call_operand.vmem [shape: f32[2,4,1], index: 6, kind: input, shape index: {}]
  %s7 = inlined_call_operand.vmem [shape: f32[2,4,2], index: 7, kind: output, shape index: {}]
  %s8 = sld [smem:[#allocation0]]
  $region61: #{sent_posit_drmm_forward_batch.1} parent=0
    _
  %s10 = ssub.s32 1, %s8
  %s11 = scalar_select 0, %s10, %s8
  loop: start=0, step=1, limit=4
  $region2: #{sent_posit_drmm_forward_batch.1} parent=0 // loop_pre_header
    _
  $region3: #{sent_posit_drmm_forward_batch.1} parent=0 // loop_header
    %s13 = sphi 0, %s17
    %p14 = scmp.ge.s32.totalorder %s13, 4
    %s23 = sphi 0, %s25
    %s26 = sphi 0, %s23
    %s27 = sphi 0, %s26
    %s43 = sphi 0, %s27
    %s49 = sphi 0, %s51
    %s52 = sphi 0, %s49
    %s53 = sphi 0, %s52
    %s69 = sphi 0, %s53
    %s75 = sphi 0, %s77
    %s78 = sphi 0, %s75
    %s79 = sphi 0, %s78
    %s95 = sphi 0, %s79
    %s99 = sphi 0, %s99
    %s101 = sphi 0, %s99
    %s102 = sphi 0, %s101
    %s116 = sphi 0, %s102
    %s120 = sphi 0, %s120
    %s122 = sphi 0, %s120
    %s123 = sphi 0, %s122
    %s137 = sphi 0, %s123
    %s141 = sphi 0, %s141
    %s143 = sphi 0, %s141
    %s144 = sphi 0, %s143
    %s158 = sphi 0, %s144
    %s164 = sphi 0, %s166
    %s167 = sphi 0, %s164
    %s168 = sphi 0, %s167
    %s184 = sphi 0, %s168
    %s190 = sphi 0, %s192
    %s193 = sphi 0, %s190
    %s194 = sphi 0, %s193
    %s210 = sphi 0, %s194
  $region4: #{sent_posit_drmm_forward_batch.1} parent=0 // loop_header_branch
    %16 = sbr.rel (%p14) target = $region8
  $region5: #{sent_posit_drmm_forward_batch.1} parent=0 // loop_body
    %s18 = ssub.s32 %s13, 1
    %s19 = ssub.s32 %s13, 2
    %s20 = sadd.s32 %s13, 1
    %s21 = ssub.s32 %s13, %s20
    %p22 = scmp.eq.s32.totalorder %s21, 0
    %s24 = sadd.s32 %s23, 1
    %s25 = scalar_select %p22, %s23, %s24
    %p28 = pneg %p22
    %p29 = scmp.eq.s32.totalorder %s13, 1
    %p30 = por %p28, %p29
    %p31 = scmp.ne.s32.totalorder %s23, %s26
    %p32 = scmp.eq.s32.totalorder %s13, 0
    %p33 = por %p31, %p32
    %p34 = scmp.ne.s32.totalorder %s23, %s26
    %p35 = scmp.eq.s32.totalorder %s18, 1
    %p36 = por %p34, %p35
    %p37 = scmp.ne.s32.totalorder %s26, %s27
    %p38 = scmp.eq.s32.totalorder %s18, 0
    %p39 = por %p37, %p38
    %p40 = scmp.ne.s32.totalorder %s26, %s27
    %p41 = scmp.eq.s32.totalorder %s19, 1
    %p42 = por %p40, %p41
    %p44 = scmp.ne.s32.totalorder %s27, %s43
    %p45 = scmp.eq.s32.totalorder %s19, 0
    %p46 = por %p44, %p45
    %s47 = ssub.s32 %s13, %s20
    %p48 = scmp.eq.s32.totalorder %s47, 0
    %s50 = sadd.s32 %s49, 1
    %s51 = scalar_select %p48, %s49, %s50
    %p54 = pneg %p48
    %p55 = scmp.eq.s32.totalorder %s13, 1
    %p56 = por %p54, %p55
    %p57 = scmp.ne.s32.totalorder %s49, %s52
    %p58 = scmp.eq.s32.totalorder %s13, 0
    %p59 = por %p57, %p58
    %p60 = scmp.ne.s32.totalorder %s49, %s52
    %p61 = scmp.eq.s32.totalorder %s18, 1
    %p62 = por %p60, %p61
    %p63 = scmp.ne.s32.totalorder %s52, %s53
    %p64 = scmp.eq.s32.totalorder %s18, 0
    %p65 = por %p63, %p64
    %p66 = scmp.ne.s32.totalorder %s52, %s53
    %p67 = scmp.eq.s32.totalorder %s19, 1
    %p68 = por %p66, %p67
    %p70 = scmp.ne.s32.totalorder %s53, %s69
    %p71 = scmp.eq.s32.totalorder %s19, 0
    %p72 = por %p70, %p71
    %s73 = ssub.s32 %s13, %s20
    %p74 = scmp.eq.s32.totalorder %s73, 0
    %s76 = sadd.s32 %s75, 1
    %s77 = scalar_select %p74, %s75, %s76
    %p80 = pneg %p74
    %p81 = scmp.eq.s32.totalorder %s13, 1
    %p82 = por %p80, %p81
    %p83 = scmp.ne.s32.totalorder %s75, %s78
    %p84 = scmp.eq.s32.totalorder %s13, 0
    %p85 = por %p83, %p84
    %p86 = scmp.ne.s32.totalorder %s75, %s78
    %p87 = scmp.eq.s32.totalorder %s18, 1
    %p88 = por %p86, %p87
    %p89 = scmp.ne.s32.totalorder %s78, %s79
    %p90 = scmp.eq.s32.totalorder %s18, 0
    %p91 = por %p89, %p90
    %p92 = scmp.ne.s32.totalorder %s78, %s79
    %p93 = scmp.eq.s32.totalorder %s19, 1
    %p94 = por %p92, %p93
    %p96 = scmp.ne.s32.totalorder %s79, %s95
    %p97 = scmp.eq.s32.totalorder %s19, 0
    %p98 = por %p96, %p97
    %s100 = sadd.s32 %s99, 1
    %p103 = scmp.eq.s32.totalorder %s13, 1
    %p104 = scmp.ne.s32.totalorder %s99, %s101
    %p105 = scmp.eq.s32.totalorder %s13, 0
    %p106 = por %p104, %p105
    %p107 = scmp.ne.s32.totalorder %s99, %s101
    %p108 = scmp.eq.s32.totalorder %s18, 1
    %p109 = por %p107, %p108
    %p110 = scmp.ne.s32.totalorder %s101, %s102
    %p111 = scmp.eq.s32.totalorder %s18, 0
    %p112 = por %p110, %p111
    %p113 = scmp.ne.s32.totalorder %s101, %s102
    %p114 = scmp.eq.s32.totalorder %s19, 1
    %p115 = por %p113, %p114
    %p117 = scmp.ne.s32.totalorder %s102, %s116
    %p118 = scmp.eq.s32.totalorder %s19, 0
    %p119 = por %p117, %p118
    %s121 = sadd.s32 %s120, 1
    %p124 = scmp.eq.s32.totalorder %s13, 1
    %p125 = scmp.ne.s32.totalorder %s120, %s122
    %p126 = scmp.eq.s32.totalorder %s13, 0
    %p127 = por %p125, %p126
    %p128 = scmp.ne.s32.totalorder %s120, %s122
    %p129 = scmp.eq.s32.totalorder %s18, 1
    %p130 = por %p128, %p129
    %p131 = scmp.ne.s32.totalorder %s122, %s123
    %p132 = scmp.eq.s32.totalorder %s18, 0
    %p133 = por %p131, %p132
    %p134 = scmp.ne.s32.totalorder %s122, %s123
    %p135 = scmp.eq.s32.totalorder %s19, 1
    %p136 = por %p134, %p135
    %p138 = scmp.ne.s32.totalorder %s123, %s137
    %p139 = scmp.eq.s32.totalorder %s19, 0
    %p140 = por %p138, %p139
    %s142 = sadd.s32 %s141, 1
    %p145 = scmp.eq.s32.totalorder %s13, 1
    %p146 = scmp.ne.s32.totalorder %s141, %s143
    %p147 = scmp.eq.s32.totalorder %s13, 0
    %p148 = por %p146, %p147
    %p149 = scmp.ne.s32.totalorder %s141, %s143
    %p150 = scmp.eq.s32.totalorder %s18, 1
    %p151 = por %p149, %p150
    %p152 = scmp.ne.s32.totalorder %s143, %s144
    %p153 = scmp.eq.s32.totalorder %s18, 0
    %p154 = por %p152, %p153
    %p155 = scmp.ne.s32.totalorder %s143, %s144
    %p156 = scmp.eq.s32.totalorder %s19, 1
    %p157 = por %p155, %p156
    %p159 = scmp.ne.s32.totalorder %s144, %s158
    %p160 = scmp.eq.s32.totalorder %s19, 0
    %p161 = por %p159, %p160
    %s162 = ssub.s32 %s13, %s20
    %p163 = scmp.eq.s32.totalorder %s162, 0
    %s165 = sadd.s32 %s164, 1
    %s166 = scalar_select %p163, %s164, %s165
    %p169 = pneg %p163
    %p170 = scmp.eq.s32.totalorder %s13, 1
    %p171 = por %p169, %p170
    %p172 = scmp.ne.s32.totalorder %s164, %s167
    %p173 = scmp.eq.s32.totalorder %s13, 0
    %p174 = por %p172, %p173
    %p175 = scmp.ne.s32.totalorder %s164, %s167
    %p176 = scmp.eq.s32.totalorder %s18, 1
    %p177 = por %p175, %p176
    %p178 = scmp.ne.s32.totalorder %s167, %s168
    %p179 = scmp.eq.s32.totalorder %s18, 0
    %p180 = por %p178, %p179
    %p181 = scmp.ne.s32.totalorder %s167, %s168
    %p182 = scmp.eq.s32.totalorder %s19, 1
    %p183 = por %p181, %p182
    %p185 = scmp.ne.s32.totalorder %s168, %s184
    %p186 = scmp.eq.s32.totalorder %s19, 0
    %p187 = por %p185, %p186
    %s188 = ssub.s32 %s13, %s20
    %p189 = scmp.eq.s32.totalorder %s188, 0
    %s191 = sadd.s32 %s190, 1
    %s192 = scalar_select %p189, %s190, %s191
    %p195 = pneg %p189
    %p196 = scmp.eq.s32.totalorder %s13, 1
    %p197 = por %p195, %p196
    %p198 = scmp.ne.s32.totalorder %s190, %s193
    %p199 = scmp.eq.s32.totalorder %s13, 0
    %p200 = por %p198, %p199
    %p201 = scmp.ne.s32.totalorder %s190, %s193
    %p202 = scmp.eq.s32.totalorder %s18, 1
    %p203 = por %p201, %p202
    %p204 = scmp.ne.s32.totalorder %s193, %s194
    %p205 = scmp.eq.s32.totalorder %s18, 0
    %p206 = por %p204, %p205
    %p207 = scmp.ne.s32.totalorder %s193, %s194
    %p208 = scmp.eq.s32.totalorder %s19, 1
    %p209 = por %p207, %p208
    %p211 = scmp.ne.s32.totalorder %s194, %s210
    %p212 = scmp.eq.s32.totalorder %s19, 0
    %p213 = por %p211, %p212
    %p214 = scmp.le.s32.totalorder 1, %s13
    %p215 = scmp.lt.s32.totalorder %s13, 3
    %p216 = pnand %p214, %p215
    %p217 = pneg %p216
    // Predicated region
    $region9: #{sent_posit_drmm_forward_batch.1} parent=5 // pred_check
      _
    $region10: #{sent_posit_drmm_forward_batch.1} parent=5 // pred_check_branch
      %219 = sbr.rel (%p216) target = $region12
    $region11: #{sent_posit_drmm_forward_batch.1} parent=5 // pred_region
      %s220 = ssub.s32 %s13, 1
      // Predicated region
      $region13: #{sent_posit_drmm_forward_batch.1} parent=11 // pred_check
        %p221 = pneg %p112
      $region14: #{sent_posit_drmm_forward_batch.1} parent=11 // pred_check_branch
        %223 = sbr.rel (%p221) target = $region16
      $region15: #{sent_posit_drmm_forward_batch.1} parent=11 // pred_region
        _
      $region16: #{sent_posit_drmm_forward_batch.1} parent=11 // pred_fallthru
        _
      // Predicated region
      $region17: #{sent_posit_drmm_forward_batch.1} parent=11 // pred_check
        %p224 = pneg %p133
      $region18: #{sent_posit_drmm_forward_batch.1} parent=11 // pred_check_branch
        %226 = sbr.rel (%p224) target = $region20
      $region19: #{sent_posit_drmm_forward_batch.1} parent=11 // pred_region
        _
      $region20: #{sent_posit_drmm_forward_batch.1} parent=11 // pred_fallthru
        _
      // Predicated region
      $region21: #{sent_posit_drmm_forward_batch.1} parent=11 // pred_check
        %p227 = pneg %p154
      $region22: #{sent_posit_drmm_forward_batch.1} parent=11 // pred_check_branch
        %229 = sbr.rel (%p227) target = $region24
      $region23: #{sent_posit_drmm_forward_batch.1} parent=11 // pred_region
        _
      $region24: #{sent_posit_drmm_forward_batch.1} parent=11 // pred_fallthru
        _
    $region12: #{sent_posit_drmm_forward_batch.1} parent=5 // pred_fallthru
      _
    %p230 = scmp.lt.s32.totalorder %s13, 2
    // Predicated region
    $region25: #{sent_posit_drmm_forward_batch.1} parent=5 // pred_check
      %p231 = pneg %p230
    $region26: #{sent_posit_drmm_forward_batch.1} parent=5 // pred_check_branch
      %233 = sbr.rel (%p231) target = $region28
    $region27: #{sent_posit_drmm_forward_batch.1} parent=5 // pred_region
      // Predicated region
      $region29: #{sent_posit_drmm_forward_batch.1} parent=27 // pred_check
        %p234 = pneg %p33
      $region30: #{sent_posit_drmm_forward_batch.1} parent=27 // pred_check_branch
        %236 = sbr.rel (%p234) target = $region32
      $region31: #{sent_posit_drmm_forward_batch.1} parent=27 // pred_region
        %s237 = smul.u32 4, %s13
        %p238 = scmp.lt.s32.totalorder %s237, 7
        %s239 = scalar_select %p238, %s237, 7
        %s240 = smul.addr %s239, 8
        %s241 = scalar_lea.vmem %s0, %s240
        %s242 = smul.u32 4, %s13
      $region32: #{sent_posit_drmm_forward_batch.1} parent=27 // pred_fallthru
        _
      // Predicated region
      $region33: #{sent_posit_drmm_forward_batch.1} parent=27 // pred_check
        %p243 = pneg %p59
      $region34: #{sent_posit_drmm_forward_batch.1} parent=27 // pred_check_branch
        %245 = sbr.rel (%p243) target = $region36
      $region35: #{sent_posit_drmm_forward_batch.1} parent=27 // pred_region
        %s246 = smul.u32 4, %s13
        %p247 = scmp.lt.s32.totalorder %s246, 7
        %s248 = scalar_select %p247, %s246, 7
        %s249 = smul.addr %s248, 2
        %s250 = smul.addr %s249, 8
        %s251 = scalar_lea.vmem %s1, %s250
        %s252 = smul.u32 4, %s13
      $region36: #{sent_posit_drmm_forward_batch.1} parent=27 // pred_fallthru
        _
      // Predicated region
      $region37: #{sent_posit_drmm_forward_batch.1} parent=27 // pred_check
        %p253 = pneg %p85
      $region38: #{sent_posit_drmm_forward_batch.1} parent=27 // pred_check_branch
        %255 = sbr.rel (%p253) target = $region40
      $region39: #{sent_posit_drmm_forward_batch.1} parent=27 // pred_region
        %s256 = smul.u32 4, %s13
        %p257 = scmp.lt.s32.totalorder %s256, 7
        %s258 = scalar_select %p257, %s256, 7
        %s259 = smul.addr %s258, 2
        %s260 = smul.addr %s259, 8
        %s261 = scalar_lea.vmem %s2, %s260
        %s262 = smul.u32 4, %s13
      $region40: #{sent_posit_drmm_forward_batch.1} parent=27 // pred_fallthru
        _
      // Predicated region
      $region41: #{sent_posit_drmm_forward_batch.1} parent=27 // pred_check
        %p263 = pneg %p174
      $region42: #{sent_posit_drmm_forward_batch.1} parent=27 // pred_check_branch
        %265 = sbr.rel (%p263) target = $region44
      $region43: #{sent_posit_drmm_forward_batch.1} parent=27 // pred_region
        %p266 = scmp.lt.s32.totalorder %s13, 1
        %s267 = scalar_select %p266, %s13, 1
        %s268 = smul.addr %s267, 4
        %s269 = scalar_lea.vmem %s6, %s268
      $region44: #{sent_posit_drmm_forward_batch.1} parent=27 // pred_fallthru
        _
    $region28: #{sent_posit_drmm_forward_batch.1} parent=5 // pred_fallthru
      _
    %p270 = scmp.le.s32.totalorder 1, %s13
    %p271 = scmp.lt.s32.totalorder %s13, 3
    %p272 = pnand %p270, %p271
    %p273 = pneg %p272
    // Predicated region
    $region45: #{sent_posit_drmm_forward_batch.1} parent=5 // pred_check
      _
    $region46: #{sent_posit_drmm_forward_batch.1} parent=5 // pred_check_branch
      %275 = sbr.rel (%p272) target = $region48
    $region47: #{sent_posit_drmm_forward_batch.1} parent=5 // pred_region
      %s276 = ssub.s32 %s13, 1
      %s277 = smul.u32 4, %s18
      %p278 = scmp.lt.s32.totalorder %s277, 7
      %s279 = scalar_select %p278, %s277, 7
      %s280 = smul.addr %s279, 8
      %s281 = scalar_lea.vmem %s0, %s280
      %p282 = pneg %p39
      %p283 = pneg %p36
      %s284 = smul.u32 4, %s18
      %p285 = scmp.lt.s32.totalorder %s284, 7
      %s286 = scalar_select %p285, %s284, 7
      %s287 = smul.addr %s286, 2
      %s288 = smul.addr %s287, 8
      %s289 = scalar_lea.vmem %s1, %s288
      %p290 = pneg %p65
      %p291 = pneg %p62
      %s292 = smul.u32 4, %s18
      %p293 = scmp.lt.s32.totalorder %s292, 7
      %s294 = scalar_select %p293, %s292, 7
      %s295 = smul.addr %s294, 2
      %s296 = smul.addr %s295, 8
      %s297 = scalar_lea.vmem %s2, %s296
      %p298 = pneg %p91
      %p299 = pneg %p88
      %p300 = pneg %p112
      %p301 = pneg %p109
      %p302 = pneg %p133
      %p303 = pneg %p130
      %p304 = pneg %p154
      %p305 = pneg %p151
      %p306 = scmp.lt.s32.totalorder %s18, 1
      %s307 = scalar_select %p306, %s18, 1
      %s308 = smul.addr %s307, 4
      %s309 = scalar_lea.vmem %s6, %s308
      %p310 = pneg %p180
      %p311 = pneg %p177
      %p312 = pneg %p206
      %p313 = pneg %p203
      %p314 = scmp.lt.s32.totalorder %s18, 1
      %s315 = scalar_select %p314, %s18, 1
      %s316 = smul.addr %s315, 4
      %s317 = scalar_lea.vmem %s7, %s316
      %s318 = smul.u32 4, %s18
      %p319 = scmp.lt.s32.totalorder %s318, 7
      %s320 = scalar_select %p319, %s318, 7
      %s321 = smul.addr %s320, 8
      %s322 = scalar_lea.vmem %s0, %s321
      %s323 = smul.u32 4, %s18
      %s324 = smul.u32 4, %s18
      %p325 = scmp.lt.s32.totalorder %s324, 7
      %s326 = scalar_select %p325, %s324, 7
      %s327 = smul.addr %s326, 2
      %s328 = smul.addr %s327, 8
      %s329 = scalar_lea.vmem %s1, %s328
      %s330 = smul.u32 4, %s18
      %s331 = smul.u32 4, %s18
      %p332 = scmp.lt.s32.totalorder %s331, 7
      %s333 = scalar_select %p332, %s331, 7
      %s334 = smul.addr %s333, 2
      %s335 = smul.addr %s334, 8
      %s336 = scalar_lea.vmem %s2, %s335
      %s337 = smul.u32 4, %s18
      %p338 = scmp.lt.s32.totalorder %s18, 1
      %s339 = scalar_select %p338, %s18, 1
      %s340 = smul.addr %s339, 4
      %s341 = scalar_lea.vmem %s6, %s340
      %p342 = scmp.lt.s32.totalorder %s18, 1
      %s343 = scalar_select %p342, %s18, 1
      %s344 = smul.addr %s343, 4
      %s345 = scalar_lea.vmem %s7, %s344
      %v347 = vld [vmem:[%s3] sm:$0xf]
      %v348 = vld [vmem:[%s3 + $0x4] sm:$0xf]
      %v349 = vld [vmem:[%s3 + $0x8] sm:$0xf]
      %v350 = vld [vmem:[%s3 + $0xc] sm:$0xf]
      %v351 = vld [vmem:[%s3 + $0x10] sm:$0xf]
      %v352 = vld [vmem:[%s3 + $0x14] sm:$0xf]
      %v353 = vld [vmem:[%s3 + $0x18] sm:$0xf]
      %v354 = vld [vmem:[%s3 + $0x1c] sm:$0xf]
      %v355 = vld [vmem:[%s3 + $0x20] sm:$0xf]
      %v356 = vld [vmem:[%s3 + $0x24] sm:$0xf]
      %v357 = vld [vmem:[%s3 + $0x28] sm:$0xf]
      %v358 = vld [vmem:[%s3 + $0x2c] sm:$0xf]
      %v359 = vld [vmem:[%s4] sm:$0x1]
      %v360 = vld [vmem:[%s322] sm:$0xff]
      %v361 = vld [vmem:[%s322 + $0x8] sm:$0xff]
      %v362 = vld [vmem:[%s322 + $0x10] sm:$0xff]
      %v363 = vld [vmem:[%s322 + $0x18] sm:$0xff]
      %v364 = vld [vmem:[%s329] sm:$0xff]
      %v365 = vld [vmem:[%s329 + $0x8] sm:$0xff]
      %v366 = vld [vmem:[%s329 + $0x10] sm:$0xff]
      %v367 = vld [vmem:[%s329 + $0x18] sm:$0xff]
      %v368 = vld [vmem:[%s329 + $0x20] sm:$0xff]
      %v369 = vld [vmem:[%s329 + $0x28] sm:$0xff]
      %v370 = vld [vmem:[%s329 + $0x30] sm:$0xff]
      %v371 = vld [vmem:[%s329 + $0x38] sm:$0xff]
      %v372 = vlaneseq
      %v373 = vshrl.u32 %v372, 7
      %v374 = vrot.slane %v360, 1
      %v375 = vrot.slane %v361, 1
      %v376 = vrot.slane %v362, 1
      %v377 = vrot.slane %v363, 1
      %vm378 = vcmp.lt.s32.totalorder %v373, 7
      %v379 = vsel %vm378, %v376, %v377
      %v380 = vsel %vm378, %v375, %v376
      %v381 = vsel %vm378, %v374, %v375
      %v382 = vsel %vm378, %v377, %v374
      %v383 = vsel %vm378, %v381, 0.0
      %v384 = vsel %vm378, %v380, 0.0
      %v385 = vsel %vm378, %v379, 0.0
      %v386 = vsel %vm378, %v382, 0.0
      %v387 = vpack.c.bf16 %v384, %v383
      %v388 = vpack.c.bf16 %v386, %v385
      %vm389 = vcmask 261120
      %390 = vst.msk [vmem:[#allocation2] sm:$0xff] %vm389, %v387
      %391 = vst.msk [vmem:[#allocation2 + $0x8] sm:$0xff] %vm389, %v388
      %v392 = vrot.slane %v360, 2
      %v393 = vrot.slane %v361, 2
      %v394 = vrot.slane %v362, 2
      %v395 = vrot.slane %v363, 2
      %vm396 = vcmp.lt.s32.totalorder %v373, 6
      %v397 = vsel %vm396, %v394, %v395
      %v398 = vsel %vm396, %v393, %v394
      %v399 = vsel %vm396, %v392, %v393
      %v400 = vsel %vm396, %v395, %v392
      %v401 = vsel %vm396, %v399, 0.0
      %v402 = vsel %vm396, %v398, 0.0
      %v403 = vsel %vm396, %v397, 0.0
      %v404 = vsel %vm396, %v400, 0.0
      %v405 = vpack.c.bf16 %v402, %v401
      %v406 = vpack.c.bf16 %v404, %v403
      %409 = vrot.lane.b32.xlu0 %v405, 32
      %v410 = vpop.permute.xlu0 %409
      %411 = vrot.lane.b32.xlu0 %v406, 32
      %v412 = vpop.permute.xlu0 %411
      %vm415 = vcmask 523520
      %416 = vst.msk [vmem:[#allocation2] sm:$0xff] %vm415, %v410
      %417 = vst.msk [vmem:[#allocation2 + $0x8] sm:$0xff] %vm415, %v412
      %v418 = vrot.slane %v360, 3
      %v419 = vrot.slane %v361, 3
      %v420 = vrot.slane %v362, 3
      %v421 = vrot.slane %v363, 3
      %vm422 = vcmp.lt.s32.totalorder %v373, 5
      %v423 = vsel %vm422, %v420, %v421
      %v424 = vsel %vm422, %v419, %v420
      %v425 = vsel %vm422, %v418, %v419
      %v426 = vsel %vm422, %v421, %v418
      %v427 = vsel %vm422, %v425, 0.0
      %v428 = vsel %vm422, %v424, 0.0
      %v429 = vsel %vm422, %v423, 0.0
      %v430 = vsel %vm422, %v426, 0.0
      %v431 = vpack.c.bf16 %v428, %v427
      %v432 = vpack.c.bf16 %v430, %v429
      %435 = vrot.lane.b32.xlu0 %v431, 64
      %v436 = vpop.permute.xlu0 %435
      %437 = vrot.lane.b32.xlu0 %v432, 64
      %v438 = vpop.permute.xlu0 %437
      %vm441 = vcmask 785920
      %442 = vst.msk [vmem:[#allocation2] sm:$0xff] %vm441, %v436
      %443 = vst.msk [vmem:[#allocation2 + $0x8] sm:$0xff] %vm441, %v438
      %v444 = vld [vmem:[#allocation2] sm:$0xff]
      %v445 = vld [vmem:[#allocation2 + $0x8] sm:$0xff]
      %v447 = vlaneseq
      %v448 = vshrl.u32 %v447, 7
      %v449 = vsub.s32 0, %v448
      %v450 = vrot.slane %v359, %v449
      %v464 = vunpack.c.l.b16 %v347
      %v465 = vunpack.c.l.b16 %v348
      %v466 = vunpack.c.l.b16 %v349
      %v467 = vunpack.c.l.b16 %v350
      %v468 = vunpack.c.l.b16 %v351
      %v469 = vunpack.c.l.b16 %v352
      %v470 = vunpack.c.l.b16 %v353
      %v471 = vunpack.c.l.b16 %v354
      %v472 = vunpack.c.l.b16 %v355
      %v473 = vunpack.c.l.b16 %v356
      %v474 = vunpack.c.l.b16 %v357
      %v475 = vunpack.c.l.b16 %v358
      %v476 = vpack.c.b16 %v465, %v464
      %v477 = vpack.c.b16 %v467, %v466
      %v478 = vpack.c.b16 %v469, %v468
      %v479 = vpack.c.b16 %v471, %v470
      %v480 = vpack.c.b16 %v473, %v472
      %v481 = vpack.c.b16 %v475, %v474
      %vm488 = vcmask 785408
      %v490 = vsel %vm488, %v444, 0
      %v493 = vsel %vm488, %v445, 0
      %495 = vmatprep.subr.bf16.mxu0 0
      %496 = vmatpush1.bf16.msra.mxu0 %v476
      %497 = vmatprep.subr.bf16.mxu0 0
      %498 = vmatpush1.bf16.msra.mxu0 %v477
      %499 = vmatprep.subr.bf16.mxu0 0
      %500 = vmatpush1.bf16.msra.mxu0 %v478
      %501 = vmatprep.subr.bf16.mxu0 0
      %502 = vmatpush1.bf16.msra.mxu0 %v479
      %503 = vmatprep.subr.bf16.mxu0 0
      %504 = vmatpush1.bf16.msra.mxu0 %v480
      %505 = vmatprep.subr.bf16.mxu0 0
      %506 = vmatpush1.bf16.msra.mxu0 %v481
      %507 = vmatprep.subr.bf16.mxu0 0
      %508 = vmatpush1.bf16.msra.mxu0 0
      %509 = vmatprep.subr.bf16.mxu0 0
      %510 = vmatpush1.bf16.msra.mxu0 0
      %511 = vmatprep.subr.bf16.mxu0 0
      %512 = vmatpush1.bf16.msra.mxu0 0
      %513 = vmatprep.subr.bf16.mxu0 0
      %514 = vmatpush1.bf16.msra.mxu0 0
      %515 = vmatprep.subr.bf16.mxu0 0
      %516 = vmatpush1.bf16.msra.mxu0 0
      %517 = vmatprep.subr.bf16.mxu0 0
      %518 = vmatpush1.bf16.msra.mxu0 0
      %519 = vmatprep.subr.bf16.mxu0 0
      %520 = vmatpush1.bf16.msra.mxu0 0
      %521 = vmatprep.subr.bf16.mxu0 0
      %522 = vmatpush1.bf16.msra.mxu0 0
      %523 = vmatprep.subr.bf16.mxu0 0
      %524 = vmatpush1.bf16.msra.mxu0 0
      %525 = vmatprep.subr.bf16.mxu0 0
      %526 = vmatpush1.bf16.msra.mxu0 0
      %527 = vmatprep.mubr.bf16.mxu0 0
      %528 = vmatmul.mubr.bf16.gmra.mrb[0].mxu0 %v490
      %v529 = vpop.f32.mrb[0].mxu0
      %v530 = vadd.f32 %v450, %v529
      %v531 = vpop.f32.mrb[0].mxu0
      %v532 = vpop.f32.mrb[0].mxu0
      %v533 = vadd.f32 %v450, %v532
      %v534 = vpop.f32.mrb[0].mxu0
      %535 = vmatprep.mubr.bf16.mxu0 0
      %536 = vmatmul.mubr.bf16.gmra.mrb[0].mxu0 %v493
      %v537 = vpop.f32.mrb[0].mxu0
      %v538 = vadd.f32 %v450, %v537
      %v539 = vpop.f32.mrb[0].mxu0
      %v540 = vpop.f32.mrb[0].mxu0
      %v541 = vadd.f32 %v450, %v540
      %v542 = vpop.f32.mrb[0].mxu0
      %543 = vdwg.mxu0
      %v544 = vxor.u32 %v530, 2147483648
      %v545 = vxor.u32 %v533, 2147483648
      %v546 = vxor.u32 %v538, 2147483648
      %v547 = vxor.u32 %v541, 2147483648
      %v548 = vmul.f32 %v544, 1.442695
      %v549 = vpow.pop %v548
      %v550 = vmul.f32 %v545, 1.442695
      %v551 = vpow.pop %v550
      %v552 = vmul.f32 %v546, 1.442695
      %v553 = vpow.pop %v552
      %v554 = vmul.f32 %v547, 1.442695
      %v555 = vpow.pop %v554
      %v556 = vadd.f32 %v549, 1.0
      %v557 = vadd.f32 %v551, 1.0
      %v558 = vadd.f32 %v553, 1.0
      %v559 = vadd.f32 %v555, 1.0
      %v560 = vrcp.pop %v556
      %v561 = vmul.f32 1.0, %v560
      %v562 = vrcp.pop %v557
      %v563 = vmul.f32 1.0, %v562
      %v564 = vrcp.pop %v558
      %v565 = vmul.f32 1.0, %v564
      %v566 = vrcp.pop %v559
      %v567 = vmul.f32 1.0, %v566
      %v568 = vadd.f32 %v561, %v360
      %v569 = vadd.f32 %v563, %v361
      %v570 = vadd.f32 %v565, %v362
      %v571 = vadd.f32 %v567, %v363
      %v572 = vadd.s32 %v373, 8
      %v573 = vrot.slane %v364, 1
      %v574 = vrot.slane %v365, 1
      %v575 = vrot.slane %v366, 1
      %v576 = vrot.slane %v367, 1
      %v577 = vrot.slane %v368, 1
      %v578 = vrot.slane %v369, 1
      %v579 = vrot.slane %v370, 1
      %v580 = vrot.slane %v371, 1
      %v581 = vsel %vm378, %v579, %v580
      %v582 = vsel %vm378, %v578, %v579
      %v583 = vsel %vm378, %v577, %v578
      %v584 = vsel %vm378, %v576, %v577
      %v585 = vsel %vm378, %v575, %v576
      %v586 = vsel %vm378, %v574, %v575
      %v587 = vsel %vm378, %v573, %v574
      %v588 = vsel %vm378, %v580, %v573
      %vm589 = vcmp.lt.s32.totalorder %v373, 15
      %vm590 = vcmp.lt.s32.totalorder %v572, 15
      %v591 = vsel %vm589, %v587, 0.0
      %v592 = vsel %vm590, %v586, 0.0
      %v593 = vsel %vm589, %v585, 0.0
      %v594 = vsel %vm590, %v584, 0.0
      %v595 = vsel %vm589, %v583, 0.0
      %v596 = vsel %vm590, %v582, 0.0
      %v597 = vsel %vm589, %v581, 0.0
      %v598 = vsel %vm590, %v588, 0.0
      %v599 = vpack.c.bf16 %v592, %v591
      %v600 = vpack.c.bf16 %v594, %v593
      %v601 = vpack.c.bf16 %v596, %v595
      %v602 = vpack.c.bf16 %v598, %v597
      %603 = vst.msk [vmem:[#allocation3] sm:$0xff] %vm389, %v599
      %604 = vst.msk [vmem:[#allocation3 + $0x8] sm:$0xff] %vm389, %v600
      %605 = vst.msk [vmem:[#allocation3 + $0x10] sm:$0xff] %vm389, %v601
      %606 = vst.msk [vmem:[#allocation3 + $0x18] sm:$0xff] %vm389, %v602
      %v607 = vrot.slane %v364, 2
      %v608 = vrot.slane %v365, 2
      %v609 = vrot.slane %v366, 2
      %v610 = vrot.slane %v367, 2
      %v611 = vrot.slane %v368, 2
      %v612 = vrot.slane %v369, 2
      %v613 = vrot.slane %v370, 2
      %v614 = vrot.slane %v371, 2
      %v615 = vsel %vm396, %v613, %v614
      %v616 = vsel %vm396, %v612, %v613
      %v617 = vsel %vm396, %v611, %v612
      %v618 = vsel %vm396, %v610, %v611
      %v619 = vsel %vm396, %v609, %v610
      %v620 = vsel %vm396, %v608, %v609
      %v621 = vsel %vm396, %v607, %v608
      %v622 = vsel %vm396, %v614, %v607
      %vm623 = vcmp.lt.s32.totalorder %v373, 14
      %vm624 = vcmp.lt.s32.totalorder %v572, 14
      %v625 = vsel %vm623, %v621, 0.0
      %v626 = vsel %vm624, %v620, 0.0
      %v627 = vsel %vm623, %v619, 0.0
      %v628 = vsel %vm624, %v618, 0.0
      %v629 = vsel %vm623, %v617, 0.0
      %v630 = vsel %vm624, %v616, 0.0
      %v631 = vsel %vm623, %v615, 0.0
      %v632 = vsel %vm624, %v622, 0.0
      %v633 = vpack.c.bf16 %v626, %v625
      %v634 = vpack.c.bf16 %v628, %v627
      %v635 = vpack.c.bf16 %v630, %v629
      %v636 = vpack.c.bf16 %v632, %v631
      %641 = vrot.lane.b32.xlu0 %v633, 32
      %v642 = vpop.permute.xlu0 %641
      %643 = vrot.lane.b32.xlu0 %v634, 32
      %v644 = vpop.permute.xlu0 %643
      %645 = vrot.lane.b32.xlu0 %v635, 32
      %v646 = vpop.permute.xlu0 %645
      %647 = vrot.lane.b32.xlu0 %v636, 32
      %v648 = vpop.permute.xlu0 %647
      %653 = vst.msk [vmem:[#allocation3] sm:$0xff] %vm415, %v642
      %654 = vst.msk [vmem:[#allocation3 + $0x8] sm:$0xff] %vm415, %v644
      %655 = vst.msk [vmem:[#allocation3 + $0x10] sm:$0xff] %vm415, %v646
      %656 = vst.msk [vmem:[#allocation3 + $0x18] sm:$0xff] %vm415, %v648
      %v657 = vrot.slane %v364, 3
      %v658 = vrot.slane %v365, 3
      %v659 = vrot.slane %v366, 3
      %v660 = vrot.slane %v367, 3
      %v661 = vrot.slane %v368, 3
      %v662 = vrot.slane %v369, 3
      %v663 = vrot.slane %v370, 3
      %v664 = vrot.slane %v371, 3
      %v665 = vsel %vm422, %v663, %v664
      %v666 = vsel %vm422, %v662, %v663
      %v667 = vsel %vm422, %v661, %v662
      %v668 = vsel %vm422, %v660, %v661
      %v669 = vsel %vm422, %v659, %v660
      %v670 = vsel %vm422, %v658, %v659
      %v671 = vsel %vm422, %v657, %v658
      %v672 = vsel %vm422, %v664, %v657
      %vm673 = vcmp.lt.s32.totalorder %v373, 13
      %vm674 = vcmp.lt.s32.totalorder %v572, 13
      %v675 = vsel %vm673, %v671, 0.0
      %v676 = vsel %vm674, %v670, 0.0
      %v677 = vsel %vm673, %v669, 0.0
      %v678 = vsel %vm674, %v668, 0.0
      %v679 = vsel %vm673, %v667, 0.0
      %v680 = vsel %vm674, %v666, 0.0
      %v681 = vsel %vm673, %v665, 0.0
      %v682 = vsel %vm674, %v672, 0.0
      %v683 = vpack.c.bf16 %v676, %v675
      %v684 = vpack.c.bf16 %v678, %v677
      %v685 = vpack.c.bf16 %v680, %v679
      %v686 = vpack.c.bf16 %v682, %v681
      %691 = vrot.lane.b32.xlu0 %v683, 64
      %v692 = vpop.permute.xlu0 %691
      %693 = vrot.lane.b32.xlu0 %v684, 64
      %v694 = vpop.permute.xlu0 %693
      %695 = vrot.lane.b32.xlu0 %v685, 64
      %v696 = vpop.permute.xlu0 %695
      %697 = vrot.lane.b32.xlu0 %v686, 64
      %v698 = vpop.permute.xlu0 %697
      %703 = vst.msk [vmem:[#allocation3] sm:$0xff] %vm441, %v692
      %704 = vst.msk [vmem:[#allocation3 + $0x8] sm:$0xff] %vm441, %v694
      %705 = vst.msk [vmem:[#allocation3 + $0x10] sm:$0xff] %vm441, %v696
      %706 = vst.msk [vmem:[#allocation3 + $0x18] sm:$0xff] %vm441, %v698
      %v707 = vld [vmem:[#allocation3] sm:$0xff]
      %v708 = vld [vmem:[#allocation3 + $0x8] sm:$0xff]
      %v709 = vld [vmem:[#allocation3 + $0x10] sm:$0xff]
      %v710 = vld [vmem:[#allocation3 + $0x18] sm:$0xff]
      %v712 = vsel %vm488, %v707, 0
      %v715 = vsel %vm488, %v708, 0
      %v718 = vsel %vm488, %v709, 0
      %v721 = vsel %vm488, %v710, 0
      %723 = vmatprep.subr.bf16.mxu0 0
      %724 = vmatpush1.bf16.msra.mxu0 %v476
      %725 = vmatprep.subr.bf16.mxu0 0
      %726 = vmatpush1.bf16.msra.mxu0 %v477
      %727 = vmatprep.subr.bf16.mxu0 0
      %728 = vmatpush1.bf16.msra.mxu0 %v478
      %729 = vmatprep.subr.bf16.mxu0 0
      %730 = vmatpush1.bf16.msra.mxu0 %v479
      %731 = vmatprep.subr.bf16.mxu0 0
      %732 = vmatpush1.bf16.msra.mxu0 %v480
      %733 = vmatprep.subr.bf16.mxu0 0
      %734 = vmatpush1.bf16.msra.mxu0 %v481
      %735 = vmatprep.subr.bf16.mxu0 0
      %736 = vmatpush1.bf16.msra.mxu0 0
      %737 = vmatprep.subr.bf16.mxu0 0
      %738 = vmatpush1.bf16.msra.mxu0 0
      %739 = vmatprep.subr.bf16.mxu0 0
      %740 = vmatpush1.bf16.msra.mxu0 0
      %741 = vmatprep.subr.bf16.mxu0 0
      %742 = vmatpush1.bf16.msra.mxu0 0
      %743 = vmatprep.subr.bf16.mxu0 0
      %744 = vmatpush1.bf16.msra.mxu0 0
      %745 = vmatprep.subr.bf16.mxu0 0
      %746 = vmatpush1.bf16.msra.mxu0 0
      %747 = vmatprep.subr.bf16.mxu0 0
      %748 = vmatpush1.bf16.msra.mxu0 0
      %749 = vmatprep.subr.bf16.mxu0 0
      %750 = vmatpush1.bf16.msra.mxu0 0
      %751 = vmatprep.subr.bf16.mxu0 0
      %752 = vmatpush1.bf16.msra.mxu0 0
      %753 = vmatprep.subr.bf16.mxu0 0
      %754 = vmatpush1.bf16.msra.mxu0 0
      %755 = vmatprep.mubr.bf16.mxu0 0
      %756 = vmatmul.mubr.bf16.gmra.mrb[0].mxu0 %v712
      %v757 = vpop.f32.mrb[0].mxu0
      %v758 = vadd.f32 %v450, %v757
      %v759 = vpop.f32.mrb[0].mxu0
      %v760 = vpop.f32.mrb[0].mxu0
      %v761 = vadd.f32 %v450, %v760
      %v762 = vpop.f32.mrb[0].mxu0
      %763 = vmatprep.mubr.bf16.mxu0 0
      %764 = vmatmul.mubr.bf16.gmra.mrb[0].mxu0 %v715
      %v765 = vpop.f32.mrb[0].mxu0
      %v766 = vadd.f32 %v450, %v765
      %v767 = vpop.f32.mrb[0].mxu0
      %v768 = vpop.f32.mrb[0].mxu0
      %v769 = vadd.f32 %v450, %v768
      %v770 = vpop.f32.mrb[0].mxu0
      %771 = vmatprep.mubr.bf16.mxu0 0
      %772 = vmatmul.mubr.bf16.gmra.mrb[0].mxu0 %v718
      %v773 = vpop.f32.mrb[0].mxu0
      %v774 = vadd.f32 %v450, %v773
      %v775 = vpop.f32.mrb[0].mxu0
      %v776 = vpop.f32.mrb[0].mxu0
      %v777 = vadd.f32 %v450, %v776
      %v778 = vpop.f32.mrb[0].mxu0
      %779 = vmatprep.mubr.bf16.mxu0 0
      %780 = vmatmul.mubr.bf16.gmra.mrb[0].mxu0 %v721
      %v781 = vpop.f32.mrb[0].mxu0
      %v782 = vadd.f32 %v450, %v781
      %v783 = vpop.f32.mrb[0].mxu0
      %v784 = vpop.f32.mrb[0].mxu0
      %v785 = vadd.f32 %v450, %v784
      %v786 = vpop.f32.mrb[0].mxu0
      %787 = vdwg.mxu0
      %v788 = vxor.u32 %v758, 2147483648
      %v789 = vxor.u32 %v761, 2147483648
      %v790 = vxor.u32 %v766, 2147483648
      %v791 = vxor.u32 %v769, 2147483648
      %v792 = vxor.u32 %v774, 2147483648
      %v793 = vxor.u32 %v777, 2147483648
      %v794 = vxor.u32 %v782, 2147483648
      %v795 = vxor.u32 %v785, 2147483648
      %v796 = vmul.f32 %v788, 1.442695
      %v797 = vpow.pop %v796
      %v798 = vmul.f32 %v789, 1.442695
      %v799 = vpow.pop %v798
      %v800 = vmul.f32 %v790, 1.442695
      %v801 = vpow.pop %v800
      %v802 = vmul.f32 %v791, 1.442695
      %v803 = vpow.pop %v802
      %v804 = vmul.f32 %v792, 1.442695
      %v805 = vpow.pop %v804
      %v806 = vmul.f32 %v793, 1.442695
      %v807 = vpow.pop %v806
      %v808 = vmul.f32 %v794, 1.442695
      %v809 = vpow.pop %v808
      %v810 = vmul.f32 %v795, 1.442695
      %v811 = vpow.pop %v810
      %v812 = vadd.f32 %v797, 1.0
      %v813 = vadd.f32 %v799, 1.0
      %v814 = vadd.f32 %v801, 1.0
      %v815 = vadd.f32 %v803, 1.0
      %v816 = vadd.f32 %v805, 1.0
      %v817 = vadd.f32 %v807, 1.0
      %v818 = vadd.f32 %v809, 1.0
      %v819 = vadd.f32 %v811, 1.0
      %v820 = vrcp.pop %v812
      %v821 = vmul.f32 1.0, %v820
      %v822 = vrcp.pop %v813
      %v823 = vmul.f32 1.0, %v822
      %v824 = vrcp.pop %v814
      %v825 = vmul.f32 1.0, %v824
      %v826 = vrcp.pop %v815
      %v827 = vmul.f32 1.0, %v826
      %v828 = vrcp.pop %v816
      %v829 = vmul.f32 1.0, %v828
      %v830 = vrcp.pop %v817
      %v831 = vmul.f32 1.0, %v830
      %v832 = vrcp.pop %v818
      %v833 = vmul.f32 1.0, %v832
      %v834 = vrcp.pop %v819
      %v835 = vmul.f32 1.0, %v834
      %v836 = vadd.f32 %v821, %v364
      %v837 = vadd.f32 %v823, %v365
      %v838 = vadd.f32 %v825, %v366
      %v839 = vadd.f32 %v827, %v367
      %v840 = vadd.f32 %v829, %v368
      %v841 = vadd.f32 %v831, %v369
      %v842 = vadd.f32 %v833, %v370
      %v843 = vadd.f32 %v835, %v371
      %v844 = vmul.f32 %v360, %v360
      %v845 = vmul.f32 %v361, %v361
      %v846 = vmul.f32 %v362, %v362
      %v847 = vmul.f32 %v363, %v363
      %v848 = vsel %vm389, %v844, 0.0
      %849 = vadd.xlane.f32.xlu0 %v848
      %v850 = vpop.xlane.xlu0 %849
      %v851 = vsel %vm389, %v845, 0.0
      %852 = vadd.xlane.f32.xlu0 %v851
      %v853 = vpop.xlane.xlu0 %852
      %v854 = vsel %vm389, %v846, 0.0
      %855 = vadd.xlane.f32.xlu0 %v854
      %v856 = vpop.xlane.xlu0 %855
      %v857 = vsel %vm389, %v847, 0.0
      %858 = vadd.xlane.f32.xlu0 %v857
      %v859 = vpop.xlane.xlu0 %858
      %v860 = vrsqrt.pop %v850
      %v861 = vrsqrt.pop %v853
      %v862 = vrsqrt.pop %v856
      %v863 = vrsqrt.pop %v859
      %v864 = vmul.f32 %v360, %v860
      %v865 = vmul.f32 %v361, %v861
      %v866 = vmul.f32 %v362, %v862
      %v867 = vmul.f32 %v363, %v863
      %v868 = vpack.c.bf16 %v865, %v864
      %v869 = vpack.c.bf16 %v867, %v866
      %v872 = vunpack.c.l.b16 %v868
      %v873 = vunpack.c.h.b16 %v868
      %v874 = vunpack.c.l.b16 %v869
      %v875 = vunpack.c.h.b16 %v869
      %v876 = vpack.c.b16 %v872, %v872
      %v877 = vpack.c.b16 %v873, %v873
      %v878 = vpack.c.b16 %v874, %v874
      %v879 = vpack.c.b16 %v875, %v875
      %v880 = vmul.f32 %v364, %v364
      %v881 = vmul.f32 %v365, %v365
      %v882 = vmul.f32 %v366, %v366
      %v883 = vmul.f32 %v367, %v367
      %v884 = vmul.f32 %v368, %v368
      %v885 = vmul.f32 %v369, %v369
      %v886 = vmul.f32 %v370, %v370
      %v887 = vmul.f32 %v371, %v371
      %v888 = vsel %vm389, %v880, 0.0
      %889 = vadd.xlane.f32.xlu0 %v888
      %v890 = vpop.xlane.xlu0 %889
      %v891 = vsel %vm389, %v881, 0.0
      %892 = vadd.xlane.f32.xlu0 %v891
      %v893 = vpop.xlane.xlu0 %892
      %v894 = vsel %vm389, %v882, 0.0
      %895 = vadd.xlane.f32.xlu0 %v894
      %v896 = vpop.xlane.xlu0 %895
      %v897 = vsel %vm389, %v883, 0.0
      %898 = vadd.xlane.f32.xlu0 %v897
      %v899 = vpop.xlane.xlu0 %898
      %v900 = vsel %vm389, %v884, 0.0
      %901 = vadd.xlane.f32.xlu0 %v900
      %v902 = vpop.xlane.xlu0 %901
      %v903 = vsel %vm389, %v885, 0.0
      %904 = vadd.xlane.f32.xlu0 %v903
      %v905 = vpop.xlane.xlu0 %904
      %v906 = vsel %vm389, %v886, 0.0
      %907 = vadd.xlane.f32.xlu0 %v906
      %v908 = vpop.xlane.xlu0 %907
      %v909 = vsel %vm389, %v887, 0.0
      %910 = vadd.xlane.f32.xlu0 %v909
      %v911 = vpop.xlane.xlu0 %910
      %v912 = vrsqrt.pop %v890
      %v913 = vrsqrt.pop %v893
      %v914 = vrsqrt.pop %v896
      %v915 = vrsqrt.pop %v899
      %v916 = vrsqrt.pop %v902
      %v917 = vrsqrt.pop %v905
      %v918 = vrsqrt.pop %v908
      %v919 = vrsqrt.pop %v911
      %v920 = vmul.f32 %v364, %v912
      %v921 = vmul.f32 %v365, %v913
      %v922 = vmul.f32 %v366, %v914
      %v923 = vmul.f32 %v367, %v915
      %v924 = vmul.f32 %v368, %v916
      %v925 = vmul.f32 %v369, %v917
      %v926 = vmul.f32 %v370, %v918
      %v927 = vmul.f32 %v371, %v919
      %v928 = vpack.c.bf16 %v921, %v920
      %v929 = vpack.c.bf16 %v923, %v922
      %v930 = vpack.c.bf16 %v925, %v924
      %v931 = vpack.c.bf16 %v927, %v926
      %v932 = vmul.f32 %v568, %v568
      %v933 = vmul.f32 %v569, %v569
      %v934 = vmul.f32 %v570, %v570
      %v935 = vmul.f32 %v571, %v571
      %v936 = vsel %vm389, %v932, 0.0
      %937 = vadd.xlane.f32.xlu0 %v936
      %v938 = vpop.xlane.xlu0 %937
      %v939 = vsel %vm389, %v933, 0.0
      %940 = vadd.xlane.f32.xlu0 %v939
      %v941 = vpop.xlane.xlu0 %940
      %v942 = vsel %vm389, %v934, 0.0
      %943 = vadd.xlane.f32.xlu0 %v942
      %v944 = vpop.xlane.xlu0 %943
      %v945 = vsel %vm389, %v935, 0.0
      %946 = vadd.xlane.f32.xlu0 %v945
      %v947 = vpop.xlane.xlu0 %946
      %v948 = vrsqrt.pop %v938
      %v949 = vrsqrt.pop %v941
      %v950 = vrsqrt.pop %v944
      %v951 = vrsqrt.pop %v947
      %v952 = vmul.f32 %v568, %v948
      %v953 = vmul.f32 %v569, %v949
      %v954 = vmul.f32 %v570, %v950
      %v955 = vmul.f32 %v571, %v951
      %v956 = vpack.c.bf16 %v953, %v952
      %v957 = vpack.c.bf16 %v955, %v954
      %v960 = vunpack.c.l.b16 %v956
      %v961 = vunpack.c.h.b16 %v956
      %v962 = vunpack.c.l.b16 %v957
      %v963 = vunpack.c.h.b16 %v957
      %v964 = vpack.c.b16 %v960, %v960
      %v965 = vpack.c.b16 %v961, %v961
      %v966 = vpack.c.b16 %v962, %v962
      %v967 = vpack.c.b16 %v963, %v963
      %v968 = vmul.f32 %v836, %v836
      %v969 = vmul.f32 %v837, %v837
      %v970 = vmul.f32 %v838, %v838
      %v971 = vmul.f32 %v839, %v839
      %v972 = vmul.f32 %v840, %v840
      %v973 = vmul.f32 %v841, %v841
      %v974 = vmul.f32 %v842, %v842
      %v975 = vmul.f32 %v843, %v843
      %v976 = vsel %vm389, %v968, 0.0
      %977 = vadd.xlane.f32.xlu0 %v976
      %v978 = vpop.xlane.xlu0 %977
      %v979 = vsel %vm389, %v969, 0.0
      %980 = vadd.xlane.f32.xlu0 %v979
      %v981 = vpop.xlane.xlu0 %980
      %v982 = vsel %vm389, %v970, 0.0
      %983 = vadd.xlane.f32.xlu0 %v982
      %v984 = vpop.xlane.xlu0 %983
      %v985 = vsel %vm389, %v971, 0.0
      %986 = vadd.xlane.f32.xlu0 %v985
      %v987 = vpop.xlane.xlu0 %986
      %v988 = vsel %vm389, %v972, 0.0
      %989 = vadd.xlane.f32.xlu0 %v988
      %v990 = vpop.xlane.xlu0 %989
      %v991 = vsel %vm389, %v973, 0.0
      %992 = vadd.xlane.f32.xlu0 %v991
      %v993 = vpop.xlane.xlu0 %992
      %v994 = vsel %vm389, %v974, 0.0
      %995 = vadd.xlane.f32.xlu0 %v994
      %v996 = vpop.xlane.xlu0 %995
      %v997 = vsel %vm389, %v975, 0.0
      %998 = vadd.xlane.f32.xlu0 %v997
      %v999 = vpop.xlane.xlu0 %998
      %v1000 = vrsqrt.pop %v978
      %v1001 = vrsqrt.pop %v981
      %v1002 = vrsqrt.pop %v984
      %v1003 = vrsqrt.pop %v987
      %v1004 = vrsqrt.pop %v990
      %v1005 = vrsqrt.pop %v993
      %v1006 = vrsqrt.pop %v996
      %v1007 = vrsqrt.pop %v999
      %v1008 = vmul.f32 %v836, %v1000
      %v1009 = vmul.f32 %v837, %v1001
      %v1010 = vmul.f32 %v838, %v1002
      %v1011 = vmul.f32 %v839, %v1003
      %v1012 = vmul.f32 %v840, %v1004
      %v1013 = vmul.f32 %v841, %v1005
      %v1014 = vmul.f32 %v842, %v1006
      %v1015 = vmul.f32 %v843, %v1007
      %v1016 = vpack.c.bf16 %v1009, %v1008
      %v1017 = vpack.c.bf16 %v1011, %v1010
      %v1018 = vpack.c.bf16 %v1013, %v1012
      %v1019 = vpack.c.bf16 %v1015, %v1014
      %v1021 = vsel %vm389, %v876, 0
      %v1024 = vsel %vm389, %v928, 0
      %1026 = vmatprep.subr.bf16.mxu0 0
      %1027 = vmatpush1.bf16.xpose.msra.mxu0 %v1024
      %1028 = vmatprep.subr.bf16.mxu0 0
      %1029 = vmatpush1.bf16.xpose.msra.mxu0 0
      %1030 = vmatprep.subr.bf16.mxu0 0
      %1031 = vmatpush1.bf16.xpose.msra.mxu0 0
      %1032 = vmatprep.subr.bf16.mxu0 0
      %1033 = vmatpush1.bf16.xpose.msra.mxu0 0
      %1034 = vmatprep.subr.bf16.mxu0 0
      %1035 = vmatpush1.bf16.xpose.msra.mxu0 0
      %1036 = vmatprep.subr.bf16.mxu0 0
      %1037 = vmatpush1.bf16.xpose.msra.mxu0 0
      %1038 = vmatprep.subr.bf16.mxu0 0
      %1039 = vmatpush1.bf16.xpose.msra.mxu0 0
      %1040 = vmatprep.subr.bf16.mxu0 0
      %1041 = vmatpush1.bf16.xpose.msra.mxu0 0
      %1042 = vmatprep.subr.bf16.mxu0 0
      %1043 = vmatpush1.bf16.xpose.msra.mxu0 0
      %1044 = vmatprep.subr.bf16.mxu0 0
      %1045 = vmatpush1.bf16.xpose.msra.mxu0 0
      %1046 = vmatprep.subr.bf16.mxu0 0
      %1047 = vmatpush1.bf16.xpose.msra.mxu0 0
      %1048 = vmatprep.subr.bf16.mxu0 0
      %1049 = vmatpush1.bf16.xpose.msra.mxu0 0
      %1050 = vmatprep.subr.bf16.mxu0 0
      %1051 = vmatpush1.bf16.xpose.msra.mxu0 0
      %1052 = vmatprep.subr.bf16.mxu0 0
      %1053 = vmatpush1.bf16.xpose.msra.mxu0 0
      %1054 = vmatprep.subr.bf16.mxu0 0
      %1055 = vmatpush1.bf16.xpose.msra.mxu0 0
      %1056 = vmatprep.subr.bf16.mxu0 0
      %1057 = vmatpush1.bf16.xpose.msra.mxu0 0
      %1058 = vmatprep.mubr.bf16.mxu0 0
      %1059 = vmatmul.mubr.bf16.gmra.mrb[0].mxu0 %v1021
      %v1060 = vpop.f32.mrb[0].mxu0
      %v1061 = vadd.f32 0.0, %v1060
      %v1062 = vpop.f32.mrb[0].mxu0
      %v1063 = vpop.f32.mrb[0].mxu0
      %v1064 = vpop.f32.mrb[0].mxu0
      %1065 = vdwg.mxu0
      %v1067 = vsel %vm389, %v877, 0
      %v1070 = vsel %vm389, %v929, 0
      %1072 = vmatprep.subr.bf16.mxu0 0
      %1073 = vmatpush1.bf16.xpose.msra.mxu0 %v1070
      %1074 = vmatprep.subr.bf16.mxu0 0
      %1075 = vmatpush1.bf16.xpose.msra.mxu0 0
      %1076 = vmatprep.subr.bf16.mxu0 0
      %1077 = vmatpush1.bf16.xpose.msra.mxu0 0
      %1078 = vmatprep.subr.bf16.mxu0 0
      %1079 = vmatpush1.bf16.xpose.msra.mxu0 0
      %1080 = vmatprep.subr.bf16.mxu0 0
      %1081 = vmatpush1.bf16.xpose.msra.mxu0 0
      %1082 = vmatprep.subr.bf16.mxu0 0
      %1083 = vmatpush1.bf16.xpose.msra.mxu0 0
      %1084 = vmatprep.subr.bf16.mxu0 0
      %1085 = vmatpush1.bf16.xpose.msra.mxu0 0
      %1086 = vmatprep.subr.bf16.mxu0 0
      %1087 = vmatpush1.bf16.xpose.msra.mxu0 0
      %1088 = vmatprep.subr.bf16.mxu0 0
      %1089 = vmatpush1.bf16.xpose.msra.mxu0 0
      %1090 = vmatprep.subr.bf16.mxu0 0
      %1091 = vmatpush1.bf16.xpose.msra.mxu0 0
      %1092 = vmatprep.subr.bf16.mxu0 0
      %1093 = vmatpush1.bf16.xpose.msra.mxu0 0
      %1094 = vmatprep.subr.bf16.mxu0 0
      %1095 = vmatpush1.bf16.xpose.msra.mxu0 0
      %1096 = vmatprep.subr.bf16.mxu0 0
      %1097 = vmatpush1.bf16.xpose.msra.mxu0 0
      %1098 = vmatprep.subr.bf16.mxu0 0
      %1099 = vmatpush1.bf16.xpose.msra.mxu0 0
      %1100 = vmatprep.subr.bf16.mxu0 0
      %1101 = vmatpush1.bf16.xpose.msra.mxu0 0
      %1102 = vmatprep.subr.bf16.mxu0 0
      %1103 = vmatpush1.bf16.xpose.msra.mxu0 0
      %1104 = vmatprep.mubr.bf16.mxu0 0
      %1105 = vmatmul.mubr.bf16.gmra.mrb[0].mxu0 %v1067
      %v1106 = vpop.f32.mrb[0].mxu0
      %v1107 = vadd.f32 0.0, %v1106
      %v1108 = vpop.f32.mrb[0].mxu0
      %v1109 = vpop.f32.mrb[0].mxu0
      %v1110 = vpop.f32.mrb[0].mxu0
      %1111 = vdwg.mxu0
      %v1113 = vsel %vm389, %v878, 0
      %v1116 = vsel %vm389, %v930, 0
      %1118 = vmatprep.subr.bf16.mxu0 0
      %1119 = vmatpush1.bf16.xpose.msra.mxu0 %v1116
      %1120 = vmatprep.subr.bf16.mxu0 0
      %1121 = vmatpush1.bf16.xpose.msra.mxu0 0
      %1122 = vmatprep.subr.bf16.mxu0 0
      %1123 = vmatpush1.bf16.xpose.msra.mxu0 0
      %1124 = vmatprep.subr.bf16.mxu0 0
      %1125 = vmatpush1.bf16.xpose.msra.mxu0 0
      %1126 = vmatprep.subr.bf16.mxu0 0
      %1127 = vmatpush1.bf16.xpose.msra.mxu0 0
      %1128 = vmatprep.subr.bf16.mxu0 0
      %1129 = vmatpush1.bf16.xpose.msra.mxu0 0
      %1130 = vmatprep.subr.bf16.mxu0 0
      %1131 = vmatpush1.bf16.xpose.msra.mxu0 0
      %1132 = vmatprep.subr.bf16.mxu0 0
      %1133 = vmatpush1.bf16.xpose.msra.mxu0 0
      %1134 = vmatprep.subr.bf16.mxu0 0
      %1135 = vmatpush1.bf16.xpose.msra.mxu0 0
      %1136 = vmatprep.subr.bf16.mxu0 0
      %1137 = vmatpush1.bf16.xpose.msra.mxu0 0
      %1138 = vmatprep.subr.bf16.mxu0 0
      %1139 = vmatpush1.bf16.xpose.msra.mxu0 0
      %1140 = vmatprep.subr.bf16.mxu0 0
      %1141 = vmatpush1.bf16.xpose.msra.mxu0 0
      %1142 = vmatprep.subr.bf16.mxu0 0
      %1143 = vmatpush1.bf16.xpose.msra.mxu0 0
      %1144 = vmatprep.subr.bf16.mxu0 0
      %1145 = vmatpush1.bf16.xpose.msra.mxu0 0
      %1146 = vmatprep.subr.bf16.mxu0 0
      %1147 = vmatpush1.bf16.xpose.msra.mxu0 0
      %1148 = vmatprep.subr.bf16.mxu0 0
      %1149 = vmatpush1.bf16.xpose.msra.mxu0 0
      %1150 = vmatprep.mubr.bf16.mxu0 0
      %1151 = vmatmul.mubr.bf16.gmra.mrb[0].mxu0 %v1113
      %v1152 = vpop.f32.mrb[0].mxu0
      %v1153 = vadd.f32 0.0, %v1152
      %v1154 = vpop.f32.mrb[0].mxu0
      %v1155 = vpop.f32.mrb[0].mxu0
      %v1156 = vpop.f32.mrb[0].mxu0
      %1157 = vdwg.mxu0
      %v1159 = vsel %vm389, %v879, 0
      %v1162 = vsel %vm389, %v931, 0
      %1164 = vmatprep.subr.bf16.mxu0 0
      %1165 = vmatpush1.bf16.xpose.msra.mxu0 %v1162
      %1166 = vmatprep.subr.bf16.mxu0 0
      %1167 = vmatpush1.bf16.xpose.msra.mxu0 0
      %1168 = vmatprep.subr.bf16.mxu0 0
      %1169 = vmatpush1.bf16.xpose.msra.mxu0 0
      %1170 = vmatprep.subr.bf16.mxu0 0
      %1171 = vmatpush1.bf16.xpose.msra.mxu0 0
      %1172 = vmatprep.subr.bf16.mxu0 0
      %1173 = vmatpush1.bf16.xpose.msra.mxu0 0
      %1174 = vmatprep.subr.bf16.mxu0 0
      %1175 = vmatpush1.bf16.xpose.msra.mxu0 0
      %1176 = vmatprep.subr.bf16.mxu0 0
      %1177 = vmatpush1.bf16.xpose.msra.mxu0 0
      %1178 = vmatprep.subr.bf16.mxu0 0
      %1179 = vmatpush1.bf16.xpose.msra.mxu0 0
      %1180 = vmatprep.subr.bf16.mxu0 0
      %1181 = vmatpush1.bf16.xpose.msra.mxu0 0
      %1182 = vmatprep.subr.bf16.mxu0 0
      %1183 = vmatpush1.bf16.xpose.msra.mxu0 0
      %1184 = vmatprep.subr.bf16.mxu0 0
      %1185 = vmatpush1.bf16.xpose.msra.mxu0 0
      %1186 = vmatprep.subr.bf16.mxu0 0
      %1187 = vmatpush1.bf16.xpose.msra.mxu0 0
      %1188 = vmatprep.subr.bf16.mxu0 0
      %1189 = vmatpush1.bf16.xpose.msra.mxu0 0
      %1190 = vmatprep.subr.bf16.mxu0 0
      %1191 = vmatpush1.bf16.xpose.msra.mxu0 0
      %1192 = vmatprep.subr.bf16.mxu0 0
      %1193 = vmatpush1.bf16.xpose.msra.mxu0 0
      %1194 = vmatprep.subr.bf16.mxu0 0
      %1195 = vmatpush1.bf16.xpose.msra.mxu0 0
      %1196 = vmatprep.mubr.bf16.mxu0 0
      %1197 = vmatmul.mubr.bf16.gmra.mrb[0].mxu0 %v1159
      %v1198 = vpop.f32.mrb[0].mxu0
      %v1199 = vadd.f32 0.0, %v1198
      %v1200 = vpop.f32.mrb[0].mxu0
      %v1201 = vpop.f32.mrb[0].mxu0
      %v1202 = vpop.f32.mrb[0].mxu0
      %1203 = vdwg.mxu0
      %v1205 = vsel %vm389, %v964, 0
      %v1208 = vsel %vm389, %v1016, 0
      %1210 = vmatprep.subr.bf16.mxu0 0
      %1211 = vmatpush1.bf16.xpose.msra.mxu0 %v1208
      %1212 = vmatprep.subr.bf16.mxu0 0
      %1213 = vmatpush1.bf16.xpose.msra.mxu0 0
      %1214 = vmatprep.subr.bf16.mxu0 0
      %1215 = vmatpush1.bf16.xpose.msra.mxu0 0
      %1216 = vmatprep.subr.bf16.mxu0 0
      %1217 = vmatpush1.bf16.xpose.msra.mxu0 0
      %1218 = vmatprep.subr.bf16.mxu0 0
      %1219 = vmatpush1.bf16.xpose.msra.mxu0 0
      %1220 = vmatprep.subr.bf16.mxu0 0
      %1221 = vmatpush1.bf16.xpose.msra.mxu0 0
      %1222 = vmatprep.subr.bf16.mxu0 0
      %1223 = vmatpush1.bf16.xpose.msra.mxu0 0
      %1224 = vmatprep.subr.bf16.mxu0 0
      %1225 = vmatpush1.bf16.xpose.msra.mxu0 0
      %1226 = vmatprep.subr.bf16.mxu0 0
      %1227 = vmatpush1.bf16.xpose.msra.mxu0 0
      %1228 = vmatprep.subr.bf16.mxu0 0
      %1229 = vmatpush1.bf16.xpose.msra.mxu0 0
      %1230 = vmatprep.subr.bf16.mxu0 0
      %1231 = vmatpush1.bf16.xpose.msra.mxu0 0
      %1232 = vmatprep.subr.bf16.mxu0 0
      %1233 = vmatpush1.bf16.xpose.msra.mxu0 0
      %1234 = vmatprep.subr.bf16.mxu0 0
      %1235 = vmatpush1.bf16.xpose.msra.mxu0 0
      %1236 = vmatprep.subr.bf16.mxu0 0
      %1237 = vmatpush1.bf16.xpose.msra.mxu0 0
      %1238 = vmatprep.subr.bf16.mxu0 0
      %1239 = vmatpush1.bf16.xpose.msra.mxu0 0
      %1240 = vmatprep.subr.bf16.mxu0 0
      %1241 = vmatpush1.bf16.xpose.msra.mxu0 0
      %1242 = vmatprep.mubr.bf16.mxu0 0
      %1243 = vmatmul.mubr.bf16.gmra.mrb[0].mxu0 %v1205
      %v1244 = vpop.f32.mrb[0].mxu0
      %v1245 = vadd.f32 0.0, %v1244
      %v1246 = vpop.f32.mrb[0].mxu0
      %v1247 = vpop.f32.mrb[0].mxu0
      %v1248 = vpop.f32.mrb[0].mxu0
      %1249 = vdwg.mxu0
      %v1251 = vsel %vm389, %v965, 0
      %v1254 = vsel %vm389, %v1017, 0
      %1256 = vmatprep.subr.bf16.mxu0 0
      %1257 = vmatpush1.bf16.xpose.msra.mxu0 %v1254
      %1258 = vmatprep.subr.bf16.mxu0 0
      %1259 = vmatpush1.bf16.xpose.msra.mxu0 0
      %1260 = vmatprep.subr.bf16.mxu0 0
      %1261 = vmatpush1.bf16.xpose.msra.mxu0 0
      %1262 = vmatprep.subr.bf16.mxu0 0
      %1263 = vmatpush1.bf16.xpose.msra.mxu0 0
      %1264 = vmatprep.subr.bf16.mxu0 0
      %1265 = vmatpush1.bf16.xpose.msra.mxu0 0
      %1266 = vmatprep.subr.bf16.mxu0 0
      %1267 = vmatpush1.bf16.xpose.msra.mxu0 0
      %1268 = vmatprep.subr.bf16.mxu0 0
      %1269 = vmatpush1.bf16.xpose.msra.mxu0 0
      %1270 = vmatprep.subr.bf16.mxu0 0
      %1271 = vmatpush1.bf16.xpose.msra.mxu0 0
      %1272 = vmatprep.subr.bf16.mxu0 0
      %1273 = vmatpush1.bf16.xpose.msra.mxu0 0
      %1274 = vmatprep.subr.bf16.mxu0 0
      %1275 = vmatpush1.bf16.xpose.msra.mxu0 0
      %1276 = vmatprep.subr.bf16.mxu0 0
      %1277 = vmatpush1.bf16.xpose.msra.mxu0 0
      %1278 = vmatprep.subr.bf16.mxu0 0
      %1279 = vmatpush1.bf16.xpose.msra.mxu0 0
      %1280 = vmatprep.subr.bf16.mxu0 0
      %1281 = vmatpush1.bf16.xpose.msra.mxu0 0
      %1282 = vmatprep.subr.bf16.mxu0 0
      %1283 = vmatpush1.bf16.xpose.msra.mxu0 0
      %1284 = vmatprep.subr.bf16.mxu0 0
      %1285 = vmatpush1.bf16.xpose.msra.mxu0 0
      %1286 = vmatprep.subr.bf16.mxu0 0
      %1287 = vmatpush1.bf16.xpose.msra.mxu0 0
      %1288 = vmatprep.mubr.bf16.mxu0 0
      %1289 = vmatmul.mubr.bf16.gmra.mrb[0].mxu0 %v1251
      %v1290 = vpop.f32.mrb[0].mxu0
      %v1291 = vadd.f32 0.0, %v1290
      %v1292 = vpop.f32.mrb[0].mxu0
      %v1293 = vpop.f32.mrb[0].mxu0
      %v1294 = vpop.f32.mrb[0].mxu0
      %1295 = vdwg.mxu0
      %v1297 = vsel %vm389, %v966, 0
      %v1300 = vsel %vm389, %v1018, 0
      %1302 = vmatprep.subr.bf16.mxu0 0
      %1303 = vmatpush1.bf16.xpose.msra.mxu0 %v1300
      %1304 = vmatprep.subr.bf16.mxu0 0
      %1305 = vmatpush1.bf16.xpose.msra.mxu0 0
      %1306 = vmatprep.subr.bf16.mxu0 0
      %1307 = vmatpush1.bf16.xpose.msra.mxu0 0
      %1308 = vmatprep.subr.bf16.mxu0 0
      %1309 = vmatpush1.bf16.xpose.msra.mxu0 0
      %1310 = vmatprep.subr.bf16.mxu0 0
      %1311 = vmatpush1.bf16.xpose.msra.mxu0 0
      %1312 = vmatprep.subr.bf16.mxu0 0
      %1313 = vmatpush1.bf16.xpose.msra.mxu0 0
      %1314 = vmatprep.subr.bf16.mxu0 0
      %1315 = vmatpush1.bf16.xpose.msra.mxu0 0
      %1316 = vmatprep.subr.bf16.mxu0 0
      %1317 = vmatpush1.bf16.xpose.msra.mxu0 0
      %1318 = vmatprep.subr.bf16.mxu0 0
      %1319 = vmatpush1.bf16.xpose.msra.mxu0 0
      %1320 = vmatprep.subr.bf16.mxu0 0
      %1321 = vmatpush1.bf16.xpose.msra.mxu0 0
      %1322 = vmatprep.subr.bf16.mxu0 0
      %1323 = vmatpush1.bf16.xpose.msra.mxu0 0
      %1324 = vmatprep.subr.bf16.mxu0 0
      %1325 = vmatpush1.bf16.xpose.msra.mxu0 0
      %1326 = vmatprep.subr.bf16.mxu0 0
      %1327 = vmatpush1.bf16.xpose.msra.mxu0 0
      %1328 = vmatprep.subr.bf16.mxu0 0
      %1329 = vmatpush1.bf16.xpose.msra.mxu0 0
      %1330 = vmatprep.subr.bf16.mxu0 0
      %1331 = vmatpush1.bf16.xpose.msra.mxu0 0
      %1332 = vmatprep.subr.bf16.mxu0 0
      %1333 = vmatpush1.bf16.xpose.msra.mxu0 0
      %1334 = vmatprep.mubr.bf16.mxu0 0
      %1335 = vmatmul.mubr.bf16.gmra.mrb[0].mxu0 %v1297
      %v1336 = vpop.f32.mrb[0].mxu0
      %v1337 = vadd.f32 0.0, %v1336
      %v1338 = vpop.f32.mrb[0].mxu0
      %v1339 = vpop.f32.mrb[0].mxu0
      %v1340 = vpop.f32.mrb[0].mxu0
      %1341 = vdwg.mxu0
      %v1343 = vsel %vm389, %v967, 0
      %v1346 = vsel %vm389, %v1019, 0
      %1348 = vmatprep.subr.bf16.mxu0 0
      %1349 = vmatpush1.bf16.xpose.msra.mxu0 %v1346
      %1350 = vmatprep.subr.bf16.mxu0 0
      %1351 = vmatpush1.bf16.xpose.msra.mxu0 0
      %1352 = vmatprep.subr.bf16.mxu0 0
      %1353 = vmatpush1.bf16.xpose.msra.mxu0 0
      %1354 = vmatprep.subr.bf16.mxu0 0
      %1355 = vmatpush1.bf16.xpose.msra.mxu0 0
      %1356 = vmatprep.subr.bf16.mxu0 0
      %1357 = vmatpush1.bf16.xpose.msra.mxu0 0
      %1358 = vmatprep.subr.bf16.mxu0 0
      %1359 = vmatpush1.bf16.xpose.msra.mxu0 0
      %1360 = vmatprep.subr.bf16.mxu0 0
      %1361 = vmatpush1.bf16.xpose.msra.mxu0 0
      %1362 = vmatprep.subr.bf16.mxu0 0
      %1363 = vmatpush1.bf16.xpose.msra.mxu0 0
      %1364 = vmatprep.subr.bf16.mxu0 0
      %1365 = vmatpush1.bf16.xpose.msra.mxu0 0
      %1366 = vmatprep.subr.bf16.mxu0 0
      %1367 = vmatpush1.bf16.xpose.msra.mxu0 0
      %1368 = vmatprep.subr.bf16.mxu0 0
      %1369 = vmatpush1.bf16.xpose.msra.mxu0 0
      %1370 = vmatprep.subr.bf16.mxu0 0
      %1371 = vmatpush1.bf16.xpose.msra.mxu0 0
      %1372 = vmatprep.subr.bf16.mxu0 0
      %1373 = vmatpush1.bf16.xpose.msra.mxu0 0
      %1374 = vmatprep.subr.bf16.mxu0 0
      %1375 = vmatpush1.bf16.xpose.msra.mxu0 0
      %1376 = vmatprep.subr.bf16.mxu0 0
      %1377 = vmatpush1.bf16.xpose.msra.mxu0 0
      %1378 = vmatprep.subr.bf16.mxu0 0
      %1379 = vmatpush1.bf16.xpose.msra.mxu0 0
      %1380 = vmatprep.mubr.bf16.mxu0 0
      %1381 = vmatmul.mubr.bf16.gmra.mrb[0].mxu0 %v1343
      %v1382 = vpop.f32.mrb[0].mxu0
      %v1383 = vadd.f32 0.0, %v1382
      %v1384 = vpop.f32.mrb[0].mxu0
      %v1385 = vpop.f32.mrb[0].mxu0
      %v1386 = vpop.f32.mrb[0].mxu0
      %1387 = vdwg.mxu0
      %vm1388 = vcmask 130048
      %1389 = vst.msk [vmem:[#allocation4] sm:$0xff] %vm1388, %v1061
      %1390 = vst.msk [vmem:[#allocation4 + $0x8] sm:$0xff] %vm1388, %v1107
      %1391 = vst.msk [vmem:[#allocation4 + $0x10] sm:$0xff] %vm1388, %v1153
      %1392 = vst.msk [vmem:[#allocation4 + $0x18] sm:$0xff] %vm1388, %v1199
      %1393 = vst.msk [vmem:[#allocation4 + $0x20] sm:$0xff] %vm1388, %v1245
      %1394 = vst.msk [vmem:[#allocation4 + $0x28] sm:$0xff] %vm1388, %v1291
      %1395 = vst.msk [vmem:[#allocation4 + $0x30] sm:$0xff] %vm1388, %v1337
      %1396 = vst.msk [vmem:[#allocation4 + $0x38] sm:$0xff] %vm1388, %v1383
      %v1397 = vlaneseq
      %v1398 = vand.u32 %v1397, 127
      %v1399 = vld [vmem:[#allocation4] sm:$0xff]
      %v1400 = vld [vmem:[#allocation4 + $0x8] sm:$0xff]
      %v1401 = vld [vmem:[#allocation4 + $0x10] sm:$0xff]
      %v1402 = vld [vmem:[#allocation4 + $0x18] sm:$0xff]
      %v1403 = vld [vmem:[#allocation4 + $0x20] sm:$0xff]
      %v1404 = vld [vmem:[#allocation4 + $0x28] sm:$0xff]
      %v1405 = vld [vmem:[#allocation4 + $0x30] sm:$0xff]
      %v1406 = vld [vmem:[#allocation4 + $0x38] sm:$0xff]
      %v1407 = vsel %vm1388, %v1399, -inf
      %1408 = vmax.xlane.f32.xlu0 %v1407
      %v1409 = vpop.xlane.xlu0 %1408
      %v1410 = vsel %vm1388, %v1400, -inf
      %1411 = vmax.xlane.f32.xlu0 %v1410
      %v1412 = vpop.xlane.xlu0 %1411
      %v1413 = vsel %vm1388, %v1401, -inf
      %1414 = vmax.xlane.f32.xlu0 %v1413
      %v1415 = vpop.xlane.xlu0 %1414
      %v1416 = vsel %vm1388, %v1402, -inf
      %1417 = vmax.xlane.f32.xlu0 %v1416
      %v1418 = vpop.xlane.xlu0 %1417
      %v1419 = vsel %vm1388, %v1403, -inf
      %1420 = vmax.xlane.f32.xlu0 %v1419
      %v1421 = vpop.xlane.xlu0 %1420
      %v1422 = vsel %vm1388, %v1404, -inf
      %1423 = vmax.xlane.f32.xlu0 %v1422
      %v1424 = vpop.xlane.xlu0 %1423
      %v1425 = vsel %vm1388, %v1405, -inf
      %1426 = vmax.xlane.f32.xlu0 %v1425
      %v1427 = vpop.xlane.xlu0 %1426
      %v1428 = vsel %vm1388, %v1406, -inf
      %1429 = vmax.xlane.f32.xlu0 %v1428
      %v1430 = vpop.xlane.xlu0 %1429
      %v1431 = vadd.f32 %v1409, 0.0
      %v1432 = vadd.f32 %v1412, 0.0
      %v1433 = vadd.f32 %v1415, 0.0
      %v1434 = vadd.f32 %v1418, 0.0
      %v1435 = vadd.f32 %v1421, 0.0
      %v1436 = vadd.f32 %v1424, 0.0
      %v1437 = vadd.f32 %v1427, 0.0
      %v1438 = vadd.f32 %v1430, 0.0
      %vm1439 = vcmp.eq.f32.partialorder %v1399, %v1409
      %vm1440 = vcmp.eq.f32.partialorder %v1400, %v1412
      %vm1441 = vcmp.eq.f32.partialorder %v1401, %v1415
      %vm1442 = vcmp.eq.f32.partialorder %v1402, %v1418
      %vm1443 = vcmp.eq.f32.partialorder %v1403, %v1421
      %vm1444 = vcmp.eq.f32.partialorder %v1404, %v1424
      %vm1445 = vcmp.eq.f32.partialorder %v1405, %v1427
      %vm1446 = vcmp.eq.f32.partialorder %v1406, %v1430
      %v1447 = vsel %vm1439, %v1398, 16
      %v1448 = vsel %vm1440, %v1398, 16
      %v1449 = vsel %vm1441, %v1398, 16
      %v1450 = vsel %vm1442, %v1398, 16
      %v1451 = vsel %vm1443, %v1398, 16
      %v1452 = vsel %vm1444, %v1398, 16
      %v1453 = vsel %vm1445, %v1398, 16
      %v1454 = vsel %vm1446, %v1398, 16
      %v1455 = vsel %vm1388, %v1447, 2147483647
      %v1456 = vand.u32 %v1455, 65535
      %v1457 = vshra.s32 %v1455, 16
      %v1458 = vcvt.s32.f32 %v1456
      %v1459 = vcvt.s32.f32 %v1457
      %1460 = vmin.xlane.f32.xlu0 %v1459
      %v1461 = vpop.xlane.xlu0 %1460
      %vm1462 = vcmp.eq.f32.partialorder %v1459, %v1461
      %v1463 = vsel %vm1462, %v1458, inf
      %1464 = vmin.xlane.f32.xlu0 %v1463
      %v1465 = vpop.xlane.xlu0 %1464
      %v1466 = vcvt.f32.s32 %v1465
      %v1467 = vcvt.f32.s32 %v1461
      %v1468 = vshll.u32 %v1467, 16
      %v1469 = vadd.s32 %v1468, %v1466
      %v1470 = vsel %vm1388, %v1448, 2147483647
      %v1471 = vand.u32 %v1470, 65535
      %v1472 = vshra.s32 %v1470, 16
      %v1473 = vcvt.s32.f32 %v1471
      %v1474 = vcvt.s32.f32 %v1472
      %1475 = vmin.xlane.f32.xlu0 %v1474
      %v1476 = vpop.xlane.xlu0 %1475
      %vm1477 = vcmp.eq.f32.partialorder %v1474, %v1476
      %v1478 = vsel %vm1477, %v1473, inf
      %1479 = vmin.xlane.f32.xlu0 %v1478
      %v1480 = vpop.xlane.xlu0 %1479
      %v1481 = vcvt.f32.s32 %v1480
      %v1482 = vcvt.f32.s32 %v1476
      %v1483 = vshll.u32 %v1482, 16
      %v1484 = vadd.s32 %v1483, %v1481
      %v1485 = vsel %vm1388, %v1449, 2147483647
      %v1486 = vand.u32 %v1485, 65535
      %v1487 = vshra.s32 %v1485, 16
      %v1488 = vcvt.s32.f32 %v1486
      %v1489 = vcvt.s32.f32 %v1487
      %1490 = vmin.xlane.f32.xlu0 %v1489
      %v1491 = vpop.xlane.xlu0 %1490
      %vm1492 = vcmp.eq.f32.partialorder %v1489, %v1491
      %v1493 = vsel %vm1492, %v1488, inf
      %1494 = vmin.xlane.f32.xlu0 %v1493
      %v1495 = vpop.xlane.xlu0 %1494
      %v1496 = vcvt.f32.s32 %v1495
      %v1497 = vcvt.f32.s32 %v1491
      %v1498 = vshll.u32 %v1497, 16
      %v1499 = vadd.s32 %v1498, %v1496
      %v1500 = vsel %vm1388, %v1450, 2147483647
      %v1501 = vand.u32 %v1500, 65535
      %v1502 = vshra.s32 %v1500, 16
      %v1503 = vcvt.s32.f32 %v1501
      %v1504 = vcvt.s32.f32 %v1502
      %1505 = vmin.xlane.f32.xlu0 %v1504
      %v1506 = vpop.xlane.xlu0 %1505
      %vm1507 = vcmp.eq.f32.partialorder %v1504, %v1506
      %v1508 = vsel %vm1507, %v1503, inf
      %1509 = vmin.xlane.f32.xlu0 %v1508
      %v1510 = vpop.xlane.xlu0 %1509
      %v1511 = vcvt.f32.s32 %v1510
      %v1512 = vcvt.f32.s32 %v1506
      %v1513 = vshll.u32 %v1512, 16
      %v1514 = vadd.s32 %v1513, %v1511
      %v1515 = vsel %vm1388, %v1451, 2147483647
      %v1516 = vand.u32 %v1515, 65535
      %v1517 = vshra.s32 %v1515, 16
      %v1518 = vcvt.s32.f32 %v1516
      %v1519 = vcvt.s32.f32 %v1517
      %1520 = vmin.xlane.f32.xlu0 %v1519
      %v1521 = vpop.xlane.xlu0 %1520
      %vm1522 = vcmp.eq.f32.partialorder %v1519, %v1521
      %v1523 = vsel %vm1522, %v1518, inf
      %1524 = vmin.xlane.f32.xlu0 %v1523
      %v1525 = vpop.xlane.xlu0 %1524
      %v1526 = vcvt.f32.s32 %v1525
      %v1527 = vcvt.f32.s32 %v1521
      %v1528 = vshll.u32 %v1527, 16
      %v1529 = vadd.s32 %v1528, %v1526
      %v1530 = vsel %vm1388, %v1452, 2147483647
      %v1531 = vand.u32 %v1530, 65535
      %v1532 = vshra.s32 %v1530, 16
      %v1533 = vcvt.s32.f32 %v1531
      %v1534 = vcvt.s32.f32 %v1532
      %1535 = vmin.xlane.f32.xlu0 %v1534
      %v1536 = vpop.xlane.xlu0 %1535
      %vm1537 = vcmp.eq.f32.partialorder %v1534, %v1536
      %v1538 = vsel %vm1537, %v1533, inf
      %1539 = vmin.xlane.f32.xlu0 %v1538
      %v1540 = vpop.xlane.xlu0 %1539
      %v1541 = vcvt.f32.s32 %v1540
      %v1542 = vcvt.f32.s32 %v1536
      %v1543 = vshll.u32 %v1542, 16
      %v1544 = vadd.s32 %v1543, %v1541
      %v1545 = vsel %vm1388, %v1453, 2147483647
      %v1546 = vand.u32 %v1545, 65535
      %v1547 = vshra.s32 %v1545, 16
      %v1548 = vcvt.s32.f32 %v1546
      %v1549 = vcvt.s32.f32 %v1547
      %1550 = vmin.xlane.f32.xlu0 %v1549
      %v1551 = vpop.xlane.xlu0 %1550
      %vm1552 = vcmp.eq.f32.partialorder %v1549, %v1551
      %v1553 = vsel %vm1552, %v1548, inf
      %1554 = vmin.xlane.f32.xlu0 %v1553
      %v1555 = vpop.xlane.xlu0 %1554
      %v1556 = vcvt.f32.s32 %v1555
      %v1557 = vcvt.f32.s32 %v1551
      %v1558 = vshll.u32 %v1557, 16
      %v1559 = vadd.s32 %v1558, %v1556
      %v1560 = vsel %vm1388, %v1454, 2147483647
      %v1561 = vand.u32 %v1560, 65535
      %v1562 = vshra.s32 %v1560, 16
      %v1563 = vcvt.s32.f32 %v1561
      %v1564 = vcvt.s32.f32 %v1562
      %1565 = vmin.xlane.f32.xlu0 %v1564
      %v1566 = vpop.xlane.xlu0 %1565
      %vm1567 = vcmp.eq.f32.partialorder %v1564, %v1566
      %v1568 = vsel %vm1567, %v1563, inf
      %1569 = vmin.xlane.f32.xlu0 %v1568
      %v1570 = vpop.xlane.xlu0 %1569
      %v1571 = vcvt.f32.s32 %v1570
      %v1572 = vcvt.f32.s32 %v1566
      %v1573 = vshll.u32 %v1572, 16
      %v1574 = vadd.s32 %v1573, %v1571
      %vm1575 = vcmp.eq.s32.totalorder %v1398, %v1469
      %vm1576 = vcmp.eq.s32.totalorder %v1398, %v1484
      %vm1577 = vcmp.eq.s32.totalorder %v1398, %v1499
      %vm1578 = vcmp.eq.s32.totalorder %v1398, %v1514
      %vm1579 = vcmp.eq.s32.totalorder %v1398, %v1529
      %vm1580 = vcmp.eq.s32.totalorder %v1398, %v1544
      %vm1581 = vcmp.eq.s32.totalorder %v1398, %v1559
      %vm1582 = vcmp.eq.s32.totalorder %v1398, %v1574
      %v1583 = vsel %vm1575, -inf, %v1399
      %v1584 = vsel %vm1576, -inf, %v1400
      %v1585 = vsel %vm1577, -inf, %v1401
      %v1586 = vsel %vm1578, -inf, %v1402
      %v1587 = vsel %vm1579, -inf, %v1403
      %v1588 = vsel %vm1580, -inf, %v1404
      %v1589 = vsel %vm1581, -inf, %v1405
      %v1590 = vsel %vm1582, -inf, %v1406
      %1591 = vst.msk [vmem:[#allocation4] sm:$0xff] %vm1388, %v1583
      %1592 = vst.msk [vmem:[#allocation4 + $0x8] sm:$0xff] %vm1388, %v1584
      %1593 = vst.msk [vmem:[#allocation4 + $0x10] sm:$0xff] %vm1388, %v1585
      %1594 = vst.msk [vmem:[#allocation4 + $0x18] sm:$0xff] %vm1388, %v1586
      %1595 = vst.msk [vmem:[#allocation4 + $0x20] sm:$0xff] %vm1388, %v1587
      %1596 = vst.msk [vmem:[#allocation4 + $0x28] sm:$0xff] %vm1388, %v1588
      %1597 = vst.msk [vmem:[#allocation4 + $0x30] sm:$0xff] %vm1388, %v1589
      %1598 = vst.msk [vmem:[#allocation4 + $0x38] sm:$0xff] %vm1388, %v1590
      %v1599 = vld [vmem:[#allocation4] sm:$0xff]
      %v1600 = vld [vmem:[#allocation4 + $0x8] sm:$0xff]
      %v1601 = vld [vmem:[#allocation4 + $0x10] sm:$0xff]
      %v1602 = vld [vmem:[#allocation4 + $0x18] sm:$0xff]
      %v1603 = vld [vmem:[#allocation4 + $0x20] sm:$0xff]
      %v1604 = vld [vmem:[#allocation4 + $0x28] sm:$0xff]
      %v1605 = vld [vmem:[#allocation4 + $0x30] sm:$0xff]
      %v1606 = vld [vmem:[#allocation4 + $0x38] sm:$0xff]
      %v1607 = vsel %vm1388, %v1599, -inf
      %1608 = vmax.xlane.f32.xlu0 %v1607
      %v1609 = vpop.xlane.xlu0 %1608
      %v1610 = vsel %vm1388, %v1600, -inf
      %1611 = vmax.xlane.f32.xlu0 %v1610
      %v1612 = vpop.xlane.xlu0 %1611
      %v1613 = vsel %vm1388, %v1601, -inf
      %1614 = vmax.xlane.f32.xlu0 %v1613
      %v1615 = vpop.xlane.xlu0 %1614
      %v1616 = vsel %vm1388, %v1602, -inf
      %1617 = vmax.xlane.f32.xlu0 %v1616
      %v1618 = vpop.xlane.xlu0 %1617
      %v1619 = vsel %vm1388, %v1603, -inf
      %1620 = vmax.xlane.f32.xlu0 %v1619
      %v1621 = vpop.xlane.xlu0 %1620
      %v1622 = vsel %vm1388, %v1604, -inf
      %1623 = vmax.xlane.f32.xlu0 %v1622
      %v1624 = vpop.xlane.xlu0 %1623
      %v1625 = vsel %vm1388, %v1605, -inf
      %1626 = vmax.xlane.f32.xlu0 %v1625
      %v1627 = vpop.xlane.xlu0 %1626
      %v1628 = vsel %vm1388, %v1606, -inf
      %1629 = vmax.xlane.f32.xlu0 %v1628
      %v1630 = vpop.xlane.xlu0 %1629
      %v1631 = vadd.f32 %v1431, %v1609
      %v1632 = vadd.f32 %v1432, %v1612
      %v1633 = vadd.f32 %v1433, %v1615
      %v1634 = vadd.f32 %v1434, %v1618
      %v1635 = vadd.f32 %v1435, %v1621
      %v1636 = vadd.f32 %v1436, %v1624
      %v1637 = vadd.f32 %v1437, %v1627
      %v1638 = vadd.f32 %v1438, %v1630
      %vm1639 = vcmp.eq.f32.partialorder %v1599, %v1609
      %vm1640 = vcmp.eq.f32.partialorder %v1600, %v1612
      %vm1641 = vcmp.eq.f32.partialorder %v1601, %v1615
      %vm1642 = vcmp.eq.f32.partialorder %v1602, %v1618
      %vm1643 = vcmp.eq.f32.partialorder %v1603, %v1621
      %vm1644 = vcmp.eq.f32.partialorder %v1604, %v1624
      %vm1645 = vcmp.eq.f32.partialorder %v1605, %v1627
      %vm1646 = vcmp.eq.f32.partialorder %v1606, %v1630
      %v1647 = vsel %vm1639, %v1398, 16
      %v1648 = vsel %vm1640, %v1398, 16
      %v1649 = vsel %vm1641, %v1398, 16
      %v1650 = vsel %vm1642, %v1398, 16
      %v1651 = vsel %vm1643, %v1398, 16
      %v1652 = vsel %vm1644, %v1398, 16
      %v1653 = vsel %vm1645, %v1398, 16
      %v1654 = vsel %vm1646, %v1398, 16
      %v1655 = vsel %vm1388, %v1647, 2147483647
      %v1656 = vand.u32 %v1655, 65535
      %v1657 = vshra.s32 %v1655, 16
      %v1658 = vcvt.s32.f32 %v1656
      %v1659 = vcvt.s32.f32 %v1657
      %1660 = vmin.xlane.f32.xlu0 %v1659
      %v1661 = vpop.xlane.xlu0 %1660
      %vm1662 = vcmp.eq.f32.partialorder %v1659, %v1661
      %v1663 = vsel %vm1662, %v1658, inf
      %1664 = vmin.xlane.f32.xlu0 %v1663
      %v1665 = vpop.xlane.xlu0 %1664
      %v1666 = vcvt.f32.s32 %v1665
      %v1667 = vcvt.f32.s32 %v1661
      %v1668 = vshll.u32 %v1667, 16
      %v1669 = vadd.s32 %v1668, %v1666
      %v1670 = vsel %vm1388, %v1648, 2147483647
      %v1671 = vand.u32 %v1670, 65535
      %v1672 = vshra.s32 %v1670, 16
      %v1673 = vcvt.s32.f32 %v1671
      %v1674 = vcvt.s32.f32 %v1672
      %1675 = vmin.xlane.f32.xlu0 %v1674
      %v1676 = vpop.xlane.xlu0 %1675
      %vm1677 = vcmp.eq.f32.partialorder %v1674, %v1676
      %v1678 = vsel %vm1677, %v1673, inf
      %1679 = vmin.xlane.f32.xlu0 %v1678
      %v1680 = vpop.xlane.xlu0 %1679
      %v1681 = vcvt.f32.s32 %v1680
      %v1682 = vcvt.f32.s32 %v1676
      %v1683 = vshll.u32 %v1682, 16
      %v1684 = vadd.s32 %v1683, %v1681
      %v1685 = vsel %vm1388, %v1649, 2147483647
      %v1686 = vand.u32 %v1685, 65535
      %v1687 = vshra.s32 %v1685, 16
      %v1688 = vcvt.s32.f32 %v1686
      %v1689 = vcvt.s32.f32 %v1687
      %1690 = vmin.xlane.f32.xlu0 %v1689
      %v1691 = vpop.xlane.xlu0 %1690
      %vm1692 = vcmp.eq.f32.partialorder %v1689, %v1691
      %v1693 = vsel %vm1692, %v1688, inf
      %1694 = vmin.xlane.f32.xlu0 %v1693
      %v1695 = vpop.xlane.xlu0 %1694
      %v1696 = vcvt.f32.s32 %v1695
      %v1697 = vcvt.f32.s32 %v1691
      %v1698 = vshll.u32 %v1697, 16
      %v1699 = vadd.s32 %v1698, %v1696
      %v1700 = vsel %vm1388, %v1650, 2147483647
      %v1701 = vand.u32 %v1700, 65535
      %v1702 = vshra.s32 %v1700, 16
      %v1703 = vcvt.s32.f32 %v1701
      %v1704 = vcvt.s32.f32 %v1702
      %1705 = vmin.xlane.f32.xlu0 %v1704
      %v1706 = vpop.xlane.xlu0 %1705
      %vm1707 = vcmp.eq.f32.partialorder %v1704, %v1706
      %v1708 = vsel %vm1707, %v1703, inf
      %1709 = vmin.xlane.f32.xlu0 %v1708
      %v1710 = vpop.xlane.xlu0 %1709
      %v1711 = vcvt.f32.s32 %v1710
      %v1712 = vcvt.f32.s32 %v1706
      %v1713 = vshll.u32 %v1712, 16
      %v1714 = vadd.s32 %v1713, %v1711
      %v1715 = vsel %vm1388, %v1651, 2147483647
      %v1716 = vand.u32 %v1715, 65535
      %v1717 = vshra.s32 %v1715, 16
      %v1718 = vcvt.s32.f32 %v1716
      %v1719 = vcvt.s32.f32 %v1717
      %1720 = vmin.xlane.f32.xlu0 %v1719
      %v1721 = vpop.xlane.xlu0 %1720
      %vm1722 = vcmp.eq.f32.partialorder %v1719, %v1721
      %v1723 = vsel %vm1722, %v1718, inf
      %1724 = vmin.xlane.f32.xlu0 %v1723
      %v1725 = vpop.xlane.xlu0 %1724
      %v1726 = vcvt.f32.s32 %v1725
      %v1727 = vcvt.f32.s32 %v1721
      %v1728 = vshll.u32 %v1727, 16
      %v1729 = vadd.s32 %v1728, %v1726
      %v1730 = vsel %vm1388, %v1652, 2147483647
      %v1731 = vand.u32 %v1730, 65535
      %v1732 = vshra.s32 %v1730, 16
      %v1733 = vcvt.s32.f32 %v1731
      %v1734 = vcvt.s32.f32 %v1732
      %1735 = vmin.xlane.f32.xlu0 %v1734
      %v1736 = vpop.xlane.xlu0 %1735
      %vm1737 = vcmp.eq.f32.partialorder %v1734, %v1736
      %v1738 = vsel %vm1737, %v1733, inf
      %1739 = vmin.xlane.f32.xlu0 %v1738
      %v1740 = vpop.xlane.xlu0 %1739
      %v1741 = vcvt.f32.s32 %v1740
      %v1742 = vcvt.f32.s32 %v1736
      %v1743 = vshll.u32 %v1742, 16
      %v1744 = vadd.s32 %v1743, %v1741
      %v1745 = vsel %vm1388, %v1653, 2147483647
      %v1746 = vand.u32 %v1745, 65535
      %v1747 = vshra.s32 %v1745, 16
      %v1748 = vcvt.s32.f32 %v1746
      %v1749 = vcvt.s32.f32 %v1747
      %1750 = vmin.xlane.f32.xlu0 %v1749
      %v1751 = vpop.xlane.xlu0 %1750
      %vm1752 = vcmp.eq.f32.partialorder %v1749, %v1751
      %v1753 = vsel %vm1752, %v1748, inf
      %1754 = vmin.xlane.f32.xlu0 %v1753
      %v1755 = vpop.xlane.xlu0 %1754
      %v1756 = vcvt.f32.s32 %v1755
      %v1757 = vcvt.f32.s32 %v1751
      %v1758 = vshll.u32 %v1757, 16
      %v1759 = vadd.s32 %v1758, %v1756
      %v1760 = vsel %vm1388, %v1654, 2147483647
      %v1761 = vand.u32 %v1760, 65535
      %v1762 = vshra.s32 %v1760, 16
      %v1763 = vcvt.s32.f32 %v1761
      %v1764 = vcvt.s32.f32 %v1762
      %1765 = vmin.xlane.f32.xlu0 %v1764
      %v1766 = vpop.xlane.xlu0 %1765
      %vm1767 = vcmp.eq.f32.partialorder %v1764, %v1766
      %v1768 = vsel %vm1767, %v1763, inf
      %1769 = vmin.xlane.f32.xlu0 %v1768
      %v1770 = vpop.xlane.xlu0 %1769
      %v1771 = vcvt.f32.s32 %v1770
      %v1772 = vcvt.f32.s32 %v1766
      %v1773 = vshll.u32 %v1772, 16
      %v1774 = vadd.s32 %v1773, %v1771
      %vm1775 = vcmp.eq.s32.totalorder %v1398, %v1669
      %vm1776 = vcmp.eq.s32.totalorder %v1398, %v1684
      %vm1777 = vcmp.eq.s32.totalorder %v1398, %v1699
      %vm1778 = vcmp.eq.s32.totalorder %v1398, %v1714
      %vm1779 = vcmp.eq.s32.totalorder %v1398, %v1729
      %vm1780 = vcmp.eq.s32.totalorder %v1398, %v1744
      %vm1781 = vcmp.eq.s32.totalorder %v1398, %v1759
      %vm1782 = vcmp.eq.s32.totalorder %v1398, %v1774
      %v1783 = vsel %vm1775, -inf, %v1599
      %v1784 = vsel %vm1776, -inf, %v1600
      %v1785 = vsel %vm1777, -inf, %v1601
      %v1786 = vsel %vm1778, -inf, %v1602
      %v1787 = vsel %vm1779, -inf, %v1603
      %v1788 = vsel %vm1780, -inf, %v1604
      %v1789 = vsel %vm1781, -inf, %v1605
      %v1790 = vsel %vm1782, -inf, %v1606
      %1791 = vst.msk [vmem:[#allocation4] sm:$0xff] %vm1388, %v1783
      %1792 = vst.msk [vmem:[#allocation4 + $0x8] sm:$0xff] %vm1388, %v1784
      %1793 = vst.msk [vmem:[#allocation4 + $0x10] sm:$0xff] %vm1388, %v1785
      %1794 = vst.msk [vmem:[#allocation4 + $0x18] sm:$0xff] %vm1388, %v1786
      %1795 = vst.msk [vmem:[#allocation4 + $0x20] sm:$0xff] %vm1388, %v1787
      %1796 = vst.msk [vmem:[#allocation4 + $0x28] sm:$0xff] %vm1388, %v1788
      %1797 = vst.msk [vmem:[#allocation4 + $0x30] sm:$0xff] %vm1388, %v1789
      %1798 = vst.msk [vmem:[#allocation4 + $0x38] sm:$0xff] %vm1388, %v1790
      %v1799 = vld [vmem:[#allocation4] sm:$0xff]
      %v1800 = vld [vmem:[#allocation4 + $0x8] sm:$0xff]
      %v1801 = vld [vmem:[#allocation4 + $0x10] sm:$0xff]
      %v1802 = vld [vmem:[#allocation4 + $0x18] sm:$0xff]
      %v1803 = vld [vmem:[#allocation4 + $0x20] sm:$0xff]
      %v1804 = vld [vmem:[#allocation4 + $0x28] sm:$0xff]
      %v1805 = vld [vmem:[#allocation4 + $0x30] sm:$0xff]
      %v1806 = vld [vmem:[#allocation4 + $0x38] sm:$0xff]
      %v1807 = vsel %vm1388, %v1799, -inf
      %1808 = vmax.xlane.f32.xlu0 %v1807
      %v1809 = vpop.xlane.xlu0 %1808
      %v1810 = vsel %vm1388, %v1800, -inf
      %1811 = vmax.xlane.f32.xlu0 %v1810
      %v1812 = vpop.xlane.xlu0 %1811
      %v1813 = vsel %vm1388, %v1801, -inf
      %1814 = vmax.xlane.f32.xlu0 %v1813
      %v1815 = vpop.xlane.xlu0 %1814
      %v1816 = vsel %vm1388, %v1802, -inf
      %1817 = vmax.xlane.f32.xlu0 %v1816
      %v1818 = vpop.xlane.xlu0 %1817
      %v1819 = vsel %vm1388, %v1803, -inf
      %1820 = vmax.xlane.f32.xlu0 %v1819
      %v1821 = vpop.xlane.xlu0 %1820
      %v1822 = vsel %vm1388, %v1804, -inf
      %1823 = vmax.xlane.f32.xlu0 %v1822
      %v1824 = vpop.xlane.xlu0 %1823
      %v1825 = vsel %vm1388, %v1805, -inf
      %1826 = vmax.xlane.f32.xlu0 %v1825
      %v1827 = vpop.xlane.xlu0 %1826
      %v1828 = vsel %vm1388, %v1806, -inf
      %1829 = vmax.xlane.f32.xlu0 %v1828
      %v1830 = vpop.xlane.xlu0 %1829
      %v1831 = vadd.f32 %v1631, %v1809
      %v1832 = vadd.f32 %v1632, %v1812
      %v1833 = vadd.f32 %v1633, %v1815
      %v1834 = vadd.f32 %v1634, %v1818
      %v1835 = vadd.f32 %v1635, %v1821
      %v1836 = vadd.f32 %v1636, %v1824
      %v1837 = vadd.f32 %v1637, %v1827
      %v1838 = vadd.f32 %v1638, %v1830
      %vm1839 = vcmp.eq.f32.partialorder %v1799, %v1809
      %vm1840 = vcmp.eq.f32.partialorder %v1800, %v1812
      %vm1841 = vcmp.eq.f32.partialorder %v1801, %v1815
      %vm1842 = vcmp.eq.f32.partialorder %v1802, %v1818
      %vm1843 = vcmp.eq.f32.partialorder %v1803, %v1821
      %vm1844 = vcmp.eq.f32.partialorder %v1804, %v1824
      %vm1845 = vcmp.eq.f32.partialorder %v1805, %v1827
      %vm1846 = vcmp.eq.f32.partialorder %v1806, %v1830
      %v1847 = vsel %vm1839, %v1398, 16
      %v1848 = vsel %vm1840, %v1398, 16
      %v1849 = vsel %vm1841, %v1398, 16
      %v1850 = vsel %vm1842, %v1398, 16
      %v1851 = vsel %vm1843, %v1398, 16
      %v1852 = vsel %vm1844, %v1398, 16
      %v1853 = vsel %vm1845, %v1398, 16
      %v1854 = vsel %vm1846, %v1398, 16
      %v1855 = vsel %vm1388, %v1847, 2147483647
      %v1856 = vand.u32 %v1855, 65535
      %v1857 = vshra.s32 %v1855, 16
      %v1858 = vcvt.s32.f32 %v1856
      %v1859 = vcvt.s32.f32 %v1857
      %1860 = vmin.xlane.f32.xlu0 %v1859
      %v1861 = vpop.xlane.xlu0 %1860
      %vm1862 = vcmp.eq.f32.partialorder %v1859, %v1861
      %v1863 = vsel %vm1862, %v1858, inf
      %1864 = vmin.xlane.f32.xlu0 %v1863
      %v1865 = vpop.xlane.xlu0 %1864
      %v1866 = vcvt.f32.s32 %v1865
      %v1867 = vcvt.f32.s32 %v1861
      %v1868 = vshll.u32 %v1867, 16
      %v1869 = vadd.s32 %v1868, %v1866
      %v1870 = vsel %vm1388, %v1848, 2147483647
      %v1871 = vand.u32 %v1870, 65535
      %v1872 = vshra.s32 %v1870, 16
      %v1873 = vcvt.s32.f32 %v1871
      %v1874 = vcvt.s32.f32 %v1872
      %1875 = vmin.xlane.f32.xlu0 %v1874
      %v1876 = vpop.xlane.xlu0 %1875
      %vm1877 = vcmp.eq.f32.partialorder %v1874, %v1876
      %v1878 = vsel %vm1877, %v1873, inf
      %1879 = vmin.xlane.f32.xlu0 %v1878
      %v1880 = vpop.xlane.xlu0 %1879
      %v1881 = vcvt.f32.s32 %v1880
      %v1882 = vcvt.f32.s32 %v1876
      %v1883 = vshll.u32 %v1882, 16
      %v1884 = vadd.s32 %v1883, %v1881
      %v1885 = vsel %vm1388, %v1849, 2147483647
      %v1886 = vand.u32 %v1885, 65535
      %v1887 = vshra.s32 %v1885, 16
      %v1888 = vcvt.s32.f32 %v1886
      %v1889 = vcvt.s32.f32 %v1887
      %1890 = vmin.xlane.f32.xlu0 %v1889
      %v1891 = vpop.xlane.xlu0 %1890
      %vm1892 = vcmp.eq.f32.partialorder %v1889, %v1891
      %v1893 = vsel %vm1892, %v1888, inf
      %1894 = vmin.xlane.f32.xlu0 %v1893
      %v1895 = vpop.xlane.xlu0 %1894
      %v1896 = vcvt.f32.s32 %v1895
      %v1897 = vcvt.f32.s32 %v1891
      %v1898 = vshll.u32 %v1897, 16
      %v1899 = vadd.s32 %v1898, %v1896
      %v1900 = vsel %vm1388, %v1850, 2147483647
      %v1901 = vand.u32 %v1900, 65535
      %v1902 = vshra.s32 %v1900, 16
      %v1903 = vcvt.s32.f32 %v1901
      %v1904 = vcvt.s32.f32 %v1902
      %1905 = vmin.xlane.f32.xlu0 %v1904
      %v1906 = vpop.xlane.xlu0 %1905
      %vm1907 = vcmp.eq.f32.partialorder %v1904, %v1906
      %v1908 = vsel %vm1907, %v1903, inf
      %1909 = vmin.xlane.f32.xlu0 %v1908
      %v1910 = vpop.xlane.xlu0 %1909
      %v1911 = vcvt.f32.s32 %v1910
      %v1912 = vcvt.f32.s32 %v1906
      %v1913 = vshll.u32 %v1912, 16
      %v1914 = vadd.s32 %v1913, %v1911
      %v1915 = vsel %vm1388, %v1851, 2147483647
      %v1916 = vand.u32 %v1915, 65535
      %v1917 = vshra.s32 %v1915, 16
      %v1918 = vcvt.s32.f32 %v1916
      %v1919 = vcvt.s32.f32 %v1917
      %1920 = vmin.xlane.f32.xlu0 %v1919
      %v1921 = vpop.xlane.xlu0 %1920
      %vm1922 = vcmp.eq.f32.partialorder %v1919, %v1921
      %v1923 = vsel %vm1922, %v1918, inf
      %1924 = vmin.xlane.f32.xlu0 %v1923
      %v1925 = vpop.xlane.xlu0 %1924
      %v1926 = vcvt.f32.s32 %v1925
      %v1927 = vcvt.f32.s32 %v1921
      %v1928 = vshll.u32 %v1927, 16
      %v1929 = vadd.s32 %v1928, %v1926
      %v1930 = vsel %vm1388, %v1852, 2147483647
      %v1931 = vand.u32 %v1930, 65535
      %v1932 = vshra.s32 %v1930, 16
      %v1933 = vcvt.s32.f32 %v1931
      %v1934 = vcvt.s32.f32 %v1932
      %1935 = vmin.xlane.f32.xlu0 %v1934
      %v1936 = vpop.xlane.xlu0 %1935
      %vm1937 = vcmp.eq.f32.partialorder %v1934, %v1936
      %v1938 = vsel %vm1937, %v1933, inf
      %1939 = vmin.xlane.f32.xlu0 %v1938
      %v1940 = vpop.xlane.xlu0 %1939
      %v1941 = vcvt.f32.s32 %v1940
      %v1942 = vcvt.f32.s32 %v1936
      %v1943 = vshll.u32 %v1942, 16
      %v1944 = vadd.s32 %v1943, %v1941
      %v1945 = vsel %vm1388, %v1853, 2147483647
      %v1946 = vand.u32 %v1945, 65535
      %v1947 = vshra.s32 %v1945, 16
      %v1948 = vcvt.s32.f32 %v1946
      %v1949 = vcvt.s32.f32 %v1947
      %1950 = vmin.xlane.f32.xlu0 %v1949
      %v1951 = vpop.xlane.xlu0 %1950
      %vm1952 = vcmp.eq.f32.partialorder %v1949, %v1951
      %v1953 = vsel %vm1952, %v1948, inf
      %1954 = vmin.xlane.f32.xlu0 %v1953
      %v1955 = vpop.xlane.xlu0 %1954
      %v1956 = vcvt.f32.s32 %v1955
      %v1957 = vcvt.f32.s32 %v1951
      %v1958 = vshll.u32 %v1957, 16
      %v1959 = vadd.s32 %v1958, %v1956
      %v1960 = vsel %vm1388, %v1854, 2147483647
      %v1961 = vand.u32 %v1960, 65535
      %v1962 = vshra.s32 %v1960, 16
      %v1963 = vcvt.s32.f32 %v1961
      %v1964 = vcvt.s32.f32 %v1962
      %1965 = vmin.xlane.f32.xlu0 %v1964
      %v1966 = vpop.xlane.xlu0 %1965
      %vm1967 = vcmp.eq.f32.partialorder %v1964, %v1966
      %v1968 = vsel %vm1967, %v1963, inf
      %1969 = vmin.xlane.f32.xlu0 %v1968
      %v1970 = vpop.xlane.xlu0 %1969
      %v1971 = vcvt.f32.s32 %v1970
      %v1972 = vcvt.f32.s32 %v1966
      %v1973 = vshll.u32 %v1972, 16
      %v1974 = vadd.s32 %v1973, %v1971
      %vm1975 = vcmp.eq.s32.totalorder %v1398, %v1869
      %vm1976 = vcmp.eq.s32.totalorder %v1398, %v1884
      %vm1977 = vcmp.eq.s32.totalorder %v1398, %v1899
      %vm1978 = vcmp.eq.s32.totalorder %v1398, %v1914
      %vm1979 = vcmp.eq.s32.totalorder %v1398, %v1929
      %vm1980 = vcmp.eq.s32.totalorder %v1398, %v1944
      %vm1981 = vcmp.eq.s32.totalorder %v1398, %v1959
      %vm1982 = vcmp.eq.s32.totalorder %v1398, %v1974
      %v1983 = vsel %vm1975, -inf, %v1799
      %v1984 = vsel %vm1976, -inf, %v1800
      %v1985 = vsel %vm1977, -inf, %v1801
      %v1986 = vsel %vm1978, -inf, %v1802
      %v1987 = vsel %vm1979, -inf, %v1803
      %v1988 = vsel %vm1980, -inf, %v1804
      %v1989 = vsel %vm1981, -inf, %v1805
      %v1990 = vsel %vm1982, -inf, %v1806
      %1991 = vst.msk [vmem:[#allocation4] sm:$0xff] %vm1388, %v1983
      %1992 = vst.msk [vmem:[#allocation4 + $0x8] sm:$0xff] %vm1388, %v1984
      %1993 = vst.msk [vmem:[#allocation4 + $0x10] sm:$0xff] %vm1388, %v1985
      %1994 = vst.msk [vmem:[#allocation4 + $0x18] sm:$0xff] %vm1388, %v1986
      %1995 = vst.msk [vmem:[#allocation4 + $0x20] sm:$0xff] %vm1388, %v1987
      %1996 = vst.msk [vmem:[#allocation4 + $0x28] sm:$0xff] %vm1388, %v1988
      %1997 = vst.msk [vmem:[#allocation4 + $0x30] sm:$0xff] %vm1388, %v1989
      %1998 = vst.msk [vmem:[#allocation4 + $0x38] sm:$0xff] %vm1388, %v1990
      %v1999 = vld [vmem:[#allocation4] sm:$0xff]
      %v2000 = vld [vmem:[#allocation4 + $0x8] sm:$0xff]
      %v2001 = vld [vmem:[#allocation4 + $0x10] sm:$0xff]
      %v2002 = vld [vmem:[#allocation4 + $0x18] sm:$0xff]
      %v2003 = vld [vmem:[#allocation4 + $0x20] sm:$0xff]
      %v2004 = vld [vmem:[#allocation4 + $0x28] sm:$0xff]
      %v2005 = vld [vmem:[#allocation4 + $0x30] sm:$0xff]
      %v2006 = vld [vmem:[#allocation4 + $0x38] sm:$0xff]
      %v2007 = vsel %vm1388, %v1999, -inf
      %2008 = vmax.xlane.f32.xlu0 %v2007
      %v2009 = vpop.xlane.xlu0 %2008
      %v2010 = vsel %vm1388, %v2000, -inf
      %2011 = vmax.xlane.f32.xlu0 %v2010
      %v2012 = vpop.xlane.xlu0 %2011
      %v2013 = vsel %vm1388, %v2001, -inf
      %2014 = vmax.xlane.f32.xlu0 %v2013
      %v2015 = vpop.xlane.xlu0 %2014
      %v2016 = vsel %vm1388, %v2002, -inf
      %2017 = vmax.xlane.f32.xlu0 %v2016
      %v2018 = vpop.xlane.xlu0 %2017
      %v2019 = vsel %vm1388, %v2003, -inf
      %2020 = vmax.xlane.f32.xlu0 %v2019
      %v2021 = vpop.xlane.xlu0 %2020
      %v2022 = vsel %vm1388, %v2004, -inf
      %2023 = vmax.xlane.f32.xlu0 %v2022
      %v2024 = vpop.xlane.xlu0 %2023
      %v2025 = vsel %vm1388, %v2005, -inf
      %2026 = vmax.xlane.f32.xlu0 %v2025
      %v2027 = vpop.xlane.xlu0 %2026
      %v2028 = vsel %vm1388, %v2006, -inf
      %2029 = vmax.xlane.f32.xlu0 %v2028
      %v2030 = vpop.xlane.xlu0 %2029
      %v2031 = vadd.f32 %v1831, %v2009
      %v2032 = vadd.f32 %v1832, %v2012
      %v2033 = vadd.f32 %v1833, %v2015
      %v2034 = vadd.f32 %v1834, %v2018
      %v2035 = vadd.f32 %v1835, %v2021
      %v2036 = vadd.f32 %v1836, %v2024
      %v2037 = vadd.f32 %v1837, %v2027
      %v2038 = vadd.f32 %v1838, %v2030
      %vm2039 = vcmp.eq.f32.partialorder %v1999, %v2009
      %vm2040 = vcmp.eq.f32.partialorder %v2000, %v2012
      %vm2041 = vcmp.eq.f32.partialorder %v2001, %v2015
      %vm2042 = vcmp.eq.f32.partialorder %v2002, %v2018
      %vm2043 = vcmp.eq.f32.partialorder %v2003, %v2021
      %vm2044 = vcmp.eq.f32.partialorder %v2004, %v2024
      %vm2045 = vcmp.eq.f32.partialorder %v2005, %v2027
      %vm2046 = vcmp.eq.f32.partialorder %v2006, %v2030
      %v2047 = vsel %vm2039, %v1398, 16
      %v2048 = vsel %vm2040, %v1398, 16
      %v2049 = vsel %vm2041, %v1398, 16
      %v2050 = vsel %vm2042, %v1398, 16
      %v2051 = vsel %vm2043, %v1398, 16
      %v2052 = vsel %vm2044, %v1398, 16
      %v2053 = vsel %vm2045, %v1398, 16
      %v2054 = vsel %vm2046, %v1398, 16
      %v2055 = vsel %vm1388, %v2047, 2147483647
      %v2056 = vand.u32 %v2055, 65535
      %v2057 = vshra.s32 %v2055, 16
      %v2058 = vcvt.s32.f32 %v2056
      %v2059 = vcvt.s32.f32 %v2057
      %2060 = vmin.xlane.f32.xlu0 %v2059
      %v2061 = vpop.xlane.xlu0 %2060
      %vm2062 = vcmp.eq.f32.partialorder %v2059, %v2061
      %v2063 = vsel %vm2062, %v2058, inf
      %2064 = vmin.xlane.f32.xlu0 %v2063
      %v2065 = vpop.xlane.xlu0 %2064
      %v2066 = vcvt.f32.s32 %v2065
      %v2067 = vcvt.f32.s32 %v2061
      %v2068 = vshll.u32 %v2067, 16
      %v2069 = vadd.s32 %v2068, %v2066
      %v2070 = vsel %vm1388, %v2048, 2147483647
      %v2071 = vand.u32 %v2070, 65535
      %v2072 = vshra.s32 %v2070, 16
      %v2073 = vcvt.s32.f32 %v2071
      %v2074 = vcvt.s32.f32 %v2072
      %2075 = vmin.xlane.f32.xlu0 %v2074
      %v2076 = vpop.xlane.xlu0 %2075
      %vm2077 = vcmp.eq.f32.partialorder %v2074, %v2076
      %v2078 = vsel %vm2077, %v2073, inf
      %2079 = vmin.xlane.f32.xlu0 %v2078
      %v2080 = vpop.xlane.xlu0 %2079
      %v2081 = vcvt.f32.s32 %v2080
      %v2082 = vcvt.f32.s32 %v2076
      %v2083 = vshll.u32 %v2082, 16
      %v2084 = vadd.s32 %v2083, %v2081
      %v2085 = vsel %vm1388, %v2049, 2147483647
      %v2086 = vand.u32 %v2085, 65535
      %v2087 = vshra.s32 %v2085, 16
      %v2088 = vcvt.s32.f32 %v2086
      %v2089 = vcvt.s32.f32 %v2087
      %2090 = vmin.xlane.f32.xlu0 %v2089
      %v2091 = vpop.xlane.xlu0 %2090
      %vm2092 = vcmp.eq.f32.partialorder %v2089, %v2091
      %v2093 = vsel %vm2092, %v2088, inf
      %2094 = vmin.xlane.f32.xlu0 %v2093
      %v2095 = vpop.xlane.xlu0 %2094
      %v2096 = vcvt.f32.s32 %v2095
      %v2097 = vcvt.f32.s32 %v2091
      %v2098 = vshll.u32 %v2097, 16
      %v2099 = vadd.s32 %v2098, %v2096
      %v2100 = vsel %vm1388, %v2050, 2147483647
      %v2101 = vand.u32 %v2100, 65535
      %v2102 = vshra.s32 %v2100, 16
      %v2103 = vcvt.s32.f32 %v2101
      %v2104 = vcvt.s32.f32 %v2102
      %2105 = vmin.xlane.f32.xlu0 %v2104
      %v2106 = vpop.xlane.xlu0 %2105
      %vm2107 = vcmp.eq.f32.partialorder %v2104, %v2106
      %v2108 = vsel %vm2107, %v2103, inf
      %2109 = vmin.xlane.f32.xlu0 %v2108
      %v2110 = vpop.xlane.xlu0 %2109
      %v2111 = vcvt.f32.s32 %v2110
      %v2112 = vcvt.f32.s32 %v2106
      %v2113 = vshll.u32 %v2112, 16
      %v2114 = vadd.s32 %v2113, %v2111
      %v2115 = vsel %vm1388, %v2051, 2147483647
      %v2116 = vand.u32 %v2115, 65535
      %v2117 = vshra.s32 %v2115, 16
      %v2118 = vcvt.s32.f32 %v2116
      %v2119 = vcvt.s32.f32 %v2117
      %2120 = vmin.xlane.f32.xlu0 %v2119
      %v2121 = vpop.xlane.xlu0 %2120
      %vm2122 = vcmp.eq.f32.partialorder %v2119, %v2121
      %v2123 = vsel %vm2122, %v2118, inf
      %2124 = vmin.xlane.f32.xlu0 %v2123
      %v2125 = vpop.xlane.xlu0 %2124
      %v2126 = vcvt.f32.s32 %v2125
      %v2127 = vcvt.f32.s32 %v2121
      %v2128 = vshll.u32 %v2127, 16
      %v2129 = vadd.s32 %v2128, %v2126
      %v2130 = vsel %vm1388, %v2052, 2147483647
      %v2131 = vand.u32 %v2130, 65535
      %v2132 = vshra.s32 %v2130, 16
      %v2133 = vcvt.s32.f32 %v2131
      %v2134 = vcvt.s32.f32 %v2132
      %2135 = vmin.xlane.f32.xlu0 %v2134
      %v2136 = vpop.xlane.xlu0 %2135
      %vm2137 = vcmp.eq.f32.partialorder %v2134, %v2136
      %v2138 = vsel %vm2137, %v2133, inf
      %2139 = vmin.xlane.f32.xlu0 %v2138
      %v2140 = vpop.xlane.xlu0 %2139
      %v2141 = vcvt.f32.s32 %v2140
      %v2142 = vcvt.f32.s32 %v2136
      %v2143 = vshll.u32 %v2142, 16
      %v2144 = vadd.s32 %v2143, %v2141
      %v2145 = vsel %vm1388, %v2053, 2147483647
      %v2146 = vand.u32 %v2145, 65535
      %v2147 = vshra.s32 %v2145, 16
      %v2148 = vcvt.s32.f32 %v2146
      %v2149 = vcvt.s32.f32 %v2147
      %2150 = vmin.xlane.f32.xlu0 %v2149
      %v2151 = vpop.xlane.xlu0 %2150
      %vm2152 = vcmp.eq.f32.partialorder %v2149, %v2151
      %v2153 = vsel %vm2152, %v2148, inf
      %2154 = vmin.xlane.f32.xlu0 %v2153
      %v2155 = vpop.xlane.xlu0 %2154
      %v2156 = vcvt.f32.s32 %v2155
      %v2157 = vcvt.f32.s32 %v2151
      %v2158 = vshll.u32 %v2157, 16
      %v2159 = vadd.s32 %v2158, %v2156
      %v2160 = vsel %vm1388, %v2054, 2147483647
      %v2161 = vand.u32 %v2160, 65535
      %v2162 = vshra.s32 %v2160, 16
      %v2163 = vcvt.s32.f32 %v2161
      %v2164 = vcvt.s32.f32 %v2162
      %2165 = vmin.xlane.f32.xlu0 %v2164
      %v2166 = vpop.xlane.xlu0 %2165
      %vm2167 = vcmp.eq.f32.partialorder %v2164, %v2166
      %v2168 = vsel %vm2167, %v2163, inf
      %2169 = vmin.xlane.f32.xlu0 %v2168
      %v2170 = vpop.xlane.xlu0 %2169
      %v2171 = vcvt.f32.s32 %v2170
      %v2172 = vcvt.f32.s32 %v2166
      %v2173 = vshll.u32 %v2172, 16
      %v2174 = vadd.s32 %v2173, %v2171
      %vm2175 = vcmp.eq.s32.totalorder %v1398, %v2069
      %vm2176 = vcmp.eq.s32.totalorder %v1398, %v2084
      %vm2177 = vcmp.eq.s32.totalorder %v1398, %v2099
      %vm2178 = vcmp.eq.s32.totalorder %v1398, %v2114
      %vm2179 = vcmp.eq.s32.totalorder %v1398, %v2129
      %vm2180 = vcmp.eq.s32.totalorder %v1398, %v2144
      %vm2181 = vcmp.eq.s32.totalorder %v1398, %v2159
      %vm2182 = vcmp.eq.s32.totalorder %v1398, %v2174
      %v2183 = vsel %vm2175, -inf, %v1999
      %v2184 = vsel %vm2176, -inf, %v2000
      %v2185 = vsel %vm2177, -inf, %v2001
      %v2186 = vsel %vm2178, -inf, %v2002
      %v2187 = vsel %vm2179, -inf, %v2003
      %v2188 = vsel %vm2180, -inf, %v2004
      %v2189 = vsel %vm2181, -inf, %v2005
      %v2190 = vsel %vm2182, -inf, %v2006
      %2191 = vst.msk [vmem:[#allocation4] sm:$0xff] %vm1388, %v2183
      %2192 = vst.msk [vmem:[#allocation4 + $0x8] sm:$0xff] %vm1388, %v2184
      %2193 = vst.msk [vmem:[#allocation4 + $0x10] sm:$0xff] %vm1388, %v2185
      %2194 = vst.msk [vmem:[#allocation4 + $0x18] sm:$0xff] %vm1388, %v2186
      %2195 = vst.msk [vmem:[#allocation4 + $0x20] sm:$0xff] %vm1388, %v2187
      %2196 = vst.msk [vmem:[#allocation4 + $0x28] sm:$0xff] %vm1388, %v2188
      %2197 = vst.msk [vmem:[#allocation4 + $0x30] sm:$0xff] %vm1388, %v2189
      %2198 = vst.msk [vmem:[#allocation4 + $0x38] sm:$0xff] %vm1388, %v2190
      %v2199 = vld [vmem:[#allocation4] sm:$0xff]
      %v2200 = vld [vmem:[#allocation4 + $0x8] sm:$0xff]
      %v2201 = vld [vmem:[#allocation4 + $0x10] sm:$0xff]
      %v2202 = vld [vmem:[#allocation4 + $0x18] sm:$0xff]
      %v2203 = vld [vmem:[#allocation4 + $0x20] sm:$0xff]
      %v2204 = vld [vmem:[#allocation4 + $0x28] sm:$0xff]
      %v2205 = vld [vmem:[#allocation4 + $0x30] sm:$0xff]
      %v2206 = vld [vmem:[#allocation4 + $0x38] sm:$0xff]
      %v2207 = vsel %vm1388, %v2199, -inf
      %2208 = vmax.xlane.f32.xlu0 %v2207
      %v2209 = vpop.xlane.xlu0 %2208
      %v2210 = vsel %vm1388, %v2200, -inf
      %2211 = vmax.xlane.f32.xlu0 %v2210
      %v2212 = vpop.xlane.xlu0 %2211
      %v2213 = vsel %vm1388, %v2201, -inf
      %2214 = vmax.xlane.f32.xlu0 %v2213
      %v2215 = vpop.xlane.xlu0 %2214
      %v2216 = vsel %vm1388, %v2202, -inf
      %2217 = vmax.xlane.f32.xlu0 %v2216
      %v2218 = vpop.xlane.xlu0 %2217
      %v2219 = vsel %vm1388, %v2203, -inf
      %2220 = vmax.xlane.f32.xlu0 %v2219
      %v2221 = vpop.xlane.xlu0 %2220
      %v2222 = vsel %vm1388, %v2204, -inf
      %2223 = vmax.xlane.f32.xlu0 %v2222
      %v2224 = vpop.xlane.xlu0 %2223
      %v2225 = vsel %vm1388, %v2205, -inf
      %2226 = vmax.xlane.f32.xlu0 %v2225
      %v2227 = vpop.xlane.xlu0 %2226
      %v2228 = vsel %vm1388, %v2206, -inf
      %2229 = vmax.xlane.f32.xlu0 %v2228
      %v2230 = vpop.xlane.xlu0 %2229
      %v2231 = vadd.f32 %v2031, %v2209
      %v2232 = vadd.f32 %v2032, %v2212
      %v2233 = vadd.f32 %v2033, %v2215
      %v2234 = vadd.f32 %v2034, %v2218
      %v2235 = vadd.f32 %v2035, %v2221
      %v2236 = vadd.f32 %v2036, %v2224
      %v2237 = vadd.f32 %v2037, %v2227
      %v2238 = vadd.f32 %v2038, %v2230
      %v2239 = vmul.f32 %v2231, 0.2
      %v2240 = vmul.f32 %v2232, 0.2
      %v2241 = vmul.f32 %v2233, 0.2
      %v2242 = vmul.f32 %v2234, 0.2
      %v2243 = vmul.f32 %v2235, 0.2
      %v2244 = vmul.f32 %v2236, 0.2
      %v2245 = vmul.f32 %v2237, 0.2
      %v2246 = vmul.f32 %v2238, 0.2
      %v2247 = vld [vmem:[%s336] sm:$0xff]
      %v2248 = vld [vmem:[%s336 + $0x8] sm:$0xff]
      %v2249 = vld [vmem:[%s336 + $0x10] sm:$0xff]
      %v2250 = vld [vmem:[%s336 + $0x18] sm:$0xff]
      %v2251 = vld [vmem:[%s336 + $0x20] sm:$0xff]
      %v2252 = vld [vmem:[%s336 + $0x28] sm:$0xff]
      %v2253 = vld [vmem:[%s336 + $0x30] sm:$0xff]
      %v2254 = vld [vmem:[%s336 + $0x38] sm:$0xff]
      %2255 = vxpose.xlu0.b32.start [1/16] %v2247, 128
      %2256 = vxpose.xlu0.b32.cont [2/16] %v2248, 128
      %2257 = vxpose.xlu0.b32.cont [3/16] 0.0, 128
      %2258 = vxpose.xlu0.b32.cont [4/16] 0.0, 128
      %2259 = vxpose.xlu0.b32.cont [5/16] 0.0, 128
      %2260 = vxpose.xlu0.b32.cont [6/16] 0.0, 128
      %2261 = vxpose.xlu0.b32.cont [7/16] 0.0, 128
      %2262 = vxpose.xlu0.b32.cont [8/16] 0.0, 128
      %2263 = vxpose.xlu0.b32.cont [9/16] 0.0, 128
      %2264 = vxpose.xlu0.b32.cont [10/16] 0.0, 128
      %2265 = vxpose.xlu0.b32.cont [11/16] 0.0, 128
      %2266 = vxpose.xlu0.b32.cont [12/16] 0.0, 128
      %2267 = vxpose.xlu0.b32.cont [13/16] 0.0, 128
      %2268 = vxpose.xlu0.b32.cont [14/16] 0.0, 128
      %2269 = vxpose.xlu0.b32.cont [15/16] 0.0, 128
      %2270 = vxpose.xlu0.b32.end [16/16] 0.0, 128
      %v2271 = vpop.trf.xlu0
      %v2272 = vpop.trf.xlu0
      %v2273 = vpop.trf.xlu0
      %v2274 = vpop.trf.xlu0
      %v2275 = vpop.trf.xlu0
      %v2276 = vpop.trf.xlu0
      %v2277 = vpop.trf.xlu0
      %v2278 = vpop.trf.xlu0
      %v2279 = vpop.trf.xlu0
      %v2280 = vpop.trf.xlu0
      %v2281 = vpop.trf.xlu0
      %v2282 = vpop.trf.xlu0
      %v2283 = vpop.trf.xlu0
      %v2284 = vpop.trf.xlu0
      %v2285 = vpop.trf.xlu0
      %v2286 = vpop.trf.xlu0
      %2287 = vxpose.xlu0.b32.start [1/16] %v2249, 128
      %2288 = vxpose.xlu0.b32.cont [2/16] %v2250, 128
      %2289 = vxpose.xlu0.b32.cont [3/16] 0.0, 128
      %2290 = vxpose.xlu0.b32.cont [4/16] 0.0, 128
      %2291 = vxpose.xlu0.b32.cont [5/16] 0.0, 128
      %2292 = vxpose.xlu0.b32.cont [6/16] 0.0, 128
      %2293 = vxpose.xlu0.b32.cont [7/16] 0.0, 128
      %2294 = vxpose.xlu0.b32.cont [8/16] 0.0, 128
      %2295 = vxpose.xlu0.b32.cont [9/16] 0.0, 128
      %2296 = vxpose.xlu0.b32.cont [10/16] 0.0, 128
      %2297 = vxpose.xlu0.b32.cont [11/16] 0.0, 128
      %2298 = vxpose.xlu0.b32.cont [12/16] 0.0, 128
      %2299 = vxpose.xlu0.b32.cont [13/16] 0.0, 128
      %2300 = vxpose.xlu0.b32.cont [14/16] 0.0, 128
      %2301 = vxpose.xlu0.b32.cont [15/16] 0.0, 128
      %2302 = vxpose.xlu0.b32.end [16/16] 0.0, 128
      %v2303 = vpop.trf.xlu0
      %v2304 = vpop.trf.xlu0
      %v2305 = vpop.trf.xlu0
      %v2306 = vpop.trf.xlu0
      %v2307 = vpop.trf.xlu0
      %v2308 = vpop.trf.xlu0
      %v2309 = vpop.trf.xlu0
      %v2310 = vpop.trf.xlu0
      %v2311 = vpop.trf.xlu0
      %v2312 = vpop.trf.xlu0
      %v2313 = vpop.trf.xlu0
      %v2314 = vpop.trf.xlu0
      %v2315 = vpop.trf.xlu0
      %v2316 = vpop.trf.xlu0
      %v2317 = vpop.trf.xlu0
      %v2318 = vpop.trf.xlu0
      %2319 = vxpose.xlu0.b32.start [1/16] %v2251, 128
      %2320 = vxpose.xlu0.b32.cont [2/16] %v2252, 128
      %2321 = vxpose.xlu0.b32.cont [3/16] 0.0, 128
      %2322 = vxpose.xlu0.b32.cont [4/16] 0.0, 128
      %2323 = vxpose.xlu0.b32.cont [5/16] 0.0, 128
      %2324 = vxpose.xlu0.b32.cont [6/16] 0.0, 128
      %2325 = vxpose.xlu0.b32.cont [7/16] 0.0, 128
      %2326 = vxpose.xlu0.b32.cont [8/16] 0.0, 128
      %2327 = vxpose.xlu0.b32.cont [9/16] 0.0, 128
      %2328 = vxpose.xlu0.b32.cont [10/16] 0.0, 128
      %2329 = vxpose.xlu0.b32.cont [11/16] 0.0, 128
      %2330 = vxpose.xlu0.b32.cont [12/16] 0.0, 128
      %2331 = vxpose.xlu0.b32.cont [13/16] 0.0, 128
      %2332 = vxpose.xlu0.b32.cont [14/16] 0.0, 128
      %2333 = vxpose.xlu0.b32.cont [15/16] 0.0, 128
      %2334 = vxpose.xlu0.b32.end [16/16] 0.0, 128
      %v2335 = vpop.trf.xlu0
      %v2336 = vpop.trf.xlu0
      %v2337 = vpop.trf.xlu0
      %v2338 = vpop.trf.xlu0
      %v2339 = vpop.trf.xlu0
      %v2340 = vpop.trf.xlu0
      %v2341 = vpop.trf.xlu0
      %v2342 = vpop.trf.xlu0
      %v2343 = vpop.trf.xlu0
      %v2344 = vpop.trf.xlu0
      %v2345 = vpop.trf.xlu0
      %v2346 = vpop.trf.xlu0
      %v2347 = vpop.trf.xlu0
      %v2348 = vpop.trf.xlu0
      %v2349 = vpop.trf.xlu0
      %v2350 = vpop.trf.xlu0
      %2351 = vxpose.xlu0.b32.start [1/16] %v2253, 128
      %2352 = vxpose.xlu0.b32.cont [2/16] %v2254, 128
      %2353 = vxpose.xlu0.b32.cont [3/16] 0.0, 128
      %2354 = vxpose.xlu0.b32.cont [4/16] 0.0, 128
      %2355 = vxpose.xlu0.b32.cont [5/16] 0.0, 128
      %2356 = vxpose.xlu0.b32.cont [6/16] 0.0, 128
      %2357 = vxpose.xlu0.b32.cont [7/16] 0.0, 128
      %2358 = vxpose.xlu0.b32.cont [8/16] 0.0, 128
      %2359 = vxpose.xlu0.b32.cont [9/16] 0.0, 128
      %2360 = vxpose.xlu0.b32.cont [10/16] 0.0, 128
      %2361 = vxpose.xlu0.b32.cont [11/16] 0.0, 128
      %2362 = vxpose.xlu0.b32.cont [12/16] 0.0, 128
      %2363 = vxpose.xlu0.b32.cont [13/16] 0.0, 128
      %2364 = vxpose.xlu0.b32.cont [14/16] 0.0, 128
      %2365 = vxpose.xlu0.b32.cont [15/16] 0.0, 128
      %2366 = vxpose.xlu0.b32.end [16/16] 0.0, 128
      %v2367 = vpop.trf.xlu0
      %v2368 = vpop.trf.xlu0
      %v2369 = vpop.trf.xlu0
      %v2370 = vpop.trf.xlu0
      %v2371 = vpop.trf.xlu0
      %v2372 = vpop.trf.xlu0
      %v2373 = vpop.trf.xlu0
      %v2374 = vpop.trf.xlu0
      %v2375 = vpop.trf.xlu0
      %v2376 = vpop.trf.xlu0
      %v2377 = vpop.trf.xlu0
      %v2378 = vpop.trf.xlu0
      %v2379 = vpop.trf.xlu0
      %v2380 = vpop.trf.xlu0
      %v2381 = vpop.trf.xlu0
      %v2382 = vpop.trf.xlu0
      %v2383 = vsel %vm1388, %v2271, 0.0
      %2384 = vadd.xlane.f32.xlu0 %v2383
      %v2385 = vpop.xlane.xlu0 %2384
      %v2386 = vsel %vm1388, %v2303, 0.0
      %2387 = vadd.xlane.f32.xlu0 %v2386
      %v2388 = vpop.xlane.xlu0 %2387
      %v2389 = vsel %vm1388, %v2335, 0.0
      %2390 = vadd.xlane.f32.xlu0 %v2389
      %v2391 = vpop.xlane.xlu0 %2390
      %v2392 = vsel %vm1388, %v2367, 0.0
      %2393 = vadd.xlane.f32.xlu0 %v2392
      %v2394 = vpop.xlane.xlu0 %2393
      %v2395 = vmin.f32 %v2385, 1.0
      %v2396 = vmin.f32 %v2388, 1.0
      %v2397 = vmin.f32 %v2391, 1.0
      %v2398 = vmin.f32 %v2394, 1.0
      %v2399 = vmin.f32 %v2385, 5.0
      %v2400 = vmin.f32 %v2388, 5.0
      %v2401 = vmin.f32 %v2391, 5.0
      %v2402 = vmin.f32 %v2394, 5.0
      %v2403 = vmul.f32 %v2399, 0.2
      %v2404 = vmul.f32 %v2400, 0.2
      %v2405 = vmul.f32 %v2401, 0.2
      %v2406 = vmul.f32 %v2402, 0.2
      %v2407 = vld [vmem:[%s5] sm:$0xff]
      %v2408 = vld [vmem:[%s5 + $0x8] sm:$0x1]
      %v2409 = vlaneseq
      %v2410 = vshrl.u32 %v2409, 7
      %v2411 = vsub.s32 0, %v2410
      %v2412 = vrot.slane %v2407, %v2411
      %v2413 = vmul.f32 %v2395, %v2412
      %v2414 = vmul.f32 %v2396, %v2412
      %v2415 = vmul.f32 %v2397, %v2412
      %v2416 = vmul.f32 %v2398, %v2412
      %v2417 = vlaneseq
      %v2418 = vshrl.u32 %v2417, 7
      %v2419 = vsub.s32 6, %v2418
      %v2420 = vrot.slane %v2407, %v2419
      %v2421 = vadd.f32 %v2420, %v2413
      %v2422 = vadd.f32 %v2420, %v2414
      %v2423 = vadd.f32 %v2420, %v2415
      %v2424 = vadd.f32 %v2420, %v2416
      %v2425 = vlaneseq
      %v2426 = vshrl.u32 %v2425, 7
      %v2427 = vsub.s32 1, %v2426
      %v2428 = vrot.slane %v2407, %v2427
      %v2429 = vmul.f32 %v2403, %v2428
      %v2430 = vmul.f32 %v2404, %v2428
      %v2431 = vmul.f32 %v2405, %v2428
      %v2432 = vmul.f32 %v2406, %v2428
      %v2433 = vadd.f32 %v2421, %v2429
      %v2434 = vadd.f32 %v2422, %v2430
      %v2435 = vadd.f32 %v2423, %v2431
      %v2436 = vadd.f32 %v2424, %v2432
      %v2437 = vlaneseq
      %v2438 = vshrl.u32 %v2437, 7
      %v2439 = vsub.s32 2, %v2438
      %v2440 = vrot.slane %v2407, %v2439
      %v2441 = vmul.f32 %v1409, %v2440
      %v2442 = vmul.f32 %v1412, %v2440
      %v2443 = vmul.f32 %v1415, %v2440
      %v2444 = vmul.f32 %v1418, %v2440
      %v2445 = vadd.f32 %v2433, %v2441
      %v2446 = vadd.f32 %v2434, %v2442
      %v2447 = vadd.f32 %v2435, %v2443
      %v2448 = vadd.f32 %v2436, %v2444
      %v2449 = vlaneseq
      %v2450 = vshrl.u32 %v2449, 7
      %v2451 = vsub.s32 3, %v2450
      %v2452 = vrot.slane %v2407, %v2451
      %v2453 = vmul.f32 %v2239, %v2452
      %v2454 = vmul.f32 %v2240, %v2452
      %v2455 = vmul.f32 %v2241, %v2452
      %v2456 = vmul.f32 %v2242, %v2452
      %v2457 = vadd.f32 %v2445, %v2453
      %v2458 = vadd.f32 %v2446, %v2454
      %v2459 = vadd.f32 %v2447, %v2455
      %v2460 = vadd.f32 %v2448, %v2456
      %v2461 = vlaneseq
      %v2462 = vshrl.u32 %v2461, 7
      %v2463 = vsub.s32 4, %v2462
      %v2464 = vrot.slane %v2407, %v2463
      %v2465 = vmul.f32 %v1421, %v2464
      %v2466 = vmul.f32 %v1424, %v2464
      %v2467 = vmul.f32 %v1427, %v2464
      %v2468 = vmul.f32 %v1430, %v2464
      %v2469 = vadd.f32 %v2457, %v2465
      %v2470 = vadd.f32 %v2458, %v2466
      %v2471 = vadd.f32 %v2459, %v2467
      %v2472 = vadd.f32 %v2460, %v2468
      %v2473 = vlaneseq
      %v2474 = vshrl.u32 %v2473, 7
      %v2475 = vsub.s32 5, %v2474
      %v2476 = vrot.slane %v2407, %v2475
      %v2477 = vmul.f32 %v2243, %v2476
      %v2478 = vmul.f32 %v2244, %v2476
      %v2479 = vmul.f32 %v2245, %v2476
      %v2480 = vmul.f32 %v2246, %v2476
      %v2481 = vadd.f32 %v2469, %v2477
      %v2482 = vadd.f32 %v2470, %v2478
      %v2483 = vadd.f32 %v2471, %v2479
      %v2484 = vadd.f32 %v2472, %v2480
      %vm2485 = vcmp.gt.f32.partialorder %v2481, 0.0
      %vm2486 = vcmp.gt.f32.partialorder %v2482, 0.0
      %vm2487 = vcmp.gt.f32.partialorder %v2483, 0.0
      %vm2488 = vcmp.gt.f32.partialorder %v2484, 0.0
      %2490 = vrot.lane.b32.xlu0 %v2408, 127
      %v2491 = vpop.permute.xlu0 %2490
      %s2492 = vtos %v2491
      %v2493 = vstv %s2492
      %v2495 = vmul.f32 %v2493, %v2481
      %v2496 = vmul.f32 %v2493, %v2482
      %v2497 = vmul.f32 %v2493, %v2483
      %v2498 = vmul.f32 %v2493, %v2484
      %v2499 = vsel %vm2485, %v2481, %v2495
      %v2500 = vsel %vm2486, %v2482, %v2496
      %v2501 = vsel %vm2487, %v2483, %v2497
      %v2502 = vsel %vm2488, %v2484, %v2498
      %v2503 = vlaneseq
      %v2504 = vshrl.u32 %v2503, 7
      %v2505 = vsub.s32 7, %v2504
      %v2506 = vrot.slane %v2407, %v2505
      %v2507 = vmul.f32 %v2499, %v2506
      %v2508 = vmul.f32 %v2500, %v2506
      %v2509 = vmul.f32 %v2501, %v2506
      %v2510 = vmul.f32 %v2502, %v2506
      %vm2511 = vcmask 64512
      %v2512 = vsel %vm2511, %v2507, 0.0
      %2513 = vadd.xlane.f32.xlu0 %v2512
      %v2514 = vpop.xlane.xlu0 %2513
      %v2515 = vsel %vm2511, %v2508, 0.0
      %2516 = vadd.xlane.f32.xlu0 %v2515
      %v2517 = vpop.xlane.xlu0 %2516
      %v2518 = vsel %vm2511, %v2509, 0.0
      %2519 = vadd.xlane.f32.xlu0 %v2518
      %v2520 = vpop.xlane.xlu0 %2519
      %v2521 = vsel %vm2511, %v2510, 0.0
      %2522 = vadd.xlane.f32.xlu0 %v2521
      %v2523 = vpop.xlane.xlu0 %2522
      %v2524 = vlaneseq
      %v2525 = vshrl.u32 %v2524, 7
      %v2526 = vsub.s32 0, %v2525
      %v2527 = vrot.slane %v2408, %v2526
      %v2528 = vadd.f32 %v2514, %v2527
      %v2529 = vadd.f32 %v2517, %v2527
      %v2530 = vadd.f32 %v2520, %v2527
      %v2531 = vadd.f32 %v2523, %v2527
      %v2532 = vxor.u32 %v2528, 2147483648
      %v2533 = vxor.u32 %v2529, 2147483648
      %v2534 = vxor.u32 %v2530, 2147483648
      %v2535 = vxor.u32 %v2531, 2147483648
      %v2536 = vmul.f32 %v2532, 1.442695
      %v2537 = vpow.pop %v2536
      %v2538 = vmul.f32 %v2533, 1.442695
      %v2539 = vpow.pop %v2538
      %v2540 = vmul.f32 %v2534, 1.442695
      %v2541 = vpow.pop %v2540
      %v2542 = vmul.f32 %v2535, 1.442695
      %v2543 = vpow.pop %v2542
      %v2544 = vadd.f32 %v2537, 1.0
      %v2545 = vadd.f32 %v2539, 1.0
      %v2546 = vadd.f32 %v2541, 1.0
      %v2547 = vadd.f32 %v2543, 1.0
      %v2548 = vrcp.pop %v2544
      %v2549 = vmul.f32 1.0, %v2548
      %v2550 = vrcp.pop %v2545
      %v2551 = vmul.f32 1.0, %v2550
      %v2552 = vrcp.pop %v2546
      %v2553 = vmul.f32 1.0, %v2552
      %v2554 = vrcp.pop %v2547
      %v2555 = vmul.f32 1.0, %v2554
      %vm2556 = vcmask 7168
      %v2557 = vsel %vm2556, %v2549, 0.0
      %v2558 = vrot.slane %v2557, 4
      %v2559 = vadd.f32 %v2557, %v2558
      %v2560 = vrot.slane %v2559, 2
      %v2561 = vadd.f32 %v2559, %v2560
      %v2562 = vrot.slane %v2561, 1
      %v2563 = vadd.f32 %v2561, %v2562
      %v2564 = vsel %vm2556, %v2551, 0.0
      %v2565 = vrot.slane %v2564, 4
      %v2566 = vadd.f32 %v2564, %v2565
      %v2567 = vrot.slane %v2566, 2
      %v2568 = vadd.f32 %v2566, %v2567
      %v2569 = vrot.slane %v2568, 1
      %v2570 = vadd.f32 %v2568, %v2569
      %v2571 = vsel %vm2556, %v2553, 0.0
      %v2572 = vrot.slane %v2571, 4
      %v2573 = vadd.f32 %v2571, %v2572
      %v2574 = vrot.slane %v2573, 2
      %v2575 = vadd.f32 %v2573, %v2574
      %v2576 = vrot.slane %v2575, 1
      %v2577 = vadd.f32 %v2575, %v2576
      %v2578 = vsel %vm2556, %v2555, 0.0
      %v2579 = vrot.slane %v2578, 4
      %v2580 = vadd.f32 %v2578, %v2579
      %v2581 = vrot.slane %v2580, 2
      %v2582 = vadd.f32 %v2580, %v2581
      %v2583 = vrot.slane %v2582, 1
      %v2584 = vadd.f32 %v2582, %v2583
      %v2585 = vmul.f32 %v2563, 0.125
      %v2586 = vmul.f32 %v2570, 0.125
      %v2587 = vmul.f32 %v2577, 0.125
      %v2588 = vmul.f32 %v2584, 0.125
      %v2589 = vld [vmem:[%s341] sm:$0xf]
      %v2590 = vmax.f32 %v2585, 0.0
      %v2591 = vmax.f32 %v2586, 0.0
      %v2592 = vmax.f32 %v2587, 0.0
      %v2593 = vmax.f32 %v2588, 0.0
      %v2595 = vrot.slane %v2589, 1
      %v2596 = vrot.slane %v2589, 2
      %v2597 = vrot.slane %v2589, 3
      %v2602 = vmul.f32 %v2585, %v2589
      %v2603 = vmul.f32 %v2586, %v2595
      %v2604 = vmul.f32 %v2587, %v2596
      %v2605 = vmul.f32 %v2588, %v2597
      %v2606 = vsub.f32 %v2590, %v2602
      %v2607 = vsub.f32 %v2591, %v2603
      %v2608 = vsub.f32 %v2592, %v2604
      %v2609 = vsub.f32 %v2593, %v2605
      %v2610 = vand.u32 2147483647, %v2585
      %v2611 = vand.u32 2147483647, %v2586
      %v2612 = vand.u32 2147483647, %v2587
      %v2613 = vand.u32 2147483647, %v2588
      %v2614 = vsub.f32 0.0, %v2610
      %v2615 = vsub.f32 0.0, %v2611
      %v2616 = vsub.f32 0.0, %v2612
      %v2617 = vsub.f32 0.0, %v2613
      %v2618 = vmul.f32 %v2614, 1.442695
      %v2619 = vpow.pop %v2618
      %v2620 = vmul.f32 %v2615, 1.442695
      %v2621 = vpow.pop %v2620
      %v2622 = vmul.f32 %v2616, 1.442695
      %v2623 = vpow.pop %v2622
      %v2624 = vmul.f32 %v2617, 1.442695
      %v2625 = vpow.pop %v2624
      %v2626 = vadd.f32 %v2619, 1.0
      %v2627 = vadd.f32 %v2621, 1.0
      %v2628 = vadd.f32 %v2623, 1.0
      %v2629 = vadd.f32 %v2625, 1.0
      %v2630 = vlog2.pop %v2626
      %v2631 = vmul.f32 %v2630, 0.6931472
      %v2632 = vlog2.pop %v2627
      %v2633 = vmul.f32 %v2632, 0.6931472
      %v2634 = vlog2.pop %v2628
      %v2635 = vmul.f32 %v2634, 0.6931472
      %v2636 = vlog2.pop %v2629
      %v2637 = vmul.f32 %v2636, 0.6931472
      %v2638 = vadd.f32 %v2606, %v2631
      %v2639 = vadd.f32 %v2607, %v2633
      %v2640 = vadd.f32 %v2608, %v2635
      %v2641 = vadd.f32 %v2609, %v2637
      %v2646 = vrot.slane %v2639, 7
      %vm2647 = vcmask 1041409
      %v2648 = vsel %vm2647, %v2646, %v2638
      %v2649 = vrot.slane %v2640, 6
      %vm2650 = vcmask 1042434
      %v2651 = vsel %vm2650, %v2649, %v2648
      %v2652 = vrot.slane %v2641, 5
      %vm2653 = vcmask 1043459
      %v2654 = vsel %vm2653, %v2652, %v2651
      %v2660 = vsel %vm2647, %v2586, %v2585
      %v2661 = vsel %vm2650, %v2587, %v2660
      %v2662 = vsel %vm2653, %v2588, %v2661
      %2663 = vrot.lane.b32.xlu0 %v2662, 1
      %v2664 = vpop.permute.xlu0 %2663
      %v2666 = vsel %vm2556, %v2654, %v2664
      %vm2667 = vcmask 11264
      %2668 = vst.msk [vmem:[%s345] sm:$0xf] %vm2667, %v2666
      %p2669 = scmp.lt.s32.totalorder %s18, 1
      %s2670 = scalar_select %p2669, %s18, 1
      %s2671 = smul.addr %s2670, 4
      %s2672 = scalar_lea.vmem %s7, %s2671
      // Predicated region
      $region49: #{sent_posit_drmm_forward_batch.1} parent=47 // pred_check
        %p2673 = pneg %p203
      $region50: #{sent_posit_drmm_forward_batch.1} parent=47 // pred_check_branch
        %2675 = sbr.rel (%p2673) target = $region52
      $region51: #{sent_posit_drmm_forward_batch.1} parent=47 // pred_region
        _
      $region52: #{sent_posit_drmm_forward_batch.1} parent=47 // pred_fallthru
        _
    $region48: #{sent_posit_drmm_forward_batch.1} parent=5 // pred_fallthru
      _
    %p2676 = scmp.le.s32.totalorder 2, %s13
    // Predicated region
    $region53: #{sent_posit_drmm_forward_batch.1} parent=5 // pred_check
      %p2677 = pneg %p2676
    $region54: #{sent_posit_drmm_forward_batch.1} parent=5 // pred_check_branch
      %2679 = sbr.rel (%p2677) target = $region56
    $region55: #{sent_posit_drmm_forward_batch.1} parent=5 // pred_region
      %s2680 = ssub.s32 %s13, 2
      // Predicated region
      $region57: #{sent_posit_drmm_forward_batch.1} parent=55 // pred_check
        %p2681 = pneg %p209
      $region58: #{sent_posit_drmm_forward_batch.1} parent=55 // pred_check_branch
        %2683 = sbr.rel (%p2681) target = $region60
      $region59: #{sent_posit_drmm_forward_batch.1} parent=55 // pred_region
        %p2684 = scmp.lt.s32.totalorder %s19, 1
        %s2685 = scalar_select %p2684, %s19, 1
        %s2686 = smul.addr %s2685, 4
        %s2687 = scalar_lea.vmem %s7, %s2686
      $region60: #{sent_posit_drmm_forward_batch.1} parent=55 // pred_fallthru
        _
    $region56: #{sent_posit_drmm_forward_batch.1} parent=5 // pred_fallthru
      _
  $region6: #{sent_posit_drmm_forward_batch.1} parent=0 // loop_footer
    %s17 = sadd.s32 1, %s13
  $region7: #{sent_posit_drmm_forward_batch.1} parent=0 // loop_footer_branch
    %12 = sbr.rel target = $region3
  $region8: #{sent_posit_drmm_forward_batch.1} parent=0 // loop_exit
    _

</llo_original>
